<compile_context>
chip_gen: v7x
topology: tpu7x:2x2x1
jax: 0.10.0
libtpu: 0.0.40
codegen_flags: <defaults>
</compile_context>

<pallas_src>
import jax
import jax.numpy as jnp
from jax.experimental import pallas as pl
from jax.experimental.pallas import tpu as pltpu  # noqa: F401

# ----- synthetic "config" ---------------------------------------------------
NUM_CLASS = 4          # config.num_class
NH        = 3          # config.Nh  -> x height = 2*Nh = 6
NM        = 5          # config.Nm
C_CFG     = 6          # config.C   -> x1 height
T         = 32         # config.T   (time samples)
CH        = 120        # hidden conv channels
CHP       = 128        # CH padded to lane/sublane friendly size
K4, PAD4  = 10, 4      # blocks_4 kernel width / padding
T2        = T // 2                 # after blocks_3 (stride-2 conv) = 16
WSLAB     = T2 + 2 * PAD4          # zero-padded time slab width = 24
TOUT      = WSLAB - K4 + 1         # after blocks_4 = 15
FDIM      = CH * TOUT              # fc input features = 1800
NBR       = 3                      # parallel branches per stage
CIN1      = NUM_CLASS * 2 * NH     # flattened rows of input x   = 24
CIN2      = NM * C_CFG             # flattened rows of input x1  = 30
NCT       = NUM_CLASS * TOUT       # stacked fc rows = 60
R1        = ((NCT + 7) // 8) * 8   # sublane-aligned row offset of rg = 64
R2        = R1 + 8                 # sublane-aligned row offset of cg = 72


# ============================ fused Pallas kernel ===========================

def _make_kernel(batch):
    half  = batch * T2           # columns per even/odd half, per branch
    nslab = NBR * batch          # (branch, batch) slabs
    nst   = nslab * TOUT
    ncols = nslab * WSLAB - (K4 - 1)

    def kernel(x1_ref, x2_ref, w12_ref, w3_ref, w4_ref, wstk_ref,
               cmat_ref, bias_ref, out_ref):
        f32, bf16 = jnp.float32, jnp.bfloat16

        bias = bias_ref[...]                     # (128, 8) f32
        b1m = bias[:, 0:1]
        b2m = bias[:, 1:2]
        b3  = bias[:, 2:3]
        b4  = bias[:, 3:4]
        bf  = bias[0:NUM_CLASS, 4:5]

        # ---- initial blocks (merged 1x1 conv + height-collapsing conv) -----
        # columns of x refs: [b0_even(T2) | b1_even | b0_odd | b1_odd]
        w12 = w12_ref[...]
        a = jnp.dot(w12[:, 0:CIN1], x1_ref[...],
                    preferred_element_type=f32) + b1m
        b = jnp.dot(w12[:, CIN1:CIN1 + CIN2], x2_ref[...],
                    preferred_element_type=f32) + b2m
        m = a + b                                # (128, 2*half)

        # ---- blocks_3: conv k=(1,2) stride 2 + ReLU, branches lane-batched -
        xe = jnp.concatenate([m[:, :half], a[:, :half], b[:, :half]],
                             axis=1).astype(bf16)          # (128, 3*half)
        xo = jnp.concatenate([m[:, half:], a[:, half:], b[:, half:]],
                             axis=1).astype(bf16)
        w3 = w3_ref[...]
        y3 = (jnp.dot(w3[:, 0:CHP], xe, preferred_element_type=f32)
              + jnp.dot(w3[:, CHP:2 * CHP], xo, preferred_element_type=f32)
              + b3)
        y3 = jnp.maximum(y3, 0.0)                # cols = [x_m1 | c | d] x batch

        # ---- blocks_4: conv k=(1,10) pad 4 as unrolled 10-tap accumulation -
        s4 = y3[:, 0:half] + y3[:, half:2 * half] + y3[:, 2 * half:3 * half]
        branches = [s4, y3[:, half:2 * half], y3[:, 2 * half:3 * half]]
        z4 = jnp.zeros((CHP, PAD4), f32)
        z8 = jnp.zeros((CHP, 2 * PAD4), f32)
        pieces = [z4]
        for gi, g in enumerate(branches):
            for bb in range(batch):
                pieces.append(g[:, bb * T2:(bb + 1) * T2])
                last = (gi == NBR - 1) and (bb == batch - 1)
                pieces.append(z4 if last else z8)
        xp = jnp.concatenate(pieces, axis=1).astype(bf16)   # (128, nslab*WSLAB)

        acc = jnp.zeros((CHP, ncols), f32)
        for k in range(K4):                     # static unroll: 10 MXU taps
            acc = acc + jnp.dot(w4_ref[k], xp[:, k:k + ncols],
                                preferred_element_type=f32)
        o4 = acc + b4       # valid output of slab s lives at [s*WSLAB, +TOUT)

        # ---- fc on [x_m2+e+f | e | f], lane-batched over (branch, batch) ---
        def slab(s):
            return o4[:, s * WSLAB:s * WSLAB + TOUT]
        fcs = []
        for bb in range(batch):                 # mix = x_m2 + e + f per sample
            fcs.append(slab(bb) + slab(batch + bb) + slab(2 * batch + bb))
        for s in range(batch, 3 * batch):       # then e slabs, then f slabs
            fcs.append(slab(s))
        fcin = jnp.concatenate(fcs, axis=1).astype(bf16)    # (128, nst)

        z = jnp.dot(wstk_ref[...], fcin, preferred_element_type=f32)  # (60,nst)
        cmat = cmat_ref[...]
        mask = cmat[0:NCT, 0:nst]
        rg   = cmat[R1:R1 + NUM_CLASS, 0:NCT]
        cg   = cmat[R2:R2 + nst, 0:nslab]
        t1  = jnp.dot(rg, z * mask, preferred_element_type=f32)       # (4,nst)
        out = jnp.dot(t1, cg, preferred_element_type=f32) + bf        # (4,nslab)
        out_ref[...] = out

    return kernel


# ============================ one-time param prep ===========================

def _pad_rows(w, rows=CHP):
    return jnp.pad(w, ((0, rows - w.shape[0]),) + ((0, 0),) * (w.ndim - 1))


def prepare_params(p, batch):
    """One-time weight fusion / padding / constant packing (hoisted from the
    per-call path). Call once at model init."""
    f32, bf16 = jnp.float32, jnp.bfloat16

    # merged initial block 1: Conv2d(num_class,1,1) o Conv2d(1,120,(2Nh,1))
    w1a = p["w1a"][0, :, 0, 0]                                  # (Cin1,)
    w1b = p["w1b"][:, 0, :, 0]                                  # (120, H1)
    w1m = (w1b[:, None, :] * w1a[None, :, None]).reshape(CH, -1)
    b1m = p["b1a"][0] * jnp.sum(w1b, axis=1) + p["b1b"]
    # merged initial block 2
    w2a = p["w2a"][0, :, 0, 0]
    w2b = p["w2b"][:, 0, :, 0]
    w2m = (w2b[:, None, :] * w2a[None, :, None]).reshape(CH, -1)
    b2m = p["b2a"][0] * jnp.sum(w2b, axis=1) + p["b2b"]
    w12 = _pad_rows(jnp.concatenate([w1m, w2m], axis=1))        # (128, 54)

    # blocks_3 taps packed [w30 | w31] -> (128, 256)
    w30 = jnp.pad(p["w3"][:, :, 0, 0], ((0, 0), (0, CHP - CH)))
    w31 = jnp.pad(p["w3"][:, :, 0, 1], ((0, 0), (0, CHP - CH)))
    w3p = _pad_rows(jnp.concatenate([w30, w31], axis=1))

    # blocks_4 per-tap weights: (K4, 128, 128), w4p[k, o, c] = w4[o, c, 0, k]
    w4t = jnp.transpose(p["w4"][:, :, 0, :], (2, 0, 1))
    w4p = jnp.pad(w4t, ((0, 0), (0, CHP - CH), (0, CHP - CH)))

    # fc stacked weight: wstk[q*TOUT + t, c] = wf[q, c*TOUT + t]
    wf3 = p["wf"].reshape(NUM_CLASS, CH, TOUT)
    wf3 = jnp.pad(wf3, ((0, 0), (0, CHP - CH), (0, 0)))
    wstk = jnp.transpose(wf3, (0, 2, 1)).reshape(NCT, CHP)

    # diagonal-extraction 0/1 constants, packed into one f32 array
    nslab = NBR * batch
    nst = nslab * TOUT
    mask = jnp.tile(jnp.eye(TOUT, dtype=f32), (NUM_CLASS, nslab))          # (60, nst)
    rg = jnp.kron(jnp.eye(NUM_CLASS, dtype=f32), jnp.ones((1, TOUT), f32))  # (4, 60)
    cg = jnp.kron(jnp.eye(nslab, dtype=f32), jnp.ones((TOUT, 1), f32))      # (nst, nslab)
    cmat = jnp.zeros((R2 + nst, nst), f32)
    cmat = cmat.at[0:NCT, 0:nst].set(mask)
    cmat = cmat.at[R1:R1 + NUM_CLASS, 0:NCT].set(rg)
    cmat = cmat.at[R2:R2 + nst, 0:nslab].set(cg)

    # biases packed into one (128, 8) f32 array
    bias = jnp.zeros((CHP, 8), f32)
    bias = bias.at[0:CH, 0].set(b1m)
    bias = bias.at[0:CH, 1].set(b2m)
    bias = bias.at[0:CH, 2].set(p["b3"])
    bias = bias.at[0:CH, 3].set(p["b4"])
    bias = bias.at[0:NUM_CLASS, 4].set(p["bf"])

    return dict(w12=w12.astype(bf16), w3=w3p.astype(bf16), w4=w4p.astype(bf16),
                wstk=wstk.astype(bf16), cmat=cmat, bias=bias)


# ============================ per-call wrapper ===============================

def _prep_input(x):
    """(B, Cin, H, T) -> (Cin*H, B*T) bf16, columns = [all evens | all odds],
    with the batch folded into the lane axis inside each half."""
    Bb, Cin, H, T_ = x.shape
    T2_ = T_ // 2
    xe = jnp.transpose(x[..., 0::2], (1, 2, 0, 3)).reshape(Cin * H, Bb * T2_)
    xo = jnp.transpose(x[..., 1::2], (1, 2, 0, 3)).reshape(Cin * H, Bb * T2_)
    return jnp.concatenate([xe, xo], axis=1).astype(jnp.bfloat16)


@jax.jit
def forward(pp, x, x1):
    batch = x.shape[0]
    xin1 = _prep_input(x)          # (24, 2*batch*T2)
    xin2 = _prep_input(x1)         # (30, 2*batch*T2)

    res = pl.pallas_call(
        _make_kernel(batch),
        out_shape=jax.ShapeDtypeStruct((NUM_CLASS, NBR * batch), jnp.float32),
    )(xin1, xin2, pp["w12"], pp["w3"], pp["w4"], pp["wstk"],
      pp["cmat"], pp["bias"])

    xm   = res[:, 0:batch].T               # fc(x_m2 + e + f)
    xout = res[:, batch:2 * batch].T       # fc(e)
    x1o  = res[:, 2 * batch:3 * batch].T   # fc(f)
    return xout, x1o, xm


# ============================ pure-JAX reference ============================

def _ref_initial(x, w1, b1, w2, b2):
    Cin = x.shape[1]
    y = jnp.einsum("c,bcht->bht", w1.reshape(Cin), x) + b1.reshape(())
    return jnp.einsum("oh,bht->bot", w2.reshape(CH, -1), y) + b2[None, :, None]


def _ref_cnn3(x, w, b):
    out = (jnp.einsum("oi,bit->bot", w[:, :, 0, 0], x[:, :, 0::2])
           + jnp.einsum("oi,bit->bot", w[:, :, 0, 1], x[:, :, 1::2])
           + b[None, :, None])
    return jnp.maximum(out, 0.0)


def _ref_cnn4(x, w, b):
    xp = jnp.pad(x, ((0, 0), (0, 0), (PAD4, PAD4)))
    tout = x.shape[2] - 1
    out = jnp.zeros((x.shape[0], CH, tout)) + b[None, :, None]
    for k in range(K4):
        out = out + jnp.einsum("oi,bit->bot", w[:, :, 0, k], xp[:, :, k:k + tout])
    return out


def _ref_forward(p, x, x1):
    B = x.shape[0]
    a = _ref_initial(x,  p["w1a"], p["b1a"], p["w1b"], p["b1b"])
    b = _ref_initial(x1, p["w2a"], p["b2a"], p["w2b"], p["b2b"])
    x_m1 = _ref_cnn3(a + b, p["w3"], p["b3"])
    c = _ref_cnn3(a, p["w3"], p["b3"])
    d = _ref_cnn3(b, p["w3"], p["b3"])
    x_m2 = _ref_cnn4(c + d + x_m1, p["w4"], p["b4"])
    e = _ref_cnn4(c, p["w4"], p["b4"])
    f = _ref_cnn4(d, p["w4"], p["b4"])
    xm = (x_m2 + e + f).reshape(B, -1) @ p["wf"].T + p["bf"]
    xo = e.reshape(B, -1) @ p["wf"].T + p["bf"]
    x1o = f.reshape(B, -1) @ p["wf"].T + p["bf"]
    return xo, x1o, xm


# ================================ main ======================================

if __name__ == "__main__":
    key = jax.random.PRNGKey(0)
    ks = jax.random.split(key, 16)
    B = 2

    x  = jax.random.normal(ks[0], (B, NUM_CLASS, 2 * NH, T), jnp.float32)
    x1 = jax.random.normal(ks[1], (B, NM, C_CFG, T), jnp.float32)

    params = {
        # blocks_1: Conv2d(num_class,1,1) ; Conv2d(1,120,(2*Nh,1))
        "w1a": 0.1 * jax.random.normal(ks[2], (1, NUM_CLASS, 1, 1), jnp.float32),
        "b1a": 0.01 * jax.random.normal(ks[3], (1,), jnp.float32),
        "w1b": 0.1 * jax.random.normal(ks[4], (CH, 1, 2 * NH, 1), jnp.float32),
        "b1b": 0.01 * jax.random.normal(ks[5], (CH,), jnp.float32),
        # blocks_2: Conv2d(Nm,1,1) ; Conv2d(1,120,(C,1))
        "w2a": 0.1 * jax.random.normal(ks[6], (1, NM, 1, 1), jnp.float32),
        "b2a": 0.01 * jax.random.normal(ks[7], (1,), jnp.float32),
        "w2b": 0.1 * jax.random.normal(ks[8], (CH, 1, C_CFG, 1), jnp.float32),
        "b2b": 0.01 * jax.random.normal(ks[9], (CH,), jnp.float32),
        # blocks_3: Conv2d(120,120,(1,2),stride=(1,2))
        "w3": 0.05 * jax.random.normal(ks[10], (CH, CH, 1, 2), jnp.float32),
        "b3": 0.01 * jax.random.normal(ks[11], (CH,), jnp.float32),
        # blocks_4: Conv2d(120,120,(1,10),padding=(0,4))
        "w4": 0.02 * jax.random.normal(ks[12], (CH, CH, 1, K4), jnp.float32),
        "b4": 0.01 * jax.random.normal(ks[13], (CH,), jnp.float32),
        # fc: Linear(120*(T//2-1), num_class)   (torch weight layout (out,in))
        "wf": 0.02 * jax.random.normal(ks[14], (NUM_CLASS, FDIM), jnp.float32),
        "bf": 0.01 * jax.random.normal(ks[15], (NUM_CLASS,), jnp.float32),
    }

    # one-time init-path work (weight fusion / packing), hoisted per perf review
    pp = prepare_params(params, batch=B)
    jax.block_until_ready(pp)

    out_x, out_x1, out_xm = forward(pp, x, x1)
    jax.block_until_ready((out_x, out_x1, out_xm))

    # shape + numerical sanity check against the pure-JAX f32 reference
    rx, rx1, rxm = _ref_forward(params, x, x1)
    assert out_x.shape == (B, NUM_CLASS) and out_x1.shape == (B, NUM_CLASS) \
        and out_xm.shape == (B, NUM_CLASS)
    assert bool(jnp.allclose(out_x,  rx,  rtol=2e-2, atol=2e-2))
    assert bool(jnp.allclose(out_x1, rx1, rtol=2e-2, atol=2e-2))
    assert bool(jnp.allclose(out_xm, rxm, rtol=2e-2, atol=2e-2))

    # TODO(synk): Dropout2d layers are modeled as identity (inference mode);
    # stochastic training-mode masking is not implemented.
    print("KERNEL_OK")
</pallas_src>

<mosaic_0001>
module attributes {stable_mosaic.version = 11 : i64} {
  func.func @kernel(%arg0: memref<24x64xbf16, #tpu.memory_space<vmem>>, %arg1: memref<30x64xbf16, #tpu.memory_space<vmem>>, %arg2: memref<128x54xbf16, #tpu.memory_space<vmem>>, %arg3: memref<128x256xbf16, #tpu.memory_space<vmem>>, %arg4: memref<10x128x128xbf16, #tpu.memory_space<vmem>>, %arg5: memref<60x128xbf16, #tpu.memory_space<vmem>>, %arg6: memref<162x90xf32, #tpu.memory_space<vmem>>, %arg7: memref<128x8xf32, #tpu.memory_space<vmem>>, %arg8: memref<4x6xf32, #tpu.memory_space<vmem>>) attributes {dimension_semantics = [], scalar_prefetch = 0 : i64, scratch_operands = 0 : i64, tpu.core_type = #tpu.core_type<tc>} {
    %c0 = arith.constant 0 : index
    %c0_0 = arith.constant 0 : index
    %0 = vector.load %arg7[%c0, %c0_0] : memref<128x8xf32, #tpu.memory_space<vmem>>, vector<128x8xf32>
    %1 = vector.extract_strided_slice %0 {offsets = [0, 0], sizes = [128, 1], strides = [1, 1]} : vector<128x8xf32> to vector<128x1xf32>
    %2 = vector.extract_strided_slice %0 {offsets = [0, 1], sizes = [128, 1], strides = [1, 1]} : vector<128x8xf32> to vector<128x1xf32>
    %3 = vector.extract_strided_slice %0 {offsets = [0, 2], sizes = [128, 1], strides = [1, 1]} : vector<128x8xf32> to vector<128x1xf32>
    %4 = vector.extract_strided_slice %0 {offsets = [0, 3], sizes = [128, 1], strides = [1, 1]} : vector<128x8xf32> to vector<128x1xf32>
    %5 = vector.extract_strided_slice %0 {offsets = [0, 4], sizes = [4, 1], strides = [1, 1]} : vector<128x8xf32> to vector<4x1xf32>
    %c0_1 = arith.constant 0 : index
    %c0_2 = arith.constant 0 : index
    %6 = vector.load %arg2[%c0_1, %c0_2] : memref<128x54xbf16, #tpu.memory_space<vmem>>, vector<128x54xbf16>
    %7 = vector.extract_strided_slice %6 {offsets = [0, 0], sizes = [128, 24], strides = [1, 1]} : vector<128x54xbf16> to vector<128x24xbf16>
    %c0_3 = arith.constant 0 : index
    %c0_4 = arith.constant 0 : index
    %8 = vector.load %arg0[%c0_3, %c0_4] : memref<24x64xbf16, #tpu.memory_space<vmem>>, vector<24x64xbf16>
    %cst = arith.constant dense<0.000000e+00> : vector<128x64xf32>
    %9 = tpu.matmul %7, %8, %cst {dimension_numbers = #tpu.dot_dimension_numbers<[1], [0], [0], [1], [0, 0, 1, 1], [], []>} : vector<128x24xbf16>, vector<24x64xbf16>, vector<128x64xf32> -> vector<128x64xf32>
    %10 = vector.broadcast %1 : vector<128x1xf32> to vector<128x64xf32>
    %11 = arith.addf %9, %10 : vector<128x64xf32>
    %12 = vector.extract_strided_slice %6 {offsets = [0, 24], sizes = [128, 30], strides = [1, 1]} : vector<128x54xbf16> to vector<128x30xbf16>
    %c0_5 = arith.constant 0 : index
    %c0_6 = arith.constant 0 : index
    %13 = vector.load %arg1[%c0_5, %c0_6] : memref<30x64xbf16, #tpu.memory_space<vmem>>, vector<30x64xbf16>
    %cst_7 = arith.constant dense<0.000000e+00> : vector<128x64xf32>
    %14 = tpu.matmul %12, %13, %cst_7 {dimension_numbers = #tpu.dot_dimension_numbers<[1], [0], [0], [1], [0, 0, 1, 1], [], []>} : vector<128x30xbf16>, vector<30x64xbf16>, vector<128x64xf32> -> vector<128x64xf32>
    %15 = vector.broadcast %2 : vector<128x1xf32> to vector<128x64xf32>
    %16 = arith.addf %14, %15 : vector<128x64xf32>
    %17 = arith.addf %11, %16 : vector<128x64xf32>
    %18 = vector.extract_strided_slice %17 {offsets = [0, 0], sizes = [128, 32], strides = [1, 1]} : vector<128x64xf32> to vector<128x32xf32>
    %19 = vector.extract_strided_slice %11 {offsets = [0, 0], sizes = [128, 32], strides = [1, 1]} : vector<128x64xf32> to vector<128x32xf32>
    %20 = vector.extract_strided_slice %16 {offsets = [0, 0], sizes = [128, 32], strides = [1, 1]} : vector<128x64xf32> to vector<128x32xf32>
    %21 = tpu.concatenate %18, %19, %20 in 1 : vector<128x32xf32>, vector<128x32xf32>, vector<128x32xf32> -> vector<128x96xf32>
    %22 = arith.truncf %21 : vector<128x96xf32> to vector<128x96xbf16>
    %23 = vector.extract_strided_slice %17 {offsets = [0, 32], sizes = [128, 32], strides = [1, 1]} : vector<128x64xf32> to vector<128x32xf32>
    %24 = vector.extract_strided_slice %11 {offsets = [0, 32], sizes = [128, 32], strides = [1, 1]} : vector<128x64xf32> to vector<128x32xf32>
    %25 = vector.extract_strided_slice %16 {offsets = [0, 32], sizes = [128, 32], strides = [1, 1]} : vector<128x64xf32> to vector<128x32xf32>
    %26 = tpu.concatenate %23, %24, %25 in 1 : vector<128x32xf32>, vector<128x32xf32>, vector<128x32xf32> -> vector<128x96xf32>
    %27 = arith.truncf %26 : vector<128x96xf32> to vector<128x96xbf16>
    %c0_8 = arith.constant 0 : index
    %c0_9 = arith.constant 0 : index
    %28 = vector.load %arg3[%c0_8, %c0_9] : memref<128x256xbf16, #tpu.memory_space<vmem>>, vector<128x256xbf16>
    %29 = vector.extract_strided_slice %28 {offsets = [0, 0], sizes = [128, 128], strides = [1, 1]} : vector<128x256xbf16> to vector<128x128xbf16>
    %cst_10 = arith.constant dense<0.000000e+00> : vector<128x96xf32>
    %30 = tpu.matmul %29, %22, %cst_10 {dimension_numbers = #tpu.dot_dimension_numbers<[1], [0], [0], [1], [0, 0, 1, 1], [], []>} : vector<128x128xbf16>, vector<128x96xbf16>, vector<128x96xf32> -> vector<128x96xf32>
    %31 = vector.extract_strided_slice %28 {offsets = [0, 128], sizes = [128, 128], strides = [1, 1]} : vector<128x256xbf16> to vector<128x128xbf16>
    %cst_11 = arith.constant dense<0.000000e+00> : vector<128x96xf32>
    %32 = tpu.matmul %31, %27, %cst_11 {dimension_numbers = #tpu.dot_dimension_numbers<[1], [0], [0], [1], [0, 0, 1, 1], [], []>} : vector<128x128xbf16>, vector<128x96xbf16>, vector<128x96xf32> -> vector<128x96xf32>
    %33 = arith.addf %30, %32 : vector<128x96xf32>
    %34 = vector.broadcast %3 : vector<128x1xf32> to vector<128x96xf32>
    %35 = arith.addf %33, %34 : vector<128x96xf32>
    %cst_12 = arith.constant 0.000000e+00 : f32
    %36 = vector.broadcast %cst_12 : f32 to vector<128x96xf32>
    %37 = arith.maximumf %35, %36 : vector<128x96xf32>
    %38 = vector.extract_strided_slice %37 {offsets = [0, 0], sizes = [128, 32], strides = [1, 1]} : vector<128x96xf32> to vector<128x32xf32>
    %39 = vector.extract_strided_slice %37 {offsets = [0, 32], sizes = [128, 32], strides = [1, 1]} : vector<128x96xf32> to vector<128x32xf32>
    %40 = arith.addf %38, %39 : vector<128x32xf32>
    %41 = vector.extract_strided_slice %37 {offsets = [0, 64], sizes = [128, 32], strides = [1, 1]} : vector<128x96xf32> to vector<128x32xf32>
    %42 = arith.addf %40, %41 : vector<128x32xf32>
    %43 = vector.extract_strided_slice %37 {offsets = [0, 32], sizes = [128, 32], strides = [1, 1]} : vector<128x96xf32> to vector<128x32xf32>
    %44 = vector.extract_strided_slice %37 {offsets = [0, 64], sizes = [128, 32], strides = [1, 1]} : vector<128x96xf32> to vector<128x32xf32>
    %cst_13 = arith.constant 0.000000e+00 : f32
    %45 = vector.broadcast %cst_13 : f32 to vector<128x4xf32>
    %cst_14 = arith.constant 0.000000e+00 : f32
    %46 = vector.broadcast %cst_14 : f32 to vector<128x8xf32>
    %47 = vector.extract_strided_slice %42 {offsets = [0, 0], sizes = [128, 16], strides = [1, 1]} : vector<128x32xf32> to vector<128x16xf32>
    %48 = vector.extract_strided_slice %42 {offsets = [0, 16], sizes = [128, 16], strides = [1, 1]} : vector<128x32xf32> to vector<128x16xf32>
    %49 = vector.extract_strided_slice %43 {offsets = [0, 0], sizes = [128, 16], strides = [1, 1]} : vector<128x32xf32> to vector<128x16xf32>
    %50 = vector.extract_strided_slice %43 {offsets = [0, 16], sizes = [128, 16], strides = [1, 1]} : vector<128x32xf32> to vector<128x16xf32>
    %51 = vector.extract_strided_slice %44 {offsets = [0, 0], sizes = [128, 16], strides = [1, 1]} : vector<128x32xf32> to vector<128x16xf32>
    %52 = vector.extract_strided_slice %44 {offsets = [0, 16], sizes = [128, 16], strides = [1, 1]} : vector<128x32xf32> to vector<128x16xf32>
    %53 = tpu.concatenate %45, %47, %46, %48, %46, %49, %46, %50, %46, %51, %46, %52, %45 in 1 : vector<128x4xf32>, vector<128x16xf32>, vector<128x8xf32>, vector<128x16xf32>, vector<128x8xf32>, vector<128x16xf32>, vector<128x8xf32>, vector<128x16xf32>, vector<128x8xf32>, vector<128x16xf32>, vector<128x8xf32>, vector<128x16xf32>, vector<128x4xf32> -> vector<128x144xf32>
    %54 = arith.truncf %53 : vector<128x144xf32> to vector<128x144xbf16>
    %cst_15 = arith.constant 0.000000e+00 : f32
    %55 = vector.broadcast %cst_15 : f32 to vector<128x135xf32>
    %c0_16 = arith.constant 0 : index
    %c0_17 = arith.constant 0 : index
    %c0_18 = arith.constant 0 : index
    %56 = vector.load %arg4[%c0_16, %c0_17, %c0_18] : memref<10x128x128xbf16, #tpu.memory_space<vmem>>, vector<1x128x128xbf16>
    %57 = vector.shape_cast %56 : vector<1x128x128xbf16> to vector<128x128xbf16>
    %58 = vector.extract_strided_slice %54 {offsets = [0, 0], sizes = [128, 135], strides = [1, 1]} : vector<128x144xbf16> to vector<128x135xbf16>
    %cst_19 = arith.constant dense<0.000000e+00> : vector<128x135xf32>
    %59 = tpu.matmul %57, %58, %cst_19 {dimension_numbers = #tpu.dot_dimension_numbers<[1], [0], [0], [1], [0, 0, 1, 1], [], []>} : vector<128x128xbf16>, vector<128x135xbf16>, vector<128x135xf32> -> vector<128x135xf32>
    %60 = arith.addf %55, %59 : vector<128x135xf32>
    %c1 = arith.constant 1 : index
    %c0_20 = arith.constant 0 : index
    %c0_21 = arith.constant 0 : index
    %61 = vector.load %arg4[%c1, %c0_20, %c0_21] : memref<10x128x128xbf16, #tpu.memory_space<vmem>>, vector<1x128x128xbf16>
    %62 = vector.shape_cast %61 : vector<1x128x128xbf16> to vector<128x128xbf16>
    %63 = vector.extract_strided_slice %54 {offsets = [0, 1], sizes = [128, 135], strides = [1, 1]} : vector<128x144xbf16> to vector<128x135xbf16>
    %cst_22 = arith.constant dense<0.000000e+00> : vector<128x135xf32>
    %64 = tpu.matmul %62, %63, %cst_22 {dimension_numbers = #tpu.dot_dimension_numbers<[1], [0], [0], [1], [0, 0, 1, 1], [], []>} : vector<128x128xbf16>, vector<128x135xbf16>, vector<128x135xf32> -> vector<128x135xf32>
    %65 = arith.addf %60, %64 : vector<128x135xf32>
    %c2 = arith.constant 2 : index
    %c0_23 = arith.constant 0 : index
    %c0_24 = arith.constant 0 : index
    %66 = vector.load %arg4[%c2, %c0_23, %c0_24] : memref<10x128x128xbf16, #tpu.memory_space<vmem>>, vector<1x128x128xbf16>
    %67 = vector.shape_cast %66 : vector<1x128x128xbf16> to vector<128x128xbf16>
    %68 = vector.extract_strided_slice %54 {offsets = [0, 2], sizes = [128, 135], strides = [1, 1]} : vector<128x144xbf16> to vector<128x135xbf16>
    %cst_25 = arith.constant dense<0.000000e+00> : vector<128x135xf32>
    %69 = tpu.matmul %67, %68, %cst_25 {dimension_numbers = #tpu.dot_dimension_numbers<[1], [0], [0], [1], [0, 0, 1, 1], [], []>} : vector<128x128xbf16>, vector<128x135xbf16>, vector<128x135xf32> -> vector<128x135xf32>
    %70 = arith.addf %65, %69 : vector<128x135xf32>
    %c3 = arith.constant 3 : index
    %c0_26 = arith.constant 0 : index
    %c0_27 = arith.constant 0 : index
    %71 = vector.load %arg4[%c3, %c0_26, %c0_27] : memref<10x128x128xbf16, #tpu.memory_space<vmem>>, vector<1x128x128xbf16>
    %72 = vector.shape_cast %71 : vector<1x128x128xbf16> to vector<128x128xbf16>
    %73 = vector.extract_strided_slice %54 {offsets = [0, 3], sizes = [128, 135], strides = [1, 1]} : vector<128x144xbf16> to vector<128x135xbf16>
    %cst_28 = arith.constant dense<0.000000e+00> : vector<128x135xf32>
    %74 = tpu.matmul %72, %73, %cst_28 {dimension_numbers = #tpu.dot_dimension_numbers<[1], [0], [0], [1], [0, 0, 1, 1], [], []>} : vector<128x128xbf16>, vector<128x135xbf16>, vector<128x135xf32> -> vector<128x135xf32>
    %75 = arith.addf %70, %74 : vector<128x135xf32>
    %c4 = arith.constant 4 : index
    %c0_29 = arith.constant 0 : index
    %c0_30 = arith.constant 0 : index
    %76 = vector.load %arg4[%c4, %c0_29, %c0_30] : memref<10x128x128xbf16, #tpu.memory_space<vmem>>, vector<1x128x128xbf16>
    %77 = vector.shape_cast %76 : vector<1x128x128xbf16> to vector<128x128xbf16>
    %78 = vector.extract_strided_slice %54 {offsets = [0, 4], sizes = [128, 135], strides = [1, 1]} : vector<128x144xbf16> to vector<128x135xbf16>
    %cst_31 = arith.constant dense<0.000000e+00> : vector<128x135xf32>
    %79 = tpu.matmul %77, %78, %cst_31 {dimension_numbers = #tpu.dot_dimension_numbers<[1], [0], [0], [1], [0, 0, 1, 1], [], []>} : vector<128x128xbf16>, vector<128x135xbf16>, vector<128x135xf32> -> vector<128x135xf32>
    %80 = arith.addf %75, %79 : vector<128x135xf32>
    %c5 = arith.constant 5 : index
    %c0_32 = arith.constant 0 : index
    %c0_33 = arith.constant 0 : index
    %81 = vector.load %arg4[%c5, %c0_32, %c0_33] : memref<10x128x128xbf16, #tpu.memory_space<vmem>>, vector<1x128x128xbf16>
    %82 = vector.shape_cast %81 : vector<1x128x128xbf16> to vector<128x128xbf16>
    %83 = vector.extract_strided_slice %54 {offsets = [0, 5], sizes = [128, 135], strides = [1, 1]} : vector<128x144xbf16> to vector<128x135xbf16>
    %cst_34 = arith.constant dense<0.000000e+00> : vector<128x135xf32>
    %84 = tpu.matmul %82, %83, %cst_34 {dimension_numbers = #tpu.dot_dimension_numbers<[1], [0], [0], [1], [0, 0, 1, 1], [], []>} : vector<128x128xbf16>, vector<128x135xbf16>, vector<128x135xf32> -> vector<128x135xf32>
    %85 = arith.addf %80, %84 : vector<128x135xf32>
    %c6 = arith.constant 6 : index
    %c0_35 = arith.constant 0 : index
    %c0_36 = arith.constant 0 : index
    %86 = vector.load %arg4[%c6, %c0_35, %c0_36] : memref<10x128x128xbf16, #tpu.memory_space<vmem>>, vector<1x128x128xbf16>
    %87 = vector.shape_cast %86 : vector<1x128x128xbf16> to vector<128x128xbf16>
    %88 = vector.extract_strided_slice %54 {offsets = [0, 6], sizes = [128, 135], strides = [1, 1]} : vector<128x144xbf16> to vector<128x135xbf16>
    %cst_37 = arith.constant dense<0.000000e+00> : vector<128x135xf32>
    %89 = tpu.matmul %87, %88, %cst_37 {dimension_numbers = #tpu.dot_dimension_numbers<[1], [0], [0], [1], [0, 0, 1, 1], [], []>} : vector<128x128xbf16>, vector<128x135xbf16>, vector<128x135xf32> -> vector<128x135xf32>
    %90 = arith.addf %85, %89 : vector<128x135xf32>
    %c7 = arith.constant 7 : index
    %c0_38 = arith.constant 0 : index
    %c0_39 = arith.constant 0 : index
    %91 = vector.load %arg4[%c7, %c0_38, %c0_39] : memref<10x128x128xbf16, #tpu.memory_space<vmem>>, vector<1x128x128xbf16>
    %92 = vector.shape_cast %91 : vector<1x128x128xbf16> to vector<128x128xbf16>
    %93 = vector.extract_strided_slice %54 {offsets = [0, 7], sizes = [128, 135], strides = [1, 1]} : vector<128x144xbf16> to vector<128x135xbf16>
    %cst_40 = arith.constant dense<0.000000e+00> : vector<128x135xf32>
    %94 = tpu.matmul %92, %93, %cst_40 {dimension_numbers = #tpu.dot_dimension_numbers<[1], [0], [0], [1], [0, 0, 1, 1], [], []>} : vector<128x128xbf16>, vector<128x135xbf16>, vector<128x135xf32> -> vector<128x135xf32>
    %95 = arith.addf %90, %94 : vector<128x135xf32>
    %c8 = arith.constant 8 : index
    %c0_41 = arith.constant 0 : index
    %c0_42 = arith.constant 0 : index
    %96 = vector.load %arg4[%c8, %c0_41, %c0_42] : memref<10x128x128xbf16, #tpu.memory_space<vmem>>, vector<1x128x128xbf16>
    %97 = vector.shape_cast %96 : vector<1x128x128xbf16> to vector<128x128xbf16>
    %98 = vector.extract_strided_slice %54 {offsets = [0, 8], sizes = [128, 135], strides = [1, 1]} : vector<128x144xbf16> to vector<128x135xbf16>
    %cst_43 = arith.constant dense<0.000000e+00> : vector<128x135xf32>
    %99 = tpu.matmul %97, %98, %cst_43 {dimension_numbers = #tpu.dot_dimension_numbers<[1], [0], [0], [1], [0, 0, 1, 1], [], []>} : vector<128x128xbf16>, vector<128x135xbf16>, vector<128x135xf32> -> vector<128x135xf32>
    %100 = arith.addf %95, %99 : vector<128x135xf32>
    %c9 = arith.constant 9 : index
    %c0_44 = arith.constant 0 : index
    %c0_45 = arith.constant 0 : index
    %101 = vector.load %arg4[%c9, %c0_44, %c0_45] : memref<10x128x128xbf16, #tpu.memory_space<vmem>>, vector<1x128x128xbf16>
    %102 = vector.shape_cast %101 : vector<1x128x128xbf16> to vector<128x128xbf16>
    %103 = vector.extract_strided_slice %54 {offsets = [0, 9], sizes = [128, 135], strides = [1, 1]} : vector<128x144xbf16> to vector<128x135xbf16>
    %cst_46 = arith.constant dense<0.000000e+00> : vector<128x135xf32>
    %104 = tpu.matmul %102, %103, %cst_46 {dimension_numbers = #tpu.dot_dimension_numbers<[1], [0], [0], [1], [0, 0, 1, 1], [], []>} : vector<128x128xbf16>, vector<128x135xbf16>, vector<128x135xf32> -> vector<128x135xf32>
    %105 = arith.addf %100, %104 : vector<128x135xf32>
    %106 = vector.broadcast %4 : vector<128x1xf32> to vector<128x135xf32>
    %107 = arith.addf %105, %106 : vector<128x135xf32>
    %108 = vector.extract_strided_slice %107 {offsets = [0, 0], sizes = [128, 15], strides = [1, 1]} : vector<128x135xf32> to vector<128x15xf32>
    %109 = vector.extract_strided_slice %107 {offsets = [0, 48], sizes = [128, 15], strides = [1, 1]} : vector<128x135xf32> to vector<128x15xf32>
    %110 = arith.addf %108, %109 : vector<128x15xf32>
    %111 = vector.extract_strided_slice %107 {offsets = [0, 96], sizes = [128, 15], strides = [1, 1]} : vector<128x135xf32> to vector<128x15xf32>
    %112 = arith.addf %110, %111 : vector<128x15xf32>
    %113 = vector.extract_strided_slice %107 {offsets = [0, 24], sizes = [128, 15], strides = [1, 1]} : vector<128x135xf32> to vector<128x15xf32>
    %114 = vector.extract_strided_slice %107 {offsets = [0, 72], sizes = [128, 15], strides = [1, 1]} : vector<128x135xf32> to vector<128x15xf32>
    %115 = arith.addf %113, %114 : vector<128x15xf32>
    %116 = vector.extract_strided_slice %107 {offsets = [0, 120], sizes = [128, 15], strides = [1, 1]} : vector<128x135xf32> to vector<128x15xf32>
    %117 = arith.addf %115, %116 : vector<128x15xf32>
    %118 = vector.extract_strided_slice %107 {offsets = [0, 48], sizes = [128, 15], strides = [1, 1]} : vector<128x135xf32> to vector<128x15xf32>
    %119 = vector.extract_strided_slice %107 {offsets = [0, 72], sizes = [128, 15], strides = [1, 1]} : vector<128x135xf32> to vector<128x15xf32>
    %120 = vector.extract_strided_slice %107 {offsets = [0, 96], sizes = [128, 15], strides = [1, 1]} : vector<128x135xf32> to vector<128x15xf32>
    %121 = vector.extract_strided_slice %107 {offsets = [0, 120], sizes = [128, 15], strides = [1, 1]} : vector<128x135xf32> to vector<128x15xf32>
    %122 = tpu.concatenate %112, %117, %118, %119, %120, %121 in 1 : vector<128x15xf32>, vector<128x15xf32>, vector<128x15xf32>, vector<128x15xf32>, vector<128x15xf32>, vector<128x15xf32> -> vector<128x90xf32>
    %123 = arith.truncf %122 : vector<128x90xf32> to vector<128x90xbf16>
    %c0_47 = arith.constant 0 : index
    %c0_48 = arith.constant 0 : index
    %124 = vector.load %arg5[%c0_47, %c0_48] : memref<60x128xbf16, #tpu.memory_space<vmem>>, vector<60x128xbf16>
    %cst_49 = arith.constant dense<0.000000e+00> : vector<60x90xf32>
    %125 = tpu.matmul %124, %123, %cst_49 {dimension_numbers = #tpu.dot_dimension_numbers<[1], [0], [0], [1], [0, 0, 1, 1], [], []>} : vector<60x128xbf16>, vector<128x90xbf16>, vector<60x90xf32> -> vector<60x90xf32>
    %c0_50 = arith.constant 0 : index
    %c0_51 = arith.constant 0 : index
    %126 = vector.load %arg6[%c0_50, %c0_51] : memref<162x90xf32, #tpu.memory_space<vmem>>, vector<162x90xf32>
    %127 = vector.extract_strided_slice %126 {offsets = [0, 0], sizes = [60, 90], strides = [1, 1]} : vector<162x90xf32> to vector<60x90xf32>
    %128 = vector.extract_strided_slice %126 {offsets = [64, 0], sizes = [4, 60], strides = [1, 1]} : vector<162x90xf32> to vector<4x60xf32>
    %129 = vector.extract_strided_slice %126 {offsets = [72, 0], sizes = [90, 6], strides = [1, 1]} : vector<162x90xf32> to vector<90x6xf32>
    %130 = arith.mulf %125, %127 : vector<60x90xf32>
    %cst_52 = arith.constant dense<0.000000e+00> : vector<4x90xf32>
    %131 = tpu.matmul %128, %130, %cst_52 {dimension_numbers = #tpu.dot_dimension_numbers<[1], [0], [0], [1], [0, 0, 1, 1], [], []>} : vector<4x60xf32>, vector<60x90xf32>, vector<4x90xf32> -> vector<4x90xf32>
    %cst_53 = arith.constant dense<0.000000e+00> : vector<4x6xf32>
    %132 = tpu.matmul %131, %129, %cst_53 {dimension_numbers = #tpu.dot_dimension_numbers<[1], [0], [0], [1], [0, 0, 1, 1], [], []>} : vector<4x90xf32>, vector<90x6xf32>, vector<4x6xf32> -> vector<4x6xf32>
    %133 = vector.broadcast %5 : vector<4x1xf32> to vector<4x6xf32>
    %134 = arith.addf %132, %133 : vector<4x6xf32>
    %c0_54 = arith.constant 0 : index
    %c0_55 = arith.constant 0 : index
    %135 = vector.load %arg8[%c0_54, %c0_55] : memref<4x6xf32, #tpu.memory_space<vmem>>, vector<4x6xf32>
    tpu.vector_store %arg8[%c0_54, %c0_55], %134 {strides = array<i32>} : memref<4x6xf32, #tpu.memory_space<vmem>>, vector<4x6xf32>,
    return
  }
}

</mosaic_0001>

<llo_original>
// kernel: forward.1
$region0: #{forward.1}
  #allocation0 [shape = 'u32[]', space=smem, size = 0x4, offset = 0x4, fixed_abs, tag = 'smem constant byte address 0x4 - core index']
  #allocation1 [shape = 'u32[144,128]{1,0:T(1,128)}', space=vmem, size = 0x12000, scoped, tag = 'internal scratch']
  %s0 = inlined_call_operand.vmem [shape: bf16[24,64], index: 0, kind: input, shape index: {}]
  %s1 = inlined_call_operand.vmem [shape: bf16[30,64], index: 1, kind: input, shape index: {}]
  %s2 = inlined_call_operand.vmem [shape: bf16[128,54], index: 2, kind: input, shape index: {}]
  %s3 = inlined_call_operand.vmem [shape: bf16[128,256], index: 3, kind: input, shape index: {}]
  %s4 = inlined_call_operand.vmem [shape: bf16[10,128,128], index: 4, kind: input, shape index: {}]
  %s5 = inlined_call_operand.vmem [shape: bf16[60,128], index: 5, kind: input, shape index: {}]
  %s6 = inlined_call_operand.vmem [shape: f32[162,90], index: 6, kind: input, shape index: {}]
  %s7 = inlined_call_operand.vmem [shape: f32[128,8], index: 7, kind: input, shape index: {}]
  %s8 = inlined_call_operand.vmem [shape: f32[4,6], index: 8, kind: output, shape index: {}]
  %s9 = sld [smem:[#allocation0]]
  $region42: #{forward.1} parent=0
    _
  %s11 = ssub.s32 1, %s9
  %s12 = scalar_select 0, %s11, %s9
  // Predicated region
  $region2: #{forward.1} parent=0 // pred_check
    _
  $region3: #{forward.1} parent=0 // pred_check_branch
    %14 = sbr.rel (0) target = $region5
  $region4: #{forward.1} parent=0 // pred_region
    _
  $region5: #{forward.1} parent=0 // pred_fallthru
    _
  // Predicated region
  $region6: #{forward.1} parent=0 // pred_check
    _
  $region7: #{forward.1} parent=0 // pred_check_branch
    %16 = sbr.rel (0) target = $region9
  $region8: #{forward.1} parent=0 // pred_region
    _
  $region9: #{forward.1} parent=0 // pred_fallthru
    _
  // Predicated region
  $region10: #{forward.1} parent=0 // pred_check
    _
  $region11: #{forward.1} parent=0 // pred_check_branch
    %18 = sbr.rel (0) target = $region13
  $region12: #{forward.1} parent=0 // pred_region
    _
  $region13: #{forward.1} parent=0 // pred_fallthru
    _
  // Predicated region
  $region14: #{forward.1} parent=0 // pred_check
    _
  $region15: #{forward.1} parent=0 // pred_check_branch
    %20 = sbr.rel (0) target = $region17
  $region16: #{forward.1} parent=0 // pred_region
    _
  $region17: #{forward.1} parent=0 // pred_fallthru
    _
  // Predicated region
  $region18: #{forward.1} parent=0 // pred_check
    _
  $region19: #{forward.1} parent=0 // pred_check_branch
    %22 = sbr.rel (0) target = $region21
  $region20: #{forward.1} parent=0 // pred_region
    _
  $region21: #{forward.1} parent=0 // pred_fallthru
    _
  // Predicated region
  $region22: #{forward.1} parent=0 // pred_check
    _
  $region23: #{forward.1} parent=0 // pred_check_branch
    %24 = sbr.rel (0) target = $region25
  $region24: #{forward.1} parent=0 // pred_region
    _
  $region25: #{forward.1} parent=0 // pred_fallthru
    _
  // Predicated region
  $region26: #{forward.1} parent=0 // pred_check
    _
  $region27: #{forward.1} parent=0 // pred_check_branch
    %26 = sbr.rel (0) target = $region29
  $region28: #{forward.1} parent=0 // pred_region
    _
  $region29: #{forward.1} parent=0 // pred_fallthru
    _
  // Predicated region
  $region30: #{forward.1} parent=0 // pred_check
    _
  $region31: #{forward.1} parent=0 // pred_check_branch
    %28 = sbr.rel (0) target = $region33
  $region32: #{forward.1} parent=0 // pred_region
    _
  $region33: #{forward.1} parent=0 // pred_fallthru
    _
  %v30 = vld [vmem:[%s7] sm:$0xff]
  %v31 = vld [vmem:[%s7 + $0x8] sm:$0xff]
  %v32 = vld [vmem:[%s7 + $0x10] sm:$0xff]
  %v33 = vld [vmem:[%s7 + $0x18] sm:$0xff]
  %v34 = vld [vmem:[%s7 + $0x20] sm:$0xff]
  %v35 = vld [vmem:[%s7 + $0x28] sm:$0xff]
  %v36 = vld [vmem:[%s7 + $0x30] sm:$0xff]
  %v37 = vld [vmem:[%s7 + $0x38] sm:$0xff]
  %v38 = vld [vmem:[%s7 + $0x40] sm:$0xff]
  %v39 = vld [vmem:[%s7 + $0x48] sm:$0xff]
  %v40 = vld [vmem:[%s7 + $0x50] sm:$0xff]
  %v41 = vld [vmem:[%s7 + $0x58] sm:$0xff]
  %v42 = vld [vmem:[%s7 + $0x60] sm:$0xff]
  %v43 = vld [vmem:[%s7 + $0x68] sm:$0xff]
  %v44 = vld [vmem:[%s7 + $0x70] sm:$0xff]
  %v45 = vld [vmem:[%s7 + $0x78] sm:$0xff]
  %v46 = vld [vmem:[%s2] sm:$0xf]
  %v47 = vld [vmem:[%s2 + $0x4] sm:$0xf]
  %v48 = vld [vmem:[%s2 + $0x8] sm:$0xf]
  %v49 = vld [vmem:[%s2 + $0xc] sm:$0xf]
  %v50 = vld [vmem:[%s2 + $0x10] sm:$0xf]
  %v51 = vld [vmem:[%s2 + $0x14] sm:$0xf]
  %v52 = vld [vmem:[%s2 + $0x18] sm:$0xf]
  %v53 = vld [vmem:[%s2 + $0x1c] sm:$0xf]
  %v54 = vld [vmem:[%s2 + $0x20] sm:$0xf]
  %v55 = vld [vmem:[%s2 + $0x24] sm:$0xf]
  %v56 = vld [vmem:[%s2 + $0x28] sm:$0xf]
  %v57 = vld [vmem:[%s2 + $0x2c] sm:$0xf]
  %v58 = vld [vmem:[%s2 + $0x30] sm:$0xf]
  %v59 = vld [vmem:[%s2 + $0x34] sm:$0xf]
  %v60 = vld [vmem:[%s2 + $0x38] sm:$0xf]
  %v61 = vld [vmem:[%s2 + $0x3c] sm:$0xf]
  %v62 = vld [vmem:[%s0] sm:$0xf]
  %v63 = vld [vmem:[%s0 + $0x4] sm:$0xf]
  %v64 = vld [vmem:[%s0 + $0x8] sm:$0xf]
  %66 = vset.pattern.permute.xlu0 0
  %67 = vperm.xlu0 %66, %v30
  %v68 = vpop.permute.xlu0 %67
  %71 = vset.pattern.permute.xlu0 0
  %72 = vperm.xlu0 %71, %v31
  %v73 = vpop.permute.xlu0 %72
  %76 = vset.pattern.permute.xlu0 0
  %77 = vperm.xlu0 %76, %v32
  %v78 = vpop.permute.xlu0 %77
  %81 = vset.pattern.permute.xlu0 0
  %82 = vperm.xlu0 %81, %v33
  %v83 = vpop.permute.xlu0 %82
  %86 = vset.pattern.permute.xlu0 0
  %87 = vperm.xlu0 %86, %v34
  %v88 = vpop.permute.xlu0 %87
  %91 = vset.pattern.permute.xlu0 0
  %92 = vperm.xlu0 %91, %v35
  %v93 = vpop.permute.xlu0 %92
  %96 = vset.pattern.permute.xlu0 0
  %97 = vperm.xlu0 %96, %v36
  %v98 = vpop.permute.xlu0 %97
  %101 = vset.pattern.permute.xlu0 0
  %102 = vperm.xlu0 %101, %v37
  %v103 = vpop.permute.xlu0 %102
  %106 = vset.pattern.permute.xlu0 0
  %107 = vperm.xlu0 %106, %v38
  %v108 = vpop.permute.xlu0 %107
  %111 = vset.pattern.permute.xlu0 0
  %112 = vperm.xlu0 %111, %v39
  %v113 = vpop.permute.xlu0 %112
  %116 = vset.pattern.permute.xlu0 0
  %117 = vperm.xlu0 %116, %v40
  %v118 = vpop.permute.xlu0 %117
  %121 = vset.pattern.permute.xlu0 0
  %122 = vperm.xlu0 %121, %v41
  %v123 = vpop.permute.xlu0 %122
  %126 = vset.pattern.permute.xlu0 0
  %127 = vperm.xlu0 %126, %v42
  %v128 = vpop.permute.xlu0 %127
  %131 = vset.pattern.permute.xlu0 0
  %132 = vperm.xlu0 %131, %v43
  %v133 = vpop.permute.xlu0 %132
  %136 = vset.pattern.permute.xlu0 0
  %137 = vperm.xlu0 %136, %v44
  %v138 = vpop.permute.xlu0 %137
  %141 = vset.pattern.permute.xlu0 0
  %142 = vperm.xlu0 %141, %v45
  %v143 = vpop.permute.xlu0 %142
  %v161 = vunpack.c.l.b16 %v46
  %v162 = vunpack.c.l.b16 %v47
  %v163 = vunpack.c.l.b16 %v48
  %v164 = vunpack.c.l.b16 %v49
  %v165 = vunpack.c.l.b16 %v50
  %v166 = vunpack.c.l.b16 %v51
  %v167 = vunpack.c.l.b16 %v52
  %v168 = vunpack.c.l.b16 %v53
  %v169 = vunpack.c.l.b16 %v54
  %v170 = vunpack.c.l.b16 %v55
  %v171 = vunpack.c.l.b16 %v56
  %v172 = vunpack.c.l.b16 %v57
  %v173 = vunpack.c.l.b16 %v58
  %v174 = vunpack.c.l.b16 %v59
  %v175 = vunpack.c.l.b16 %v60
  %v176 = vunpack.c.l.b16 %v61
  %v177 = vpack.c.b16 %v162, %v161
  %v178 = vpack.c.b16 %v164, %v163
  %v179 = vpack.c.b16 %v166, %v165
  %v180 = vpack.c.b16 %v168, %v167
  %v181 = vpack.c.b16 %v170, %v169
  %v182 = vpack.c.b16 %v172, %v171
  %v183 = vpack.c.b16 %v174, %v173
  %v184 = vpack.c.b16 %v176, %v175
  %v188 = vunpack.c.l.b16 %v62
  %v189 = vunpack.c.l.b16 %v63
  %v190 = vunpack.c.l.b16 %v64
  %v191 = vpack.c.b16 %v189, %v188
  %v192 = vpack.c.b16 %v190, %v190
  %vm194 = vcmask 195584
  %v196 = vsel %vm194, %v177, 0
  %v199 = vsel %vm194, %v178, 0
  %v202 = vsel %vm194, %v179, 0
  %v205 = vsel %vm194, %v180, 0
  %v208 = vsel %vm194, %v181, 0
  %v211 = vsel %vm194, %v182, 0
  %v214 = vsel %vm194, %v183, 0
  %v217 = vsel %vm194, %v184, 0
  %vm219 = vcmask 1043456
  %v221 = vsel %vm219, %v192, 0
  %223 = vmatprep.subr.bf16.mxu0 0
  %224 = vmatpush1.bf16.msra.mxu0 %v191
  %225 = vmatprep.subr.bf16.mxu0 0
  %226 = vmatpush1.bf16.msra.mxu0 %v221
  %227 = vmatprep.subr.bf16.mxu0 0
  %228 = vmatpush1.bf16.msra.mxu0 0
  %229 = vmatprep.subr.bf16.mxu0 0
  %230 = vmatpush1.bf16.msra.mxu0 0
  %231 = vmatprep.subr.bf16.mxu0 0
  %232 = vmatpush1.bf16.msra.mxu0 0
  %233 = vmatprep.subr.bf16.mxu0 0
  %234 = vmatpush1.bf16.msra.mxu0 0
  %235 = vmatprep.subr.bf16.mxu0 0
  %236 = vmatpush1.bf16.msra.mxu0 0
  %237 = vmatprep.subr.bf16.mxu0 0
  %238 = vmatpush1.bf16.msra.mxu0 0
  %239 = vmatprep.subr.bf16.mxu0 0
  %240 = vmatpush1.bf16.msra.mxu0 0
  %241 = vmatprep.subr.bf16.mxu0 0
  %242 = vmatpush1.bf16.msra.mxu0 0
  %243 = vmatprep.subr.bf16.mxu0 0
  %244 = vmatpush1.bf16.msra.mxu0 0
  %245 = vmatprep.subr.bf16.mxu0 0
  %246 = vmatpush1.bf16.msra.mxu0 0
  %247 = vmatprep.subr.bf16.mxu0 0
  %248 = vmatpush1.bf16.msra.mxu0 0
  %249 = vmatprep.subr.bf16.mxu0 0
  %250 = vmatpush1.bf16.msra.mxu0 0
  %251 = vmatprep.subr.bf16.mxu0 0
  %252 = vmatpush1.bf16.msra.mxu0 0
  %253 = vmatprep.subr.bf16.mxu0 0
  %254 = vmatpush1.bf16.msra.mxu0 0
  %255 = vmatprep.mubr.bf16.mxu0 0
  %256 = vmatmul.mubr.bf16.gmra.mrb[0].mxu0 %v196
  %v257 = vpop.f32.mrb[0].mxu0
  %v258 = vadd.f32 %v68, %v257
  %v259 = vpop.f32.mrb[0].mxu0
  %v260 = vpop.f32.mrb[0].mxu0
  %v261 = vadd.f32 %v73, %v260
  %v262 = vpop.f32.mrb[0].mxu0
  %263 = vmatprep.mubr.bf16.mxu0 0
  %264 = vmatmul.mubr.bf16.gmra.mrb[0].mxu0 %v199
  %v265 = vpop.f32.mrb[0].mxu0
  %v266 = vadd.f32 %v78, %v265
  %v267 = vpop.f32.mrb[0].mxu0
  %v268 = vpop.f32.mrb[0].mxu0
  %v269 = vadd.f32 %v83, %v268
  %v270 = vpop.f32.mrb[0].mxu0
  %271 = vmatprep.mubr.bf16.mxu0 0
  %272 = vmatmul.mubr.bf16.gmra.mrb[0].mxu0 %v202
  %v273 = vpop.f32.mrb[0].mxu0
  %v274 = vadd.f32 %v88, %v273
  %v275 = vpop.f32.mrb[0].mxu0
  %v276 = vpop.f32.mrb[0].mxu0
  %v277 = vadd.f32 %v93, %v276
  %v278 = vpop.f32.mrb[0].mxu0
  %279 = vmatprep.mubr.bf16.mxu0 0
  %280 = vmatmul.mubr.bf16.gmra.mrb[0].mxu0 %v205
  %v281 = vpop.f32.mrb[0].mxu0
  %v282 = vadd.f32 %v98, %v281
  %v283 = vpop.f32.mrb[0].mxu0
  %v284 = vpop.f32.mrb[0].mxu0
  %v285 = vadd.f32 %v103, %v284
  %v286 = vpop.f32.mrb[0].mxu0
  %287 = vmatprep.mubr.bf16.mxu0 0
  %288 = vmatmul.mubr.bf16.gmra.mrb[0].mxu0 %v208
  %v289 = vpop.f32.mrb[0].mxu0
  %v290 = vadd.f32 %v108, %v289
  %v291 = vpop.f32.mrb[0].mxu0
  %v292 = vpop.f32.mrb[0].mxu0
  %v293 = vadd.f32 %v113, %v292
  %v294 = vpop.f32.mrb[0].mxu0
  %295 = vmatprep.mubr.bf16.mxu0 0
  %296 = vmatmul.mubr.bf16.gmra.mrb[0].mxu0 %v211
  %v297 = vpop.f32.mrb[0].mxu0
  %v298 = vadd.f32 %v118, %v297
  %v299 = vpop.f32.mrb[0].mxu0
  %v300 = vpop.f32.mrb[0].mxu0
  %v301 = vadd.f32 %v123, %v300
  %v302 = vpop.f32.mrb[0].mxu0
  %303 = vmatprep.mubr.bf16.mxu0 0
  %304 = vmatmul.mubr.bf16.gmra.mrb[0].mxu0 %v214
  %v305 = vpop.f32.mrb[0].mxu0
  %v306 = vadd.f32 %v128, %v305
  %v307 = vpop.f32.mrb[0].mxu0
  %v308 = vpop.f32.mrb[0].mxu0
  %v309 = vadd.f32 %v133, %v308
  %v310 = vpop.f32.mrb[0].mxu0
  %311 = vmatprep.mubr.bf16.mxu0 0
  %312 = vmatmul.mubr.bf16.gmra.mrb[0].mxu0 %v217
  %v313 = vpop.f32.mrb[0].mxu0
  %v314 = vadd.f32 %v138, %v313
  %v315 = vpop.f32.mrb[0].mxu0
  %v316 = vpop.f32.mrb[0].mxu0
  %v317 = vadd.f32 %v143, %v316
  %v318 = vpop.f32.mrb[0].mxu0
  %319 = vdwg.mxu0
  %v320 = vld [vmem:[%s1] sm:$0xf]
  %v321 = vld [vmem:[%s1 + $0x4] sm:$0xf]
  %v322 = vld [vmem:[%s1 + $0x8] sm:$0xf]
  %v323 = vld [vmem:[%s1 + $0xc] sm:$0x7]
  %324 = vset.pattern.permute.xlu0 1
  %325 = vperm.xlu0 %324, %v30
  %v326 = vpop.permute.xlu0 %325
  %328 = vset.pattern.permute.xlu0 1
  %329 = vperm.xlu0 %328, %v31
  %v330 = vpop.permute.xlu0 %329
  %332 = vset.pattern.permute.xlu0 1
  %333 = vperm.xlu0 %332, %v32
  %v334 = vpop.permute.xlu0 %333
  %336 = vset.pattern.permute.xlu0 1
  %337 = vperm.xlu0 %336, %v33
  %v338 = vpop.permute.xlu0 %337
  %340 = vset.pattern.permute.xlu0 1
  %341 = vperm.xlu0 %340, %v34
  %v342 = vpop.permute.xlu0 %341
  %344 = vset.pattern.permute.xlu0 1
  %345 = vperm.xlu0 %344, %v35
  %v346 = vpop.permute.xlu0 %345
  %348 = vset.pattern.permute.xlu0 1
  %349 = vperm.xlu0 %348, %v36
  %v350 = vpop.permute.xlu0 %349
  %352 = vset.pattern.permute.xlu0 1
  %353 = vperm.xlu0 %352, %v37
  %v354 = vpop.permute.xlu0 %353
  %356 = vset.pattern.permute.xlu0 1
  %357 = vperm.xlu0 %356, %v38
  %v358 = vpop.permute.xlu0 %357
  %360 = vset.pattern.permute.xlu0 1
  %361 = vperm.xlu0 %360, %v39
  %v362 = vpop.permute.xlu0 %361
  %364 = vset.pattern.permute.xlu0 1
  %365 = vperm.xlu0 %364, %v40
  %v366 = vpop.permute.xlu0 %365
  %368 = vset.pattern.permute.xlu0 1
  %369 = vperm.xlu0 %368, %v41
  %v370 = vpop.permute.xlu0 %369
  %372 = vset.pattern.permute.xlu0 1
  %373 = vperm.xlu0 %372, %v42
  %v374 = vpop.permute.xlu0 %373
  %376 = vset.pattern.permute.xlu0 1
  %377 = vperm.xlu0 %376, %v43
  %v378 = vpop.permute.xlu0 %377
  %380 = vset.pattern.permute.xlu0 1
  %381 = vperm.xlu0 %380, %v44
  %v382 = vpop.permute.xlu0 %381
  %384 = vset.pattern.permute.xlu0 1
  %385 = vperm.xlu0 %384, %v45
  %v386 = vpop.permute.xlu0 %385
  %388 = vrot.lane.b32.xlu0 %v177, 104
  %v389 = vpop.permute.xlu0 %388
  %390 = vrot.lane.b32.xlu0 %v178, 104
  %v391 = vpop.permute.xlu0 %390
  %392 = vrot.lane.b32.xlu0 %v179, 104
  %v393 = vpop.permute.xlu0 %392
  %394 = vrot.lane.b32.xlu0 %v180, 104
  %v395 = vpop.permute.xlu0 %394
  %396 = vrot.lane.b32.xlu0 %v181, 104
  %v397 = vpop.permute.xlu0 %396
  %398 = vrot.lane.b32.xlu0 %v182, 104
  %v399 = vpop.permute.xlu0 %398
  %400 = vrot.lane.b32.xlu0 %v183, 104
  %v401 = vpop.permute.xlu0 %400
  %402 = vrot.lane.b32.xlu0 %v184, 104
  %v403 = vpop.permute.xlu0 %402
  %v408 = vunpack.c.l.b16 %v320
  %v409 = vunpack.c.l.b16 %v321
  %v410 = vunpack.c.l.b16 %v322
  %v411 = vunpack.c.l.b16 %v323
  %v412 = vpack.c.b16 %v409, %v408
  %v413 = vpack.c.b16 %v411, %v410
  %vm415 = vcmask 244736
  %v417 = vsel %vm415, %v389, 0
  %v420 = vsel %vm415, %v391, 0
  %v423 = vsel %vm415, %v393, 0
  %v426 = vsel %vm415, %v395, 0
  %v429 = vsel %vm415, %v397, 0
  %v432 = vsel %vm415, %v399, 0
  %v435 = vsel %vm415, %v401, 0
  %v438 = vsel %vm415, %v403, 0
  %vm440 = vcmask 1046528
  %v442 = vsel %vm440, %v413, 0
  %444 = vmatprep.subr.bf16.mxu0 0
  %445 = vmatpush1.bf16.msra.mxu0 %v412
  %446 = vmatprep.subr.bf16.mxu0 0
  %447 = vmatpush1.bf16.msra.mxu0 %v442
  %448 = vmatprep.subr.bf16.mxu0 0
  %449 = vmatpush1.bf16.msra.mxu0 0
  %450 = vmatprep.subr.bf16.mxu0 0
  %451 = vmatpush1.bf16.msra.mxu0 0
  %452 = vmatprep.subr.bf16.mxu0 0
  %453 = vmatpush1.bf16.msra.mxu0 0
  %454 = vmatprep.subr.bf16.mxu0 0
  %455 = vmatpush1.bf16.msra.mxu0 0
  %456 = vmatprep.subr.bf16.mxu0 0
  %457 = vmatpush1.bf16.msra.mxu0 0
  %458 = vmatprep.subr.bf16.mxu0 0
  %459 = vmatpush1.bf16.msra.mxu0 0
  %460 = vmatprep.subr.bf16.mxu0 0
  %461 = vmatpush1.bf16.msra.mxu0 0
  %462 = vmatprep.subr.bf16.mxu0 0
  %463 = vmatpush1.bf16.msra.mxu0 0
  %464 = vmatprep.subr.bf16.mxu0 0
  %465 = vmatpush1.bf16.msra.mxu0 0
  %466 = vmatprep.subr.bf16.mxu0 0
  %467 = vmatpush1.bf16.msra.mxu0 0
  %468 = vmatprep.subr.bf16.mxu0 0
  %469 = vmatpush1.bf16.msra.mxu0 0
  %470 = vmatprep.subr.bf16.mxu0 0
  %471 = vmatpush1.bf16.msra.mxu0 0
  %472 = vmatprep.subr.bf16.mxu0 0
  %473 = vmatpush1.bf16.msra.mxu0 0
  %474 = vmatprep.subr.bf16.mxu0 0
  %475 = vmatpush1.bf16.msra.mxu0 0
  %476 = vmatprep.mubr.bf16.mxu0 0
  %477 = vmatmul.mubr.bf16.gmra.mrb[0].mxu0 %v417
  %v478 = vpop.f32.mrb[0].mxu0
  %v479 = vadd.f32 %v326, %v478
  %v480 = vpop.f32.mrb[0].mxu0
  %v481 = vpop.f32.mrb[0].mxu0
  %v482 = vadd.f32 %v330, %v481
  %v483 = vpop.f32.mrb[0].mxu0
  %484 = vmatprep.mubr.bf16.mxu0 0
  %485 = vmatmul.mubr.bf16.gmra.mrb[0].mxu0 %v420
  %v486 = vpop.f32.mrb[0].mxu0
  %v487 = vadd.f32 %v334, %v486
  %v488 = vpop.f32.mrb[0].mxu0
  %v489 = vpop.f32.mrb[0].mxu0
  %v490 = vadd.f32 %v338, %v489
  %v491 = vpop.f32.mrb[0].mxu0
  %492 = vmatprep.mubr.bf16.mxu0 0
  %493 = vmatmul.mubr.bf16.gmra.mrb[0].mxu0 %v423
  %v494 = vpop.f32.mrb[0].mxu0
  %v495 = vadd.f32 %v342, %v494
  %v496 = vpop.f32.mrb[0].mxu0
  %v497 = vpop.f32.mrb[0].mxu0
  %v498 = vadd.f32 %v346, %v497
  %v499 = vpop.f32.mrb[0].mxu0
  %500 = vmatprep.mubr.bf16.mxu0 0
  %501 = vmatmul.mubr.bf16.gmra.mrb[0].mxu0 %v426
  %v502 = vpop.f32.mrb[0].mxu0
  %v503 = vadd.f32 %v350, %v502
  %v504 = vpop.f32.mrb[0].mxu0
  %v505 = vpop.f32.mrb[0].mxu0
  %v506 = vadd.f32 %v354, %v505
  %v507 = vpop.f32.mrb[0].mxu0
  %508 = vmatprep.mubr.bf16.mxu0 0
  %509 = vmatmul.mubr.bf16.gmra.mrb[0].mxu0 %v429
  %v510 = vpop.f32.mrb[0].mxu0
  %v511 = vadd.f32 %v358, %v510
  %v512 = vpop.f32.mrb[0].mxu0
  %v513 = vpop.f32.mrb[0].mxu0
  %v514 = vadd.f32 %v362, %v513
  %v515 = vpop.f32.mrb[0].mxu0
  %516 = vmatprep.mubr.bf16.mxu0 0
  %517 = vmatmul.mubr.bf16.gmra.mrb[0].mxu0 %v432
  %v518 = vpop.f32.mrb[0].mxu0
  %v519 = vadd.f32 %v366, %v518
  %v520 = vpop.f32.mrb[0].mxu0
  %v521 = vpop.f32.mrb[0].mxu0
  %v522 = vadd.f32 %v370, %v521
  %v523 = vpop.f32.mrb[0].mxu0
  %524 = vmatprep.mubr.bf16.mxu0 0
  %525 = vmatmul.mubr.bf16.gmra.mrb[0].mxu0 %v435
  %v526 = vpop.f32.mrb[0].mxu0
  %v527 = vadd.f32 %v374, %v526
  %v528 = vpop.f32.mrb[0].mxu0
  %v529 = vpop.f32.mrb[0].mxu0
  %v530 = vadd.f32 %v378, %v529
  %v531 = vpop.f32.mrb[0].mxu0
  %532 = vmatprep.mubr.bf16.mxu0 0
  %533 = vmatmul.mubr.bf16.gmra.mrb[0].mxu0 %v438
  %v534 = vpop.f32.mrb[0].mxu0
  %v535 = vadd.f32 %v382, %v534
  %v536 = vpop.f32.mrb[0].mxu0
  %v537 = vpop.f32.mrb[0].mxu0
  %v538 = vadd.f32 %v386, %v537
  %v539 = vpop.f32.mrb[0].mxu0
  %540 = vdwg.mxu0
  %v541 = vadd.f32 %v258, %v479
  %v542 = vadd.f32 %v261, %v482
  %v543 = vadd.f32 %v266, %v487
  %v544 = vadd.f32 %v269, %v490
  %v545 = vadd.f32 %v274, %v495
  %v546 = vadd.f32 %v277, %v498
  %v547 = vadd.f32 %v282, %v503
  %v548 = vadd.f32 %v285, %v506
  %v549 = vadd.f32 %v290, %v511
  %v550 = vadd.f32 %v293, %v514
  %v551 = vadd.f32 %v298, %v519
  %v552 = vadd.f32 %v301, %v522
  %v553 = vadd.f32 %v306, %v527
  %v554 = vadd.f32 %v309, %v530
  %v555 = vadd.f32 %v314, %v535
  %v556 = vadd.f32 %v317, %v538
  %573 = vrot.lane.b32.xlu0 %v258, 32
  %v574 = vpop.permute.xlu0 %573
  %575 = vrot.lane.b32.xlu0 %v261, 32
  %v576 = vpop.permute.xlu0 %575
  %577 = vrot.lane.b32.xlu0 %v266, 32
  %v578 = vpop.permute.xlu0 %577
  %579 = vrot.lane.b32.xlu0 %v269, 32
  %v580 = vpop.permute.xlu0 %579
  %581 = vrot.lane.b32.xlu0 %v274, 32
  %v582 = vpop.permute.xlu0 %581
  %583 = vrot.lane.b32.xlu0 %v277, 32
  %v584 = vpop.permute.xlu0 %583
  %585 = vrot.lane.b32.xlu0 %v282, 32
  %v586 = vpop.permute.xlu0 %585
  %587 = vrot.lane.b32.xlu0 %v285, 32
  %v588 = vpop.permute.xlu0 %587
  %589 = vrot.lane.b32.xlu0 %v290, 32
  %v590 = vpop.permute.xlu0 %589
  %591 = vrot.lane.b32.xlu0 %v293, 32
  %v592 = vpop.permute.xlu0 %591
  %593 = vrot.lane.b32.xlu0 %v298, 32
  %v594 = vpop.permute.xlu0 %593
  %595 = vrot.lane.b32.xlu0 %v301, 32
  %v596 = vpop.permute.xlu0 %595
  %597 = vrot.lane.b32.xlu0 %v306, 32
  %v598 = vpop.permute.xlu0 %597
  %599 = vrot.lane.b32.xlu0 %v309, 32
  %v600 = vpop.permute.xlu0 %599
  %601 = vrot.lane.b32.xlu0 %v314, 32
  %v602 = vpop.permute.xlu0 %601
  %603 = vrot.lane.b32.xlu0 %v317, 32
  %v604 = vpop.permute.xlu0 %603
  %637 = vrot.lane.b32.xlu0 %v479, 64
  %v638 = vpop.permute.xlu0 %637
  %639 = vrot.lane.b32.xlu0 %v482, 64
  %v640 = vpop.permute.xlu0 %639
  %641 = vrot.lane.b32.xlu0 %v487, 64
  %v642 = vpop.permute.xlu0 %641
  %643 = vrot.lane.b32.xlu0 %v490, 64
  %v644 = vpop.permute.xlu0 %643
  %645 = vrot.lane.b32.xlu0 %v495, 64
  %v646 = vpop.permute.xlu0 %645
  %647 = vrot.lane.b32.xlu0 %v498, 64
  %v648 = vpop.permute.xlu0 %647
  %649 = vrot.lane.b32.xlu0 %v503, 64
  %v650 = vpop.permute.xlu0 %649
  %651 = vrot.lane.b32.xlu0 %v506, 64
  %v652 = vpop.permute.xlu0 %651
  %653 = vrot.lane.b32.xlu0 %v511, 64
  %v654 = vpop.permute.xlu0 %653
  %655 = vrot.lane.b32.xlu0 %v514, 64
  %v656 = vpop.permute.xlu0 %655
  %657 = vrot.lane.b32.xlu0 %v519, 64
  %v658 = vpop.permute.xlu0 %657
  %659 = vrot.lane.b32.xlu0 %v522, 64
  %v660 = vpop.permute.xlu0 %659
  %661 = vrot.lane.b32.xlu0 %v527, 64
  %v662 = vpop.permute.xlu0 %661
  %663 = vrot.lane.b32.xlu0 %v530, 64
  %v664 = vpop.permute.xlu0 %663
  %665 = vrot.lane.b32.xlu0 %v535, 64
  %v666 = vpop.permute.xlu0 %665
  %667 = vrot.lane.b32.xlu0 %v538, 64
  %v668 = vpop.permute.xlu0 %667
  %vm685 = vcmask 261120
  %v686 = vsel %vm685, %v541, %v574
  %v687 = vsel %vm685, %v542, %v576
  %v688 = vsel %vm685, %v543, %v578
  %v689 = vsel %vm685, %v544, %v580
  %v690 = vsel %vm685, %v545, %v582
  %v691 = vsel %vm685, %v546, %v584
  %v692 = vsel %vm685, %v547, %v586
  %v693 = vsel %vm685, %v548, %v588
  %v694 = vsel %vm685, %v549, %v590
  %v695 = vsel %vm685, %v550, %v592
  %v696 = vsel %vm685, %v551, %v594
  %v697 = vsel %vm685, %v552, %v596
  %v698 = vsel %vm685, %v553, %v598
  %v699 = vsel %vm685, %v554, %v600
  %v700 = vsel %vm685, %v555, %v602
  %v701 = vsel %vm685, %v556, %v604
  %vm702 = vcmask 523264
  %v703 = vsel %vm702, %v686, %v638
  %v704 = vsel %vm702, %v687, %v640
  %v705 = vsel %vm702, %v688, %v642
  %v706 = vsel %vm702, %v689, %v644
  %v707 = vsel %vm702, %v690, %v646
  %v708 = vsel %vm702, %v691, %v648
  %v709 = vsel %vm702, %v692, %v650
  %v710 = vsel %vm702, %v693, %v652
  %v711 = vsel %vm702, %v694, %v654
  %v712 = vsel %vm702, %v695, %v656
  %v713 = vsel %vm702, %v696, %v658
  %v714 = vsel %vm702, %v697, %v660
  %v715 = vsel %vm702, %v698, %v662
  %v716 = vsel %vm702, %v699, %v664
  %v717 = vsel %vm702, %v700, %v666
  %v718 = vsel %vm702, %v701, %v668
  %v719 = vpack.c.bf16 %v704, %v703
  %v720 = vpack.c.bf16 %v706, %v705
  %v721 = vpack.c.bf16 %v708, %v707
  %v722 = vpack.c.bf16 %v710, %v709
  %v723 = vpack.c.bf16 %v712, %v711
  %v724 = vpack.c.bf16 %v714, %v713
  %v725 = vpack.c.bf16 %v716, %v715
  %v726 = vpack.c.bf16 %v718, %v717
  %743 = vrot.lane.b32.xlu0 %v541, 96
  %v744 = vpop.permute.xlu0 %743
  %745 = vrot.lane.b32.xlu0 %v542, 96
  %v746 = vpop.permute.xlu0 %745
  %747 = vrot.lane.b32.xlu0 %v543, 96
  %v748 = vpop.permute.xlu0 %747
  %749 = vrot.lane.b32.xlu0 %v544, 96
  %v750 = vpop.permute.xlu0 %749
  %751 = vrot.lane.b32.xlu0 %v545, 96
  %v752 = vpop.permute.xlu0 %751
  %753 = vrot.lane.b32.xlu0 %v546, 96
  %v754 = vpop.permute.xlu0 %753
  %755 = vrot.lane.b32.xlu0 %v547, 96
  %v756 = vpop.permute.xlu0 %755
  %757 = vrot.lane.b32.xlu0 %v548, 96
  %v758 = vpop.permute.xlu0 %757
  %759 = vrot.lane.b32.xlu0 %v549, 96
  %v760 = vpop.permute.xlu0 %759
  %761 = vrot.lane.b32.xlu0 %v550, 96
  %v762 = vpop.permute.xlu0 %761
  %763 = vrot.lane.b32.xlu0 %v551, 96
  %v764 = vpop.permute.xlu0 %763
  %765 = vrot.lane.b32.xlu0 %v552, 96
  %v766 = vpop.permute.xlu0 %765
  %767 = vrot.lane.b32.xlu0 %v553, 96
  %v768 = vpop.permute.xlu0 %767
  %769 = vrot.lane.b32.xlu0 %v554, 96
  %v770 = vpop.permute.xlu0 %769
  %771 = vrot.lane.b32.xlu0 %v555, 96
  %v772 = vpop.permute.xlu0 %771
  %773 = vrot.lane.b32.xlu0 %v556, 96
  %v774 = vpop.permute.xlu0 %773
  %791 = vrot.lane.b32.xlu0 %v479, 32
  %v792 = vpop.permute.xlu0 %791
  %793 = vrot.lane.b32.xlu0 %v482, 32
  %v794 = vpop.permute.xlu0 %793
  %795 = vrot.lane.b32.xlu0 %v487, 32
  %v796 = vpop.permute.xlu0 %795
  %797 = vrot.lane.b32.xlu0 %v490, 32
  %v798 = vpop.permute.xlu0 %797
  %799 = vrot.lane.b32.xlu0 %v495, 32
  %v800 = vpop.permute.xlu0 %799
  %801 = vrot.lane.b32.xlu0 %v498, 32
  %v802 = vpop.permute.xlu0 %801
  %803 = vrot.lane.b32.xlu0 %v503, 32
  %v804 = vpop.permute.xlu0 %803
  %805 = vrot.lane.b32.xlu0 %v506, 32
  %v806 = vpop.permute.xlu0 %805
  %807 = vrot.lane.b32.xlu0 %v511, 32
  %v808 = vpop.permute.xlu0 %807
  %809 = vrot.lane.b32.xlu0 %v514, 32
  %v810 = vpop.permute.xlu0 %809
  %811 = vrot.lane.b32.xlu0 %v519, 32
  %v812 = vpop.permute.xlu0 %811
  %813 = vrot.lane.b32.xlu0 %v522, 32
  %v814 = vpop.permute.xlu0 %813
  %815 = vrot.lane.b32.xlu0 %v527, 32
  %v816 = vpop.permute.xlu0 %815
  %817 = vrot.lane.b32.xlu0 %v530, 32
  %v818 = vpop.permute.xlu0 %817
  %819 = vrot.lane.b32.xlu0 %v535, 32
  %v820 = vpop.permute.xlu0 %819
  %821 = vrot.lane.b32.xlu0 %v538, 32
  %v822 = vpop.permute.xlu0 %821
  %v839 = vsel %vm685, %v744, %v258
  %v840 = vsel %vm685, %v746, %v261
  %v841 = vsel %vm685, %v748, %v266
  %v842 = vsel %vm685, %v750, %v269
  %v843 = vsel %vm685, %v752, %v274
  %v844 = vsel %vm685, %v754, %v277
  %v845 = vsel %vm685, %v756, %v282
  %v846 = vsel %vm685, %v758, %v285
  %v847 = vsel %vm685, %v760, %v290
  %v848 = vsel %vm685, %v762, %v293
  %v849 = vsel %vm685, %v764, %v298
  %v850 = vsel %vm685, %v766, %v301
  %v851 = vsel %vm685, %v768, %v306
  %v852 = vsel %vm685, %v770, %v309
  %v853 = vsel %vm685, %v772, %v314
  %v854 = vsel %vm685, %v774, %v317
  %v855 = vsel %vm702, %v839, %v792
  %v856 = vsel %vm702, %v840, %v794
  %v857 = vsel %vm702, %v841, %v796
  %v858 = vsel %vm702, %v842, %v798
  %v859 = vsel %vm702, %v843, %v800
  %v860 = vsel %vm702, %v844, %v802
  %v861 = vsel %vm702, %v845, %v804
  %v862 = vsel %vm702, %v846, %v806
  %v863 = vsel %vm702, %v847, %v808
  %v864 = vsel %vm702, %v848, %v810
  %v865 = vsel %vm702, %v849, %v812
  %v866 = vsel %vm702, %v850, %v814
  %v867 = vsel %vm702, %v851, %v816
  %v868 = vsel %vm702, %v852, %v818
  %v869 = vsel %vm702, %v853, %v820
  %v870 = vsel %vm702, %v854, %v822
  %v871 = vpack.c.bf16 %v856, %v855
  %v872 = vpack.c.bf16 %v858, %v857
  %v873 = vpack.c.bf16 %v860, %v859
  %v874 = vpack.c.bf16 %v862, %v861
  %v875 = vpack.c.bf16 %v864, %v863
  %v876 = vpack.c.bf16 %v866, %v865
  %v877 = vpack.c.bf16 %v868, %v867
  %v878 = vpack.c.bf16 %v870, %v869
  %v879 = vld [vmem:[%s3] sm:$0xff]
  %v880 = vld [vmem:[%s3 + $0x8] sm:$0xff]
  %v881 = vld [vmem:[%s3 + $0x10] sm:$0xff]
  %v882 = vld [vmem:[%s3 + $0x18] sm:$0xff]
  %v883 = vld [vmem:[%s3 + $0x20] sm:$0xff]
  %v884 = vld [vmem:[%s3 + $0x28] sm:$0xff]
  %v885 = vld [vmem:[%s3 + $0x30] sm:$0xff]
  %v886 = vld [vmem:[%s3 + $0x38] sm:$0xff]
  %v887 = vld [vmem:[%s3 + $0x40] sm:$0xff]
  %v888 = vld [vmem:[%s3 + $0x48] sm:$0xff]
  %v889 = vld [vmem:[%s3 + $0x50] sm:$0xff]
  %v890 = vld [vmem:[%s3 + $0x58] sm:$0xff]
  %v891 = vld [vmem:[%s3 + $0x60] sm:$0xff]
  %v892 = vld [vmem:[%s3 + $0x68] sm:$0xff]
  %v893 = vld [vmem:[%s3 + $0x70] sm:$0xff]
  %v894 = vld [vmem:[%s3 + $0x78] sm:$0xff]
  %v911 = vunpack.c.h.b16 %v879
  %v912 = vunpack.c.h.b16 %v880
  %v913 = vunpack.c.h.b16 %v881
  %v914 = vunpack.c.h.b16 %v882
  %v915 = vunpack.c.h.b16 %v883
  %v916 = vunpack.c.h.b16 %v884
  %v917 = vunpack.c.h.b16 %v885
  %v918 = vunpack.c.h.b16 %v886
  %v919 = vunpack.c.h.b16 %v887
  %v920 = vunpack.c.h.b16 %v888
  %v921 = vunpack.c.h.b16 %v889
  %v922 = vunpack.c.h.b16 %v890
  %v923 = vunpack.c.h.b16 %v891
  %v924 = vunpack.c.h.b16 %v892
  %v925 = vunpack.c.h.b16 %v893
  %v926 = vunpack.c.h.b16 %v894
  %v927 = vpack.c.b16 %v912, %v911
  %v928 = vpack.c.b16 %v914, %v913
  %v929 = vpack.c.b16 %v916, %v915
  %v930 = vpack.c.b16 %v918, %v917
  %v931 = vpack.c.b16 %v920, %v919
  %v932 = vpack.c.b16 %v922, %v921
  %v933 = vpack.c.b16 %v924, %v923
  %v934 = vpack.c.b16 %v926, %v925
  %943 = vmatprep.subr.bf16.mxu0 0
  %944 = vmatpush1.bf16.msra.mxu0 %v871
  %945 = vmatprep.subr.bf16.mxu0 0
  %946 = vmatpush1.bf16.msra.mxu0 %v872
  %947 = vmatprep.subr.bf16.mxu0 0
  %948 = vmatpush1.bf16.msra.mxu0 %v873
  %949 = vmatprep.subr.bf16.mxu0 0
  %950 = vmatpush1.bf16.msra.mxu0 %v874
  %951 = vmatprep.subr.bf16.mxu0 0
  %952 = vmatpush1.bf16.msra.mxu0 %v875
  %953 = vmatprep.subr.bf16.mxu0 0
  %954 = vmatpush1.bf16.msra.mxu0 %v876
  %955 = vmatprep.subr.bf16.mxu0 0
  %956 = vmatpush1.bf16.msra.mxu0 %v877
  %957 = vmatprep.subr.bf16.mxu0 0
  %958 = vmatpush1.bf16.msra.mxu0 %v878
  %959 = vmatprep.subr.bf16.mxu0 0
  %960 = vmatpush1.bf16.msra.mxu0 0
  %961 = vmatprep.subr.bf16.mxu0 0
  %962 = vmatpush1.bf16.msra.mxu0 0
  %963 = vmatprep.subr.bf16.mxu0 0
  %964 = vmatpush1.bf16.msra.mxu0 0
  %965 = vmatprep.subr.bf16.mxu0 0
  %966 = vmatpush1.bf16.msra.mxu0 0
  %967 = vmatprep.subr.bf16.mxu0 0
  %968 = vmatpush1.bf16.msra.mxu0 0
  %969 = vmatprep.subr.bf16.mxu0 0
  %970 = vmatpush1.bf16.msra.mxu0 0
  %971 = vmatprep.subr.bf16.mxu0 0
  %972 = vmatpush1.bf16.msra.mxu0 0
  %973 = vmatprep.subr.bf16.mxu0 0
  %974 = vmatpush1.bf16.msra.mxu0 0
  %975 = vmatprep.mubr.bf16.mxu0 0
  %976 = vmatmul.mubr.bf16.gmra.mrb[0].mxu0 %v927
  %v977 = vpop.f32.mrb[0].mxu0
  %v978 = vadd.f32 0.0, %v977
  %v979 = vpop.f32.mrb[0].mxu0
  %v980 = vpop.f32.mrb[0].mxu0
  %v981 = vadd.f32 0.0, %v980
  %v982 = vpop.f32.mrb[0].mxu0
  %983 = vmatprep.mubr.bf16.mxu0 0
  %984 = vmatmul.mubr.bf16.gmra.mrb[0].mxu0 %v928
  %v985 = vpop.f32.mrb[0].mxu0
  %v986 = vadd.f32 0.0, %v985
  %v987 = vpop.f32.mrb[0].mxu0
  %v988 = vpop.f32.mrb[0].mxu0
  %v989 = vadd.f32 0.0, %v988
  %v990 = vpop.f32.mrb[0].mxu0
  %991 = vmatprep.mubr.bf16.mxu0 0
  %992 = vmatmul.mubr.bf16.gmra.mrb[0].mxu0 %v929
  %v993 = vpop.f32.mrb[0].mxu0
  %v994 = vadd.f32 0.0, %v993
  %v995 = vpop.f32.mrb[0].mxu0
  %v996 = vpop.f32.mrb[0].mxu0
  %v997 = vadd.f32 0.0, %v996
  %v998 = vpop.f32.mrb[0].mxu0
  %999 = vmatprep.mubr.bf16.mxu0 0
  %1000 = vmatmul.mubr.bf16.gmra.mrb[0].mxu0 %v930
  %v1001 = vpop.f32.mrb[0].mxu0
  %v1002 = vadd.f32 0.0, %v1001
  %v1003 = vpop.f32.mrb[0].mxu0
  %v1004 = vpop.f32.mrb[0].mxu0
  %v1005 = vadd.f32 0.0, %v1004
  %v1006 = vpop.f32.mrb[0].mxu0
  %1007 = vmatprep.mubr.bf16.mxu0 0
  %1008 = vmatmul.mubr.bf16.gmra.mrb[0].mxu0 %v931
  %v1009 = vpop.f32.mrb[0].mxu0
  %v1010 = vadd.f32 0.0, %v1009
  %v1011 = vpop.f32.mrb[0].mxu0
  %v1012 = vpop.f32.mrb[0].mxu0
  %v1013 = vadd.f32 0.0, %v1012
  %v1014 = vpop.f32.mrb[0].mxu0
  %1015 = vmatprep.mubr.bf16.mxu0 0
  %1016 = vmatmul.mubr.bf16.gmra.mrb[0].mxu0 %v932
  %v1017 = vpop.f32.mrb[0].mxu0
  %v1018 = vadd.f32 0.0, %v1017
  %v1019 = vpop.f32.mrb[0].mxu0
  %v1020 = vpop.f32.mrb[0].mxu0
  %v1021 = vadd.f32 0.0, %v1020
  %v1022 = vpop.f32.mrb[0].mxu0
  %1023 = vmatprep.mubr.bf16.mxu0 0
  %1024 = vmatmul.mubr.bf16.gmra.mrb[0].mxu0 %v933
  %v1025 = vpop.f32.mrb[0].mxu0
  %v1026 = vadd.f32 0.0, %v1025
  %v1027 = vpop.f32.mrb[0].mxu0
  %v1028 = vpop.f32.mrb[0].mxu0
  %v1029 = vadd.f32 0.0, %v1028
  %v1030 = vpop.f32.mrb[0].mxu0
  %1031 = vmatprep.mubr.bf16.mxu0 0
  %1032 = vmatmul.mubr.bf16.gmra.mrb[0].mxu0 %v934
  %v1033 = vpop.f32.mrb[0].mxu0
  %v1034 = vadd.f32 0.0, %v1033
  %v1035 = vpop.f32.mrb[0].mxu0
  %v1036 = vpop.f32.mrb[0].mxu0
  %v1037 = vadd.f32 0.0, %v1036
  %v1038 = vpop.f32.mrb[0].mxu0
  %1039 = vdwg.mxu0
  %v1040 = vunpack.c.l.b16 %v879
  %v1041 = vunpack.c.l.b16 %v880
  %v1042 = vunpack.c.l.b16 %v881
  %v1043 = vunpack.c.l.b16 %v882
  %v1044 = vunpack.c.l.b16 %v883
  %v1045 = vunpack.c.l.b16 %v884
  %v1046 = vunpack.c.l.b16 %v885
  %v1047 = vunpack.c.l.b16 %v886
  %v1048 = vunpack.c.l.b16 %v887
  %v1049 = vunpack.c.l.b16 %v888
  %v1050 = vunpack.c.l.b16 %v889
  %v1051 = vunpack.c.l.b16 %v890
  %v1052 = vunpack.c.l.b16 %v891
  %v1053 = vunpack.c.l.b16 %v892
  %v1054 = vunpack.c.l.b16 %v893
  %v1055 = vunpack.c.l.b16 %v894
  %v1056 = vpack.c.b16 %v1041, %v1040
  %v1057 = vpack.c.b16 %v1043, %v1042
  %v1058 = vpack.c.b16 %v1045, %v1044
  %v1059 = vpack.c.b16 %v1047, %v1046
  %v1060 = vpack.c.b16 %v1049, %v1048
  %v1061 = vpack.c.b16 %v1051, %v1050
  %v1062 = vpack.c.b16 %v1053, %v1052
  %v1063 = vpack.c.b16 %v1055, %v1054
  %1072 = vmatprep.subr.bf16.mxu0 0
  %1073 = vmatpush1.bf16.msra.mxu0 %v719
  %1074 = vmatprep.subr.bf16.mxu0 0
  %1075 = vmatpush1.bf16.msra.mxu0 %v720
  %1076 = vmatprep.subr.bf16.mxu0 0
  %1077 = vmatpush1.bf16.msra.mxu0 %v721
  %1078 = vmatprep.subr.bf16.mxu0 0
  %1079 = vmatpush1.bf16.msra.mxu0 %v722
  %1080 = vmatprep.subr.bf16.mxu0 0
  %1081 = vmatpush1.bf16.msra.mxu0 %v723
  %1082 = vmatprep.subr.bf16.mxu0 0
  %1083 = vmatpush1.bf16.msra.mxu0 %v724
  %1084 = vmatprep.subr.bf16.mxu0 0
  %1085 = vmatpush1.bf16.msra.mxu0 %v725
  %1086 = vmatprep.subr.bf16.mxu0 0
  %1087 = vmatpush1.bf16.msra.mxu0 %v726
  %1088 = vmatprep.subr.bf16.mxu0 0
  %1089 = vmatpush1.bf16.msra.mxu0 0
  %1090 = vmatprep.subr.bf16.mxu0 0
  %1091 = vmatpush1.bf16.msra.mxu0 0
  %1092 = vmatprep.subr.bf16.mxu0 0
  %1093 = vmatpush1.bf16.msra.mxu0 0
  %1094 = vmatprep.subr.bf16.mxu0 0
  %1095 = vmatpush1.bf16.msra.mxu0 0
  %1096 = vmatprep.subr.bf16.mxu0 0
  %1097 = vmatpush1.bf16.msra.mxu0 0
  %1098 = vmatprep.subr.bf16.mxu0 0
  %1099 = vmatpush1.bf16.msra.mxu0 0
  %1100 = vmatprep.subr.bf16.mxu0 0
  %1101 = vmatpush1.bf16.msra.mxu0 0
  %1102 = vmatprep.subr.bf16.mxu0 0
  %1103 = vmatpush1.bf16.msra.mxu0 0
  %1104 = vmatprep.mubr.bf16.mxu0 0
  %1105 = vmatmul.mubr.bf16.gmra.mrb[0].mxu0 %v1056
  %v1106 = vpop.f32.mrb[0].mxu0
  %v1107 = vadd.f32 %v978, %v1106
  %v1108 = vpop.f32.mrb[0].mxu0
  %v1109 = vpop.f32.mrb[0].mxu0
  %v1110 = vadd.f32 %v981, %v1109
  %v1111 = vpop.f32.mrb[0].mxu0
  %1112 = vmatprep.mubr.bf16.mxu0 0
  %1113 = vmatmul.mubr.bf16.gmra.mrb[0].mxu0 %v1057
  %v1114 = vpop.f32.mrb[0].mxu0
  %v1115 = vadd.f32 %v986, %v1114
  %v1116 = vpop.f32.mrb[0].mxu0
  %v1117 = vpop.f32.mrb[0].mxu0
  %v1118 = vadd.f32 %v989, %v1117
  %v1119 = vpop.f32.mrb[0].mxu0
  %1120 = vmatprep.mubr.bf16.mxu0 0
  %1121 = vmatmul.mubr.bf16.gmra.mrb[0].mxu0 %v1058
  %v1122 = vpop.f32.mrb[0].mxu0
  %v1123 = vadd.f32 %v994, %v1122
  %v1124 = vpop.f32.mrb[0].mxu0
  %v1125 = vpop.f32.mrb[0].mxu0
  %v1126 = vadd.f32 %v997, %v1125
  %v1127 = vpop.f32.mrb[0].mxu0
  %1128 = vmatprep.mubr.bf16.mxu0 0
  %1129 = vmatmul.mubr.bf16.gmra.mrb[0].mxu0 %v1059
  %v1130 = vpop.f32.mrb[0].mxu0
  %v1131 = vadd.f32 %v1002, %v1130
  %v1132 = vpop.f32.mrb[0].mxu0
  %v1133 = vpop.f32.mrb[0].mxu0
  %v1134 = vadd.f32 %v1005, %v1133
  %v1135 = vpop.f32.mrb[0].mxu0
  %1136 = vmatprep.mubr.bf16.mxu0 0
  %1137 = vmatmul.mubr.bf16.gmra.mrb[0].mxu0 %v1060
  %v1138 = vpop.f32.mrb[0].mxu0
  %v1139 = vadd.f32 %v1010, %v1138
  %v1140 = vpop.f32.mrb[0].mxu0
  %v1141 = vpop.f32.mrb[0].mxu0
  %v1142 = vadd.f32 %v1013, %v1141
  %v1143 = vpop.f32.mrb[0].mxu0
  %1144 = vmatprep.mubr.bf16.mxu0 0
  %1145 = vmatmul.mubr.bf16.gmra.mrb[0].mxu0 %v1061
  %v1146 = vpop.f32.mrb[0].mxu0
  %v1147 = vadd.f32 %v1018, %v1146
  %v1148 = vpop.f32.mrb[0].mxu0
  %v1149 = vpop.f32.mrb[0].mxu0
  %v1150 = vadd.f32 %v1021, %v1149
  %v1151 = vpop.f32.mrb[0].mxu0
  %1152 = vmatprep.mubr.bf16.mxu0 0
  %1153 = vmatmul.mubr.bf16.gmra.mrb[0].mxu0 %v1062
  %v1154 = vpop.f32.mrb[0].mxu0
  %v1155 = vadd.f32 %v1026, %v1154
  %v1156 = vpop.f32.mrb[0].mxu0
  %v1157 = vpop.f32.mrb[0].mxu0
  %v1158 = vadd.f32 %v1029, %v1157
  %v1159 = vpop.f32.mrb[0].mxu0
  %1160 = vmatprep.mubr.bf16.mxu0 0
  %1161 = vmatmul.mubr.bf16.gmra.mrb[0].mxu0 %v1063
  %v1162 = vpop.f32.mrb[0].mxu0
  %v1163 = vadd.f32 %v1034, %v1162
  %v1164 = vpop.f32.mrb[0].mxu0
  %v1165 = vpop.f32.mrb[0].mxu0
  %v1166 = vadd.f32 %v1037, %v1165
  %v1167 = vpop.f32.mrb[0].mxu0
  %1168 = vdwg.mxu0
  %1169 = vset.pattern.permute.xlu0 2
  %1170 = vperm.xlu0 %1169, %v30
  %v1171 = vpop.permute.xlu0 %1170
  %1173 = vset.pattern.permute.xlu0 2
  %1174 = vperm.xlu0 %1173, %v31
  %v1175 = vpop.permute.xlu0 %1174
  %1177 = vset.pattern.permute.xlu0 2
  %1178 = vperm.xlu0 %1177, %v32
  %v1179 = vpop.permute.xlu0 %1178
  %1181 = vset.pattern.permute.xlu0 2
  %1182 = vperm.xlu0 %1181, %v33
  %v1183 = vpop.permute.xlu0 %1182
  %1185 = vset.pattern.permute.xlu0 2
  %1186 = vperm.xlu0 %1185, %v34
  %v1187 = vpop.permute.xlu0 %1186
  %1189 = vset.pattern.permute.xlu0 2
  %1190 = vperm.xlu0 %1189, %v35
  %v1191 = vpop.permute.xlu0 %1190
  %1193 = vset.pattern.permute.xlu0 2
  %1194 = vperm.xlu0 %1193, %v36
  %v1195 = vpop.permute.xlu0 %1194
  %1197 = vset.pattern.permute.xlu0 2
  %1198 = vperm.xlu0 %1197, %v37
  %v1199 = vpop.permute.xlu0 %1198
  %1201 = vset.pattern.permute.xlu0 2
  %1202 = vperm.xlu0 %1201, %v38
  %v1203 = vpop.permute.xlu0 %1202
  %1205 = vset.pattern.permute.xlu0 2
  %1206 = vperm.xlu0 %1205, %v39
  %v1207 = vpop.permute.xlu0 %1206
  %1209 = vset.pattern.permute.xlu0 2
  %1210 = vperm.xlu0 %1209, %v40
  %v1211 = vpop.permute.xlu0 %1210
  %1213 = vset.pattern.permute.xlu0 2
  %1214 = vperm.xlu0 %1213, %v41
  %v1215 = vpop.permute.xlu0 %1214
  %1217 = vset.pattern.permute.xlu0 2
  %1218 = vperm.xlu0 %1217, %v42
  %v1219 = vpop.permute.xlu0 %1218
  %1221 = vset.pattern.permute.xlu0 2
  %1222 = vperm.xlu0 %1221, %v43
  %v1223 = vpop.permute.xlu0 %1222
  %1225 = vset.pattern.permute.xlu0 2
  %1226 = vperm.xlu0 %1225, %v44
  %v1227 = vpop.permute.xlu0 %1226
  %1229 = vset.pattern.permute.xlu0 2
  %1230 = vperm.xlu0 %1229, %v45
  %v1231 = vpop.permute.xlu0 %1230
  %v1233 = vadd.f32 %v1107, %v1171
  %v1234 = vadd.f32 %v1110, %v1175
  %v1235 = vadd.f32 %v1115, %v1179
  %v1236 = vadd.f32 %v1118, %v1183
  %v1237 = vadd.f32 %v1123, %v1187
  %v1238 = vadd.f32 %v1126, %v1191
  %v1239 = vadd.f32 %v1131, %v1195
  %v1240 = vadd.f32 %v1134, %v1199
  %v1241 = vadd.f32 %v1139, %v1203
  %v1242 = vadd.f32 %v1142, %v1207
  %v1243 = vadd.f32 %v1147, %v1211
  %v1244 = vadd.f32 %v1150, %v1215
  %v1245 = vadd.f32 %v1155, %v1219
  %v1246 = vadd.f32 %v1158, %v1223
  %v1247 = vadd.f32 %v1163, %v1227
  %v1248 = vadd.f32 %v1166, %v1231
  %v1249 = vmax.f32 %v1233, 0.0
  %v1250 = vmax.f32 %v1234, 0.0
  %v1251 = vmax.f32 %v1235, 0.0
  %v1252 = vmax.f32 %v1236, 0.0
  %v1253 = vmax.f32 %v1237, 0.0
  %v1254 = vmax.f32 %v1238, 0.0
  %v1255 = vmax.f32 %v1239, 0.0
  %v1256 = vmax.f32 %v1240, 0.0
  %v1257 = vmax.f32 %v1241, 0.0
  %v1258 = vmax.f32 %v1242, 0.0
  %v1259 = vmax.f32 %v1243, 0.0
  %v1260 = vmax.f32 %v1244, 0.0
  %v1261 = vmax.f32 %v1245, 0.0
  %v1262 = vmax.f32 %v1246, 0.0
  %v1263 = vmax.f32 %v1247, 0.0
  %v1264 = vmax.f32 %v1248, 0.0
  %1281 = vrot.lane.b32.xlu0 %v1249, 96
  %v1282 = vpop.permute.xlu0 %1281
  %1283 = vrot.lane.b32.xlu0 %v1250, 96
  %v1284 = vpop.permute.xlu0 %1283
  %1285 = vrot.lane.b32.xlu0 %v1251, 96
  %v1286 = vpop.permute.xlu0 %1285
  %1287 = vrot.lane.b32.xlu0 %v1252, 96
  %v1288 = vpop.permute.xlu0 %1287
  %1289 = vrot.lane.b32.xlu0 %v1253, 96
  %v1290 = vpop.permute.xlu0 %1289
  %1291 = vrot.lane.b32.xlu0 %v1254, 96
  %v1292 = vpop.permute.xlu0 %1291
  %1293 = vrot.lane.b32.xlu0 %v1255, 96
  %v1294 = vpop.permute.xlu0 %1293
  %1295 = vrot.lane.b32.xlu0 %v1256, 96
  %v1296 = vpop.permute.xlu0 %1295
  %1297 = vrot.lane.b32.xlu0 %v1257, 96
  %v1298 = vpop.permute.xlu0 %1297
  %1299 = vrot.lane.b32.xlu0 %v1258, 96
  %v1300 = vpop.permute.xlu0 %1299
  %1301 = vrot.lane.b32.xlu0 %v1259, 96
  %v1302 = vpop.permute.xlu0 %1301
  %1303 = vrot.lane.b32.xlu0 %v1260, 96
  %v1304 = vpop.permute.xlu0 %1303
  %1305 = vrot.lane.b32.xlu0 %v1261, 96
  %v1306 = vpop.permute.xlu0 %1305
  %1307 = vrot.lane.b32.xlu0 %v1262, 96
  %v1308 = vpop.permute.xlu0 %1307
  %1309 = vrot.lane.b32.xlu0 %v1263, 96
  %v1310 = vpop.permute.xlu0 %1309
  %1311 = vrot.lane.b32.xlu0 %v1264, 96
  %v1312 = vpop.permute.xlu0 %1311
  %v1329 = vadd.f32 %v1249, %v1282
  %v1330 = vadd.f32 %v1250, %v1284
  %v1331 = vadd.f32 %v1251, %v1286
  %v1332 = vadd.f32 %v1252, %v1288
  %v1333 = vadd.f32 %v1253, %v1290
  %v1334 = vadd.f32 %v1254, %v1292
  %v1335 = vadd.f32 %v1255, %v1294
  %v1336 = vadd.f32 %v1256, %v1296
  %v1337 = vadd.f32 %v1257, %v1298
  %v1338 = vadd.f32 %v1258, %v1300
  %v1339 = vadd.f32 %v1259, %v1302
  %v1340 = vadd.f32 %v1260, %v1304
  %v1341 = vadd.f32 %v1261, %v1306
  %v1342 = vadd.f32 %v1262, %v1308
  %v1343 = vadd.f32 %v1263, %v1310
  %v1344 = vadd.f32 %v1264, %v1312
  %1345 = vrot.lane.b32.xlu0 %v1249, 64
  %v1346 = vpop.permute.xlu0 %1345
  %1347 = vrot.lane.b32.xlu0 %v1250, 64
  %v1348 = vpop.permute.xlu0 %1347
  %1349 = vrot.lane.b32.xlu0 %v1251, 64
  %v1350 = vpop.permute.xlu0 %1349
  %1351 = vrot.lane.b32.xlu0 %v1252, 64
  %v1352 = vpop.permute.xlu0 %1351
  %1353 = vrot.lane.b32.xlu0 %v1253, 64
  %v1354 = vpop.permute.xlu0 %1353
  %1355 = vrot.lane.b32.xlu0 %v1254, 64
  %v1356 = vpop.permute.xlu0 %1355
  %1357 = vrot.lane.b32.xlu0 %v1255, 64
  %v1358 = vpop.permute.xlu0 %1357
  %1359 = vrot.lane.b32.xlu0 %v1256, 64
  %v1360 = vpop.permute.xlu0 %1359
  %1361 = vrot.lane.b32.xlu0 %v1257, 64
  %v1362 = vpop.permute.xlu0 %1361
  %1363 = vrot.lane.b32.xlu0 %v1258, 64
  %v1364 = vpop.permute.xlu0 %1363
  %1365 = vrot.lane.b32.xlu0 %v1259, 64
  %v1366 = vpop.permute.xlu0 %1365
  %1367 = vrot.lane.b32.xlu0 %v1260, 64
  %v1368 = vpop.permute.xlu0 %1367
  %1369 = vrot.lane.b32.xlu0 %v1261, 64
  %v1370 = vpop.permute.xlu0 %1369
  %1371 = vrot.lane.b32.xlu0 %v1262, 64
  %v1372 = vpop.permute.xlu0 %1371
  %1373 = vrot.lane.b32.xlu0 %v1263, 64
  %v1374 = vpop.permute.xlu0 %1373
  %1375 = vrot.lane.b32.xlu0 %v1264, 64
  %v1376 = vpop.permute.xlu0 %1375
  %v1393 = vadd.f32 %v1329, %v1346
  %v1394 = vadd.f32 %v1330, %v1348
  %v1395 = vadd.f32 %v1331, %v1350
  %v1396 = vadd.f32 %v1332, %v1352
  %v1397 = vadd.f32 %v1333, %v1354
  %v1398 = vadd.f32 %v1334, %v1356
  %v1399 = vadd.f32 %v1335, %v1358
  %v1400 = vadd.f32 %v1336, %v1360
  %v1401 = vadd.f32 %v1337, %v1362
  %v1402 = vadd.f32 %v1338, %v1364
  %v1403 = vadd.f32 %v1339, %v1366
  %v1404 = vadd.f32 %v1340, %v1368
  %v1405 = vadd.f32 %v1341, %v1370
  %v1406 = vadd.f32 %v1342, %v1372
  %v1407 = vadd.f32 %v1343, %v1374
  %v1408 = vadd.f32 %v1344, %v1376
  %1425 = vrot.lane.b32.xlu0 %v1393, 4
  %v1426 = vpop.permute.xlu0 %1425
  %1427 = vrot.lane.b32.xlu0 %v1394, 4
  %v1428 = vpop.permute.xlu0 %1427
  %1429 = vrot.lane.b32.xlu0 %v1395, 4
  %v1430 = vpop.permute.xlu0 %1429
  %1431 = vrot.lane.b32.xlu0 %v1396, 4
  %v1432 = vpop.permute.xlu0 %1431
  %1433 = vrot.lane.b32.xlu0 %v1397, 4
  %v1434 = vpop.permute.xlu0 %1433
  %1435 = vrot.lane.b32.xlu0 %v1398, 4
  %v1436 = vpop.permute.xlu0 %1435
  %1437 = vrot.lane.b32.xlu0 %v1399, 4
  %v1438 = vpop.permute.xlu0 %1437
  %1439 = vrot.lane.b32.xlu0 %v1400, 4
  %v1440 = vpop.permute.xlu0 %1439
  %1441 = vrot.lane.b32.xlu0 %v1401, 4
  %v1442 = vpop.permute.xlu0 %1441
  %1443 = vrot.lane.b32.xlu0 %v1402, 4
  %v1444 = vpop.permute.xlu0 %1443
  %1445 = vrot.lane.b32.xlu0 %v1403, 4
  %v1446 = vpop.permute.xlu0 %1445
  %1447 = vrot.lane.b32.xlu0 %v1404, 4
  %v1448 = vpop.permute.xlu0 %1447
  %1449 = vrot.lane.b32.xlu0 %v1405, 4
  %v1450 = vpop.permute.xlu0 %1449
  %1451 = vrot.lane.b32.xlu0 %v1406, 4
  %v1452 = vpop.permute.xlu0 %1451
  %1453 = vrot.lane.b32.xlu0 %v1407, 4
  %v1454 = vpop.permute.xlu0 %1453
  %1455 = vrot.lane.b32.xlu0 %v1408, 4
  %v1456 = vpop.permute.xlu0 %1455
  %1473 = vrot.lane.b32.xlu0 %v1393, 12
  %v1474 = vpop.permute.xlu0 %1473
  %1475 = vrot.lane.b32.xlu0 %v1394, 12
  %v1476 = vpop.permute.xlu0 %1475
  %1477 = vrot.lane.b32.xlu0 %v1395, 12
  %v1478 = vpop.permute.xlu0 %1477
  %1479 = vrot.lane.b32.xlu0 %v1396, 12
  %v1480 = vpop.permute.xlu0 %1479
  %1481 = vrot.lane.b32.xlu0 %v1397, 12
  %v1482 = vpop.permute.xlu0 %1481
  %1483 = vrot.lane.b32.xlu0 %v1398, 12
  %v1484 = vpop.permute.xlu0 %1483
  %1485 = vrot.lane.b32.xlu0 %v1399, 12
  %v1486 = vpop.permute.xlu0 %1485
  %1487 = vrot.lane.b32.xlu0 %v1400, 12
  %v1488 = vpop.permute.xlu0 %1487
  %1489 = vrot.lane.b32.xlu0 %v1401, 12
  %v1490 = vpop.permute.xlu0 %1489
  %1491 = vrot.lane.b32.xlu0 %v1402, 12
  %v1492 = vpop.permute.xlu0 %1491
  %1493 = vrot.lane.b32.xlu0 %v1403, 12
  %v1494 = vpop.permute.xlu0 %1493
  %1495 = vrot.lane.b32.xlu0 %v1404, 12
  %v1496 = vpop.permute.xlu0 %1495
  %1497 = vrot.lane.b32.xlu0 %v1405, 12
  %v1498 = vpop.permute.xlu0 %1497
  %1499 = vrot.lane.b32.xlu0 %v1406, 12
  %v1500 = vpop.permute.xlu0 %1499
  %1501 = vrot.lane.b32.xlu0 %v1407, 12
  %v1502 = vpop.permute.xlu0 %1501
  %1503 = vrot.lane.b32.xlu0 %v1408, 12
  %v1504 = vpop.permute.xlu0 %1503
  %1521 = vrot.lane.b32.xlu0 %v1249, 20
  %v1522 = vpop.permute.xlu0 %1521
  %1523 = vrot.lane.b32.xlu0 %v1250, 20
  %v1524 = vpop.permute.xlu0 %1523
  %1525 = vrot.lane.b32.xlu0 %v1251, 20
  %v1526 = vpop.permute.xlu0 %1525
  %1527 = vrot.lane.b32.xlu0 %v1252, 20
  %v1528 = vpop.permute.xlu0 %1527
  %1529 = vrot.lane.b32.xlu0 %v1253, 20
  %v1530 = vpop.permute.xlu0 %1529
  %1531 = vrot.lane.b32.xlu0 %v1254, 20
  %v1532 = vpop.permute.xlu0 %1531
  %1533 = vrot.lane.b32.xlu0 %v1255, 20
  %v1534 = vpop.permute.xlu0 %1533
  %1535 = vrot.lane.b32.xlu0 %v1256, 20
  %v1536 = vpop.permute.xlu0 %1535
  %1537 = vrot.lane.b32.xlu0 %v1257, 20
  %v1538 = vpop.permute.xlu0 %1537
  %1539 = vrot.lane.b32.xlu0 %v1258, 20
  %v1540 = vpop.permute.xlu0 %1539
  %1541 = vrot.lane.b32.xlu0 %v1259, 20
  %v1542 = vpop.permute.xlu0 %1541
  %1543 = vrot.lane.b32.xlu0 %v1260, 20
  %v1544 = vpop.permute.xlu0 %1543
  %1545 = vrot.lane.b32.xlu0 %v1261, 20
  %v1546 = vpop.permute.xlu0 %1545
  %1547 = vrot.lane.b32.xlu0 %v1262, 20
  %v1548 = vpop.permute.xlu0 %1547
  %1549 = vrot.lane.b32.xlu0 %v1263, 20
  %v1550 = vpop.permute.xlu0 %1549
  %1551 = vrot.lane.b32.xlu0 %v1264, 20
  %v1552 = vpop.permute.xlu0 %1551
  %1569 = vrot.lane.b32.xlu0 %v1249, 28
  %v1570 = vpop.permute.xlu0 %1569
  %1571 = vrot.lane.b32.xlu0 %v1250, 28
  %v1572 = vpop.permute.xlu0 %1571
  %1573 = vrot.lane.b32.xlu0 %v1251, 28
  %v1574 = vpop.permute.xlu0 %1573
  %1575 = vrot.lane.b32.xlu0 %v1252, 28
  %v1576 = vpop.permute.xlu0 %1575
  %1577 = vrot.lane.b32.xlu0 %v1253, 28
  %v1578 = vpop.permute.xlu0 %1577
  %1579 = vrot.lane.b32.xlu0 %v1254, 28
  %v1580 = vpop.permute.xlu0 %1579
  %1581 = vrot.lane.b32.xlu0 %v1255, 28
  %v1582 = vpop.permute.xlu0 %1581
  %1583 = vrot.lane.b32.xlu0 %v1256, 28
  %v1584 = vpop.permute.xlu0 %1583
  %1585 = vrot.lane.b32.xlu0 %v1257, 28
  %v1586 = vpop.permute.xlu0 %1585
  %1587 = vrot.lane.b32.xlu0 %v1258, 28
  %v1588 = vpop.permute.xlu0 %1587
  %1589 = vrot.lane.b32.xlu0 %v1259, 28
  %v1590 = vpop.permute.xlu0 %1589
  %1591 = vrot.lane.b32.xlu0 %v1260, 28
  %v1592 = vpop.permute.xlu0 %1591
  %1593 = vrot.lane.b32.xlu0 %v1261, 28
  %v1594 = vpop.permute.xlu0 %1593
  %1595 = vrot.lane.b32.xlu0 %v1262, 28
  %v1596 = vpop.permute.xlu0 %1595
  %1597 = vrot.lane.b32.xlu0 %v1263, 28
  %v1598 = vpop.permute.xlu0 %1597
  %1599 = vrot.lane.b32.xlu0 %v1264, 28
  %v1600 = vpop.permute.xlu0 %1599
  %1617 = vrot.lane.b32.xlu0 %v1249, 36
  %v1618 = vpop.permute.xlu0 %1617
  %1619 = vrot.lane.b32.xlu0 %v1250, 36
  %v1620 = vpop.permute.xlu0 %1619
  %1621 = vrot.lane.b32.xlu0 %v1251, 36
  %v1622 = vpop.permute.xlu0 %1621
  %1623 = vrot.lane.b32.xlu0 %v1252, 36
  %v1624 = vpop.permute.xlu0 %1623
  %1625 = vrot.lane.b32.xlu0 %v1253, 36
  %v1626 = vpop.permute.xlu0 %1625
  %1627 = vrot.lane.b32.xlu0 %v1254, 36
  %v1628 = vpop.permute.xlu0 %1627
  %1629 = vrot.lane.b32.xlu0 %v1255, 36
  %v1630 = vpop.permute.xlu0 %1629
  %1631 = vrot.lane.b32.xlu0 %v1256, 36
  %v1632 = vpop.permute.xlu0 %1631
  %1633 = vrot.lane.b32.xlu0 %v1257, 36
  %v1634 = vpop.permute.xlu0 %1633
  %1635 = vrot.lane.b32.xlu0 %v1258, 36
  %v1636 = vpop.permute.xlu0 %1635
  %1637 = vrot.lane.b32.xlu0 %v1259, 36
  %v1638 = vpop.permute.xlu0 %1637
  %1639 = vrot.lane.b32.xlu0 %v1260, 36
  %v1640 = vpop.permute.xlu0 %1639
  %1641 = vrot.lane.b32.xlu0 %v1261, 36
  %v1642 = vpop.permute.xlu0 %1641
  %1643 = vrot.lane.b32.xlu0 %v1262, 36
  %v1644 = vpop.permute.xlu0 %1643
  %1645 = vrot.lane.b32.xlu0 %v1263, 36
  %v1646 = vpop.permute.xlu0 %1645
  %1647 = vrot.lane.b32.xlu0 %v1264, 36
  %v1648 = vpop.permute.xlu0 %1647
  %1665 = vrot.lane.b32.xlu0 %v1249, 44
  %v1666 = vpop.permute.xlu0 %1665
  %1667 = vrot.lane.b32.xlu0 %v1250, 44
  %v1668 = vpop.permute.xlu0 %1667
  %1669 = vrot.lane.b32.xlu0 %v1251, 44
  %v1670 = vpop.permute.xlu0 %1669
  %1671 = vrot.lane.b32.xlu0 %v1252, 44
  %v1672 = vpop.permute.xlu0 %1671
  %1673 = vrot.lane.b32.xlu0 %v1253, 44
  %v1674 = vpop.permute.xlu0 %1673
  %1675 = vrot.lane.b32.xlu0 %v1254, 44
  %v1676 = vpop.permute.xlu0 %1675
  %1677 = vrot.lane.b32.xlu0 %v1255, 44
  %v1678 = vpop.permute.xlu0 %1677
  %1679 = vrot.lane.b32.xlu0 %v1256, 44
  %v1680 = vpop.permute.xlu0 %1679
  %1681 = vrot.lane.b32.xlu0 %v1257, 44
  %v1682 = vpop.permute.xlu0 %1681
  %1683 = vrot.lane.b32.xlu0 %v1258, 44
  %v1684 = vpop.permute.xlu0 %1683
  %1685 = vrot.lane.b32.xlu0 %v1259, 44
  %v1686 = vpop.permute.xlu0 %1685
  %1687 = vrot.lane.b32.xlu0 %v1260, 44
  %v1688 = vpop.permute.xlu0 %1687
  %1689 = vrot.lane.b32.xlu0 %v1261, 44
  %v1690 = vpop.permute.xlu0 %1689
  %1691 = vrot.lane.b32.xlu0 %v1262, 44
  %v1692 = vpop.permute.xlu0 %1691
  %1693 = vrot.lane.b32.xlu0 %v1263, 44
  %v1694 = vpop.permute.xlu0 %1693
  %1695 = vrot.lane.b32.xlu0 %v1264, 44
  %v1696 = vpop.permute.xlu0 %1695
  %vm1713 = vcmask 31744
  %v1714 = vsel %vm1713, 0.0, %v1426
  %v1715 = vsel %vm1713, 0.0, %v1428
  %v1716 = vsel %vm1713, 0.0, %v1430
  %v1717 = vsel %vm1713, 0.0, %v1432
  %v1718 = vsel %vm1713, 0.0, %v1434
  %v1719 = vsel %vm1713, 0.0, %v1436
  %v1720 = vsel %vm1713, 0.0, %v1438
  %v1721 = vsel %vm1713, 0.0, %v1440
  %v1722 = vsel %vm1713, 0.0, %v1442
  %v1723 = vsel %vm1713, 0.0, %v1444
  %v1724 = vsel %vm1713, 0.0, %v1446
  %v1725 = vsel %vm1713, 0.0, %v1448
  %v1726 = vsel %vm1713, 0.0, %v1450
  %v1727 = vsel %vm1713, 0.0, %v1452
  %v1728 = vsel %vm1713, 0.0, %v1454
  %v1729 = vsel %vm1713, 0.0, %v1456
  %vm1730 = vcmask 162816
  %v1731 = vsel %vm1730, %v1714, 0.0
  %v1732 = vsel %vm1730, %v1715, 0.0
  %v1733 = vsel %vm1730, %v1716, 0.0
  %v1734 = vsel %vm1730, %v1717, 0.0
  %v1735 = vsel %vm1730, %v1718, 0.0
  %v1736 = vsel %vm1730, %v1719, 0.0
  %v1737 = vsel %vm1730, %v1720, 0.0
  %v1738 = vsel %vm1730, %v1721, 0.0
  %v1739 = vsel %vm1730, %v1722, 0.0
  %v1740 = vsel %vm1730, %v1723, 0.0
  %v1741 = vsel %vm1730, %v1724, 0.0
  %v1742 = vsel %vm1730, %v1725, 0.0
  %v1743 = vsel %vm1730, %v1726, 0.0
  %v1744 = vsel %vm1730, %v1727, 0.0
  %v1745 = vsel %vm1730, %v1728, 0.0
  %v1746 = vsel %vm1730, %v1729, 0.0
  %vm1747 = vcmask 228352
  %v1748 = vsel %vm1747, %v1731, %v1474
  %v1749 = vsel %vm1747, %v1732, %v1476
  %v1750 = vsel %vm1747, %v1733, %v1478
  %v1751 = vsel %vm1747, %v1734, %v1480
  %v1752 = vsel %vm1747, %v1735, %v1482
  %v1753 = vsel %vm1747, %v1736, %v1484
  %v1754 = vsel %vm1747, %v1737, %v1486
  %v1755 = vsel %vm1747, %v1738, %v1488
  %v1756 = vsel %vm1747, %v1739, %v1490
  %v1757 = vsel %vm1747, %v1740, %v1492
  %v1758 = vsel %vm1747, %v1741, %v1494
  %v1759 = vsel %vm1747, %v1742, %v1496
  %v1760 = vsel %vm1747, %v1743, %v1498
  %v1761 = vsel %vm1747, %v1744, %v1500
  %v1762 = vsel %vm1747, %v1745, %v1502
  %v1763 = vsel %vm1747, %v1746, %v1504
  %vm1764 = vcmask 359424
  %v1765 = vsel %vm1764, %v1748, 0.0
  %v1766 = vsel %vm1764, %v1749, 0.0
  %v1767 = vsel %vm1764, %v1750, 0.0
  %v1768 = vsel %vm1764, %v1751, 0.0
  %v1769 = vsel %vm1764, %v1752, 0.0
  %v1770 = vsel %vm1764, %v1753, 0.0
  %v1771 = vsel %vm1764, %v1754, 0.0
  %v1772 = vsel %vm1764, %v1755, 0.0
  %v1773 = vsel %vm1764, %v1756, 0.0
  %v1774 = vsel %vm1764, %v1757, 0.0
  %v1775 = vsel %vm1764, %v1758, 0.0
  %v1776 = vsel %vm1764, %v1759, 0.0
  %v1777 = vsel %vm1764, %v1760, 0.0
  %v1778 = vsel %vm1764, %v1761, 0.0
  %v1779 = vsel %vm1764, %v1762, 0.0
  %v1780 = vsel %vm1764, %v1763, 0.0
  %vm1781 = vcmask 424960
  %v1782 = vsel %vm1781, %v1765, %v1522
  %v1783 = vsel %vm1781, %v1766, %v1524
  %v1784 = vsel %vm1781, %v1767, %v1526
  %v1785 = vsel %vm1781, %v1768, %v1528
  %v1786 = vsel %vm1781, %v1769, %v1530
  %v1787 = vsel %vm1781, %v1770, %v1532
  %v1788 = vsel %vm1781, %v1771, %v1534
  %v1789 = vsel %vm1781, %v1772, %v1536
  %v1790 = vsel %vm1781, %v1773, %v1538
  %v1791 = vsel %vm1781, %v1774, %v1540
  %v1792 = vsel %vm1781, %v1775, %v1542
  %v1793 = vsel %vm1781, %v1776, %v1544
  %v1794 = vsel %vm1781, %v1777, %v1546
  %v1795 = vsel %vm1781, %v1778, %v1548
  %v1796 = vsel %vm1781, %v1779, %v1550
  %v1797 = vsel %vm1781, %v1780, %v1552
  %vm1798 = vcmask 556032
  %v1799 = vsel %vm1798, %v1782, 0.0
  %v1800 = vsel %vm1798, %v1783, 0.0
  %v1801 = vsel %vm1798, %v1784, 0.0
  %v1802 = vsel %vm1798, %v1785, 0.0
  %v1803 = vsel %vm1798, %v1786, 0.0
  %v1804 = vsel %vm1798, %v1787, 0.0
  %v1805 = vsel %vm1798, %v1788, 0.0
  %v1806 = vsel %vm1798, %v1789, 0.0
  %v1807 = vsel %vm1798, %v1790, 0.0
  %v1808 = vsel %vm1798, %v1791, 0.0
  %v1809 = vsel %vm1798, %v1792, 0.0
  %v1810 = vsel %vm1798, %v1793, 0.0
  %v1811 = vsel %vm1798, %v1794, 0.0
  %v1812 = vsel %vm1798, %v1795, 0.0
  %v1813 = vsel %vm1798, %v1796, 0.0
  %v1814 = vsel %vm1798, %v1797, 0.0
  %vm1815 = vcmask 621568
  %v1816 = vsel %vm1815, %v1799, %v1570
  %v1817 = vsel %vm1815, %v1800, %v1572
  %v1818 = vsel %vm1815, %v1801, %v1574
  %v1819 = vsel %vm1815, %v1802, %v1576
  %v1820 = vsel %vm1815, %v1803, %v1578
  %v1821 = vsel %vm1815, %v1804, %v1580
  %v1822 = vsel %vm1815, %v1805, %v1582
  %v1823 = vsel %vm1815, %v1806, %v1584
  %v1824 = vsel %vm1815, %v1807, %v1586
  %v1825 = vsel %vm1815, %v1808, %v1588
  %v1826 = vsel %vm1815, %v1809, %v1590
  %v1827 = vsel %vm1815, %v1810, %v1592
  %v1828 = vsel %vm1815, %v1811, %v1594
  %v1829 = vsel %vm1815, %v1812, %v1596
  %v1830 = vsel %vm1815, %v1813, %v1598
  %v1831 = vsel %vm1815, %v1814, %v1600
  %vm1832 = vcmask 752640
  %v1833 = vsel %vm1832, %v1816, 0.0
  %v1834 = vsel %vm1832, %v1817, 0.0
  %v1835 = vsel %vm1832, %v1818, 0.0
  %v1836 = vsel %vm1832, %v1819, 0.0
  %v1837 = vsel %vm1832, %v1820, 0.0
  %v1838 = vsel %vm1832, %v1821, 0.0
  %v1839 = vsel %vm1832, %v1822, 0.0
  %v1840 = vsel %vm1832, %v1823, 0.0
  %v1841 = vsel %vm1832, %v1824, 0.0
  %v1842 = vsel %vm1832, %v1825, 0.0
  %v1843 = vsel %vm1832, %v1826, 0.0
  %v1844 = vsel %vm1832, %v1827, 0.0
  %v1845 = vsel %vm1832, %v1828, 0.0
  %v1846 = vsel %vm1832, %v1829, 0.0
  %v1847 = vsel %vm1832, %v1830, 0.0
  %v1848 = vsel %vm1832, %v1831, 0.0
  %vm1849 = vcmask 818176
  %v1850 = vsel %vm1849, %v1833, %v1618
  %v1851 = vsel %vm1849, %v1834, %v1620
  %v1852 = vsel %vm1849, %v1835, %v1622
  %v1853 = vsel %vm1849, %v1836, %v1624
  %v1854 = vsel %vm1849, %v1837, %v1626
  %v1855 = vsel %vm1849, %v1838, %v1628
  %v1856 = vsel %vm1849, %v1839, %v1630
  %v1857 = vsel %vm1849, %v1840, %v1632
  %v1858 = vsel %vm1849, %v1841, %v1634
  %v1859 = vsel %vm1849, %v1842, %v1636
  %v1860 = vsel %vm1849, %v1843, %v1638
  %v1861 = vsel %vm1849, %v1844, %v1640
  %v1862 = vsel %vm1849, %v1845, %v1642
  %v1863 = vsel %vm1849, %v1846, %v1644
  %v1864 = vsel %vm1849, %v1847, %v1646
  %v1865 = vsel %vm1849, %v1848, %v1648
  %vm1866 = vcmask 949248
  %v1867 = vsel %vm1866, %v1850, 0.0
  %v1868 = vsel %vm1866, %v1851, 0.0
  %v1869 = vsel %vm1866, %v1852, 0.0
  %v1870 = vsel %vm1866, %v1853, 0.0
  %v1871 = vsel %vm1866, %v1854, 0.0
  %v1872 = vsel %vm1866, %v1855, 0.0
  %v1873 = vsel %vm1866, %v1856, 0.0
  %v1874 = vsel %vm1866, %v1857, 0.0
  %v1875 = vsel %vm1866, %v1858, 0.0
  %v1876 = vsel %vm1866, %v1859, 0.0
  %v1877 = vsel %vm1866, %v1860, 0.0
  %v1878 = vsel %vm1866, %v1861, 0.0
  %v1879 = vsel %vm1866, %v1862, 0.0
  %v1880 = vsel %vm1866, %v1863, 0.0
  %v1881 = vsel %vm1866, %v1864, 0.0
  %v1882 = vsel %vm1866, %v1865, 0.0
  %vm1883 = vcmask 1014784
  %v1884 = vsel %vm1883, %v1867, %v1666
  %v1885 = vsel %vm1883, %v1868, %v1668
  %v1886 = vsel %vm1883, %v1869, %v1670
  %v1887 = vsel %vm1883, %v1870, %v1672
  %v1888 = vsel %vm1883, %v1871, %v1674
  %v1889 = vsel %vm1883, %v1872, %v1676
  %v1890 = vsel %vm1883, %v1873, %v1678
  %v1891 = vsel %vm1883, %v1874, %v1680
  %v1892 = vsel %vm1883, %v1875, %v1682
  %v1893 = vsel %vm1883, %v1876, %v1684
  %v1894 = vsel %vm1883, %v1877, %v1686
  %v1895 = vsel %vm1883, %v1878, %v1688
  %v1896 = vsel %vm1883, %v1879, %v1690
  %v1897 = vsel %vm1883, %v1880, %v1692
  %v1898 = vsel %vm1883, %v1881, %v1694
  %v1899 = vsel %vm1883, %v1882, %v1696
  %vm1900 = vcmask 97280
  %v1901 = vsel %vm1900, %v1666, 0.0
  %v1902 = vsel %vm1900, %v1668, 0.0
  %v1903 = vsel %vm1900, %v1670, 0.0
  %v1904 = vsel %vm1900, %v1672, 0.0
  %v1905 = vsel %vm1900, %v1674, 0.0
  %v1906 = vsel %vm1900, %v1676, 0.0
  %v1907 = vsel %vm1900, %v1678, 0.0
  %v1908 = vsel %vm1900, %v1680, 0.0
  %v1909 = vsel %vm1900, %v1682, 0.0
  %v1910 = vsel %vm1900, %v1684, 0.0
  %v1911 = vsel %vm1900, %v1686, 0.0
  %v1912 = vsel %vm1900, %v1688, 0.0
  %v1913 = vsel %vm1900, %v1690, 0.0
  %v1914 = vsel %vm1900, %v1692, 0.0
  %v1915 = vsel %vm1900, %v1694, 0.0
  %v1916 = vsel %vm1900, %v1696, 0.0
  %v1917 = vpack.c.bf16 %v1885, %v1884
  %v1918 = vpack.c.bf16 %v1902, %v1901
  %v1919 = vpack.c.bf16 %v1887, %v1886
  %v1920 = vpack.c.bf16 %v1904, %v1903
  %v1921 = vpack.c.bf16 %v1889, %v1888
  %v1922 = vpack.c.bf16 %v1906, %v1905
  %v1923 = vpack.c.bf16 %v1891, %v1890
  %v1924 = vpack.c.bf16 %v1908, %v1907
  %v1925 = vpack.c.bf16 %v1893, %v1892
  %v1926 = vpack.c.bf16 %v1910, %v1909
  %v1927 = vpack.c.bf16 %v1895, %v1894
  %v1928 = vpack.c.bf16 %v1912, %v1911
  %v1929 = vpack.c.bf16 %v1897, %v1896
  %v1930 = vpack.c.bf16 %v1914, %v1913
  %v1931 = vpack.c.bf16 %v1899, %v1898
  %v1932 = vpack.c.bf16 %v1916, %v1915
  %v1933 = vld [vmem:[%s4] sm:$0xf]
  %v1934 = vld [vmem:[%s4 + $0x4] sm:$0xf]
  %v1935 = vld [vmem:[%s4 + $0x8] sm:$0xf]
  %v1936 = vld [vmem:[%s4 + $0xc] sm:$0xf]
  %v1937 = vld [vmem:[%s4 + $0x10] sm:$0xf]
  %v1938 = vld [vmem:[%s4 + $0x14] sm:$0xf]
  %v1939 = vld [vmem:[%s4 + $0x18] sm:$0xf]
  %v1940 = vld [vmem:[%s4 + $0x1c] sm:$0xf]
  %v1941 = vld [vmem:[%s4 + $0x20] sm:$0xf]
  %v1942 = vld [vmem:[%s4 + $0x24] sm:$0xf]
  %v1943 = vld [vmem:[%s4 + $0x28] sm:$0xf]
  %v1944 = vld [vmem:[%s4 + $0x2c] sm:$0xf]
  %v1945 = vld [vmem:[%s4 + $0x30] sm:$0xf]
  %v1946 = vld [vmem:[%s4 + $0x34] sm:$0xf]
  %v1947 = vld [vmem:[%s4 + $0x38] sm:$0xf]
  %v1948 = vld [vmem:[%s4 + $0x3c] sm:$0xf]
  %s1949 = scalar_lea.vmem %s4, 64
  %v1950 = vld [vmem:[%s1949] sm:$0xf]
  %v1951 = vld [vmem:[%s1949 + $0x4] sm:$0xf]
  %v1952 = vld [vmem:[%s1949 + $0x8] sm:$0xf]
  %v1953 = vld [vmem:[%s1949 + $0xc] sm:$0xf]
  %v1954 = vld [vmem:[%s1949 + $0x10] sm:$0xf]
  %v1955 = vld [vmem:[%s1949 + $0x14] sm:$0xf]
  %v1956 = vld [vmem:[%s1949 + $0x18] sm:$0xf]
  %v1957 = vld [vmem:[%s1949 + $0x1c] sm:$0xf]
  %v1958 = vld [vmem:[%s1949 + $0x20] sm:$0xf]
  %v1959 = vld [vmem:[%s1949 + $0x24] sm:$0xf]
  %v1960 = vld [vmem:[%s1949 + $0x28] sm:$0xf]
  %v1961 = vld [vmem:[%s1949 + $0x2c] sm:$0xf]
  %v1962 = vld [vmem:[%s1949 + $0x30] sm:$0xf]
  %v1963 = vld [vmem:[%s1949 + $0x34] sm:$0xf]
  %v1964 = vld [vmem:[%s1949 + $0x38] sm:$0xf]
  %v1965 = vld [vmem:[%s1949 + $0x3c] sm:$0xf]
  %v1982 = vunpack.c.l.b16 %v1950
  %v1983 = vunpack.c.l.b16 %v1951
  %v1984 = vunpack.c.l.b16 %v1952
  %v1985 = vunpack.c.l.b16 %v1953
  %v1986 = vunpack.c.l.b16 %v1954
  %v1987 = vunpack.c.l.b16 %v1955
  %v1988 = vunpack.c.l.b16 %v1956
  %v1989 = vunpack.c.l.b16 %v1957
  %v1990 = vunpack.c.l.b16 %v1958
  %v1991 = vunpack.c.l.b16 %v1959
  %v1992 = vunpack.c.l.b16 %v1960
  %v1993 = vunpack.c.l.b16 %v1961
  %v1994 = vunpack.c.l.b16 %v1962
  %v1995 = vunpack.c.l.b16 %v1963
  %v1996 = vunpack.c.l.b16 %v1964
  %v1997 = vunpack.c.l.b16 %v1965
  %v1998 = vpack.c.b16 %v1983, %v1982
  %v1999 = vpack.c.b16 %v1985, %v1984
  %v2000 = vpack.c.b16 %v1987, %v1986
  %v2001 = vpack.c.b16 %v1989, %v1988
  %v2002 = vpack.c.b16 %v1991, %v1990
  %v2003 = vpack.c.b16 %v1993, %v1992
  %v2004 = vpack.c.b16 %v1995, %v1994
  %v2005 = vpack.c.b16 %v1997, %v1996
  %2030 = vrot.lane.b32.xlu0 %v1917, 127
  %v2031 = vpop.permute.xlu0 %2030
  %2032 = vrot.lane.b32.xlu0 %v1918, 127
  %v2033 = vpop.permute.xlu0 %2032
  %2034 = vrot.lane.b32.xlu0 %v1919, 127
  %v2035 = vpop.permute.xlu0 %2034
  %2036 = vrot.lane.b32.xlu0 %v1920, 127
  %v2037 = vpop.permute.xlu0 %2036
  %2038 = vrot.lane.b32.xlu0 %v1921, 127
  %v2039 = vpop.permute.xlu0 %2038
  %2040 = vrot.lane.b32.xlu0 %v1922, 127
  %v2041 = vpop.permute.xlu0 %2040
  %2042 = vrot.lane.b32.xlu0 %v1923, 127
  %v2043 = vpop.permute.xlu0 %2042
  %2044 = vrot.lane.b32.xlu0 %v1924, 127
  %v2045 = vpop.permute.xlu0 %2044
  %2046 = vrot.lane.b32.xlu0 %v1925, 127
  %v2047 = vpop.permute.xlu0 %2046
  %2048 = vrot.lane.b32.xlu0 %v1926, 127
  %v2049 = vpop.permute.xlu0 %2048
  %2050 = vrot.lane.b32.xlu0 %v1927, 127
  %v2051 = vpop.permute.xlu0 %2050
  %2052 = vrot.lane.b32.xlu0 %v1928, 127
  %v2053 = vpop.permute.xlu0 %2052
  %2054 = vrot.lane.b32.xlu0 %v1929, 127
  %v2055 = vpop.permute.xlu0 %2054
  %2056 = vrot.lane.b32.xlu0 %v1930, 127
  %v2057 = vpop.permute.xlu0 %2056
  %2058 = vrot.lane.b32.xlu0 %v1931, 127
  %v2059 = vpop.permute.xlu0 %2058
  %2060 = vrot.lane.b32.xlu0 %v1932, 127
  %v2061 = vpop.permute.xlu0 %2060
  %vm2062 = vcmask 1039360
  %v2063 = vsel %vm2062, %v2031, %v2033
  %v2064 = vsel %vm2062, %v2035, %v2037
  %v2065 = vsel %vm2062, %v2039, %v2041
  %v2066 = vsel %vm2062, %v2043, %v2045
  %v2067 = vsel %vm2062, %v2047, %v2049
  %v2068 = vsel %vm2062, %v2051, %v2053
  %v2069 = vsel %vm2062, %v2055, %v2057
  %v2070 = vsel %vm2062, %v2059, %v2061
  %2087 = vmatprep.subr.bf16.mxu0 %v2033
  %2088 = vmatpush1.bf16.msra.mxu0 %v2063
  %2089 = vmatprep.subr.bf16.mxu0 %v2037
  %2090 = vmatpush1.bf16.msra.mxu0 %v2064
  %2091 = vmatprep.subr.bf16.mxu0 %v2041
  %2092 = vmatpush1.bf16.msra.mxu0 %v2065
  %2093 = vmatprep.subr.bf16.mxu0 %v2045
  %2094 = vmatpush1.bf16.msra.mxu0 %v2066
  %2095 = vmatprep.subr.bf16.mxu0 %v2049
  %2096 = vmatpush1.bf16.msra.mxu0 %v2067
  %2097 = vmatprep.subr.bf16.mxu0 %v2053
  %2098 = vmatpush1.bf16.msra.mxu0 %v2068
  %2099 = vmatprep.subr.bf16.mxu0 %v2057
  %2100 = vmatpush1.bf16.msra.mxu0 %v2069
  %2101 = vmatprep.subr.bf16.mxu0 %v2061
  %2102 = vmatpush1.bf16.msra.mxu0 %v2070
  %2103 = vmatprep.subr.bf16.mxu0 0
  %2104 = vmatpush1.bf16.msra.mxu0 0
  %2105 = vmatprep.subr.bf16.mxu0 0
  %2106 = vmatpush1.bf16.msra.mxu0 0
  %2107 = vmatprep.subr.bf16.mxu0 0
  %2108 = vmatpush1.bf16.msra.mxu0 0
  %2109 = vmatprep.subr.bf16.mxu0 0
  %2110 = vmatpush1.bf16.msra.mxu0 0
  %2111 = vmatprep.subr.bf16.mxu0 0
  %2112 = vmatpush1.bf16.msra.mxu0 0
  %2113 = vmatprep.subr.bf16.mxu0 0
  %2114 = vmatpush1.bf16.msra.mxu0 0
  %2115 = vmatprep.subr.bf16.mxu0 0
  %2116 = vmatpush1.bf16.msra.mxu0 0
  %2117 = vmatprep.subr.bf16.mxu0 0
  %2118 = vmatpush1.bf16.msra.mxu0 0
  %2119 = vmatprep.mubr.bf16.mxu0 0
  %2120 = vmatmul.mubr.bf16.gmra.mrb[0].mxu0 %v1998
  %v2121 = vpop.f32.mrb[0].mxu0
  %v2122 = vadd.f32 0.0, %v2121
  %v2123 = vpop.f32.mrb[0].mxu0
  %v2124 = vadd.f32 0.0, %v2123
  %v2125 = vpop.f32.mrb[0].mxu0
  %v2126 = vadd.f32 0.0, %v2125
  %v2127 = vpop.f32.mrb[0].mxu0
  %v2128 = vadd.f32 0.0, %v2127
  %2129 = vmatprep.mubr.bf16.mxu0 0
  %2130 = vmatmul.mubr.bf16.gmra.mrb[0].mxu0 %v1999
  %v2131 = vpop.f32.mrb[0].mxu0
  %v2132 = vadd.f32 0.0, %v2131
  %v2133 = vpop.f32.mrb[0].mxu0
  %v2134 = vadd.f32 0.0, %v2133
  %v2135 = vpop.f32.mrb[0].mxu0
  %v2136 = vadd.f32 0.0, %v2135
  %v2137 = vpop.f32.mrb[0].mxu0
  %v2138 = vadd.f32 0.0, %v2137
  %2139 = vmatprep.mubr.bf16.mxu0 0
  %2140 = vmatmul.mubr.bf16.gmra.mrb[0].mxu0 %v2000
  %v2141 = vpop.f32.mrb[0].mxu0
  %v2142 = vadd.f32 0.0, %v2141
  %v2143 = vpop.f32.mrb[0].mxu0
  %v2144 = vadd.f32 0.0, %v2143
  %v2145 = vpop.f32.mrb[0].mxu0
  %v2146 = vadd.f32 0.0, %v2145
  %v2147 = vpop.f32.mrb[0].mxu0
  %v2148 = vadd.f32 0.0, %v2147
  %2149 = vmatprep.mubr.bf16.mxu0 0
  %2150 = vmatmul.mubr.bf16.gmra.mrb[0].mxu0 %v2001
  %v2151 = vpop.f32.mrb[0].mxu0
  %v2152 = vadd.f32 0.0, %v2151
  %v2153 = vpop.f32.mrb[0].mxu0
  %v2154 = vadd.f32 0.0, %v2153
  %v2155 = vpop.f32.mrb[0].mxu0
  %v2156 = vadd.f32 0.0, %v2155
  %v2157 = vpop.f32.mrb[0].mxu0
  %v2158 = vadd.f32 0.0, %v2157
  %2159 = vmatprep.mubr.bf16.mxu0 0
  %2160 = vmatmul.mubr.bf16.gmra.mrb[0].mxu0 %v2002
  %v2161 = vpop.f32.mrb[0].mxu0
  %v2162 = vadd.f32 0.0, %v2161
  %v2163 = vpop.f32.mrb[0].mxu0
  %v2164 = vadd.f32 0.0, %v2163
  %v2165 = vpop.f32.mrb[0].mxu0
  %v2166 = vadd.f32 0.0, %v2165
  %v2167 = vpop.f32.mrb[0].mxu0
  %v2168 = vadd.f32 0.0, %v2167
  %2169 = vmatprep.mubr.bf16.mxu0 0
  %2170 = vmatmul.mubr.bf16.gmra.mrb[0].mxu0 %v2003
  %v2171 = vpop.f32.mrb[0].mxu0
  %v2172 = vadd.f32 0.0, %v2171
  %v2173 = vpop.f32.mrb[0].mxu0
  %v2174 = vadd.f32 0.0, %v2173
  %v2175 = vpop.f32.mrb[0].mxu0
  %v2176 = vadd.f32 0.0, %v2175
  %v2177 = vpop.f32.mrb[0].mxu0
  %v2178 = vadd.f32 0.0, %v2177
  %2179 = vmatprep.mubr.bf16.mxu0 0
  %2180 = vmatmul.mubr.bf16.gmra.mrb[0].mxu0 %v2004
  %v2181 = vpop.f32.mrb[0].mxu0
  %v2182 = vadd.f32 0.0, %v2181
  %v2183 = vpop.f32.mrb[0].mxu0
  %v2184 = vadd.f32 0.0, %v2183
  %v2185 = vpop.f32.mrb[0].mxu0
  %v2186 = vadd.f32 0.0, %v2185
  %v2187 = vpop.f32.mrb[0].mxu0
  %v2188 = vadd.f32 0.0, %v2187
  %2189 = vmatprep.mubr.bf16.mxu0 0
  %2190 = vmatmul.mubr.bf16.gmra.mrb[0].mxu0 %v2005
  %v2191 = vpop.f32.mrb[0].mxu0
  %v2192 = vadd.f32 0.0, %v2191
  %v2193 = vpop.f32.mrb[0].mxu0
  %v2194 = vadd.f32 0.0, %v2193
  %v2195 = vpop.f32.mrb[0].mxu0
  %v2196 = vadd.f32 0.0, %v2195
  %v2197 = vpop.f32.mrb[0].mxu0
  %v2198 = vadd.f32 0.0, %v2197
  %2199 = vdwg.mxu0
  %v2216 = vunpack.c.l.b16 %v1933
  %v2217 = vunpack.c.l.b16 %v1934
  %v2218 = vunpack.c.l.b16 %v1935
  %v2219 = vunpack.c.l.b16 %v1936
  %v2220 = vunpack.c.l.b16 %v1937
  %v2221 = vunpack.c.l.b16 %v1938
  %v2222 = vunpack.c.l.b16 %v1939
  %v2223 = vunpack.c.l.b16 %v1940
  %v2224 = vunpack.c.l.b16 %v1941
  %v2225 = vunpack.c.l.b16 %v1942
  %v2226 = vunpack.c.l.b16 %v1943
  %v2227 = vunpack.c.l.b16 %v1944
  %v2228 = vunpack.c.l.b16 %v1945
  %v2229 = vunpack.c.l.b16 %v1946
  %v2230 = vunpack.c.l.b16 %v1947
  %v2231 = vunpack.c.l.b16 %v1948
  %v2232 = vpack.c.b16 %v2217, %v2216
  %v2233 = vpack.c.b16 %v2219, %v2218
  %v2234 = vpack.c.b16 %v2221, %v2220
  %v2235 = vpack.c.b16 %v2223, %v2222
  %v2236 = vpack.c.b16 %v2225, %v2224
  %v2237 = vpack.c.b16 %v2227, %v2226
  %v2238 = vpack.c.b16 %v2229, %v2228
  %v2239 = vpack.c.b16 %v2231, %v2230
  %2248 = vmatprep.subr.bf16.mxu0 %v1918
  %2249 = vmatpush1.bf16.msra.mxu0 %v1917
  %2250 = vmatprep.subr.bf16.mxu0 %v1920
  %2251 = vmatpush1.bf16.msra.mxu0 %v1919
  %2252 = vmatprep.subr.bf16.mxu0 %v1922
  %2253 = vmatpush1.bf16.msra.mxu0 %v1921
  %2254 = vmatprep.subr.bf16.mxu0 %v1924
  %2255 = vmatpush1.bf16.msra.mxu0 %v1923
  %2256 = vmatprep.subr.bf16.mxu0 %v1926
  %2257 = vmatpush1.bf16.msra.mxu0 %v1925
  %2258 = vmatprep.subr.bf16.mxu0 %v1928
  %2259 = vmatpush1.bf16.msra.mxu0 %v1927
  %2260 = vmatprep.subr.bf16.mxu0 %v1930
  %2261 = vmatpush1.bf16.msra.mxu0 %v1929
  %2262 = vmatprep.subr.bf16.mxu0 %v1932
  %2263 = vmatpush1.bf16.msra.mxu0 %v1931
  %2264 = vmatprep.subr.bf16.mxu0 0
  %2265 = vmatpush1.bf16.msra.mxu0 0
  %2266 = vmatprep.subr.bf16.mxu0 0
  %2267 = vmatpush1.bf16.msra.mxu0 0
  %2268 = vmatprep.subr.bf16.mxu0 0
  %2269 = vmatpush1.bf16.msra.mxu0 0
  %2270 = vmatprep.subr.bf16.mxu0 0
  %2271 = vmatpush1.bf16.msra.mxu0 0
  %2272 = vmatprep.subr.bf16.mxu0 0
  %2273 = vmatpush1.bf16.msra.mxu0 0
  %2274 = vmatprep.subr.bf16.mxu0 0
  %2275 = vmatpush1.bf16.msra.mxu0 0
  %2276 = vmatprep.subr.bf16.mxu0 0
  %2277 = vmatpush1.bf16.msra.mxu0 0
  %2278 = vmatprep.subr.bf16.mxu0 0
  %2279 = vmatpush1.bf16.msra.mxu0 0
  %2280 = vmatprep.mubr.bf16.mxu0 0
  %2281 = vmatmul.mubr.bf16.gmra.mrb[0].mxu0 %v2232
  %v2282 = vpop.f32.mrb[0].mxu0
  %v2283 = vadd.f32 %v2122, %v2282
  %v2284 = vpop.f32.mrb[0].mxu0
  %v2285 = vadd.f32 %v2124, %v2284
  %v2286 = vpop.f32.mrb[0].mxu0
  %v2287 = vadd.f32 %v2126, %v2286
  %v2288 = vpop.f32.mrb[0].mxu0
  %v2289 = vadd.f32 %v2128, %v2288
  %2290 = vmatprep.mubr.bf16.mxu0 0
  %2291 = vmatmul.mubr.bf16.gmra.mrb[0].mxu0 %v2233
  %v2292 = vpop.f32.mrb[0].mxu0
  %v2293 = vadd.f32 %v2132, %v2292
  %v2294 = vpop.f32.mrb[0].mxu0
  %v2295 = vadd.f32 %v2134, %v2294
  %v2296 = vpop.f32.mrb[0].mxu0
  %v2297 = vadd.f32 %v2136, %v2296
  %v2298 = vpop.f32.mrb[0].mxu0
  %v2299 = vadd.f32 %v2138, %v2298
  %2300 = vmatprep.mubr.bf16.mxu0 0
  %2301 = vmatmul.mubr.bf16.gmra.mrb[0].mxu0 %v2234
  %v2302 = vpop.f32.mrb[0].mxu0
  %v2303 = vadd.f32 %v2142, %v2302
  %v2304 = vpop.f32.mrb[0].mxu0
  %v2305 = vadd.f32 %v2144, %v2304
  %v2306 = vpop.f32.mrb[0].mxu0
  %v2307 = vadd.f32 %v2146, %v2306
  %v2308 = vpop.f32.mrb[0].mxu0
  %v2309 = vadd.f32 %v2148, %v2308
  %2310 = vmatprep.mubr.bf16.mxu0 0
  %2311 = vmatmul.mubr.bf16.gmra.mrb[0].mxu0 %v2235
  %v2312 = vpop.f32.mrb[0].mxu0
  %v2313 = vadd.f32 %v2152, %v2312
  %v2314 = vpop.f32.mrb[0].mxu0
  %v2315 = vadd.f32 %v2154, %v2314
  %v2316 = vpop.f32.mrb[0].mxu0
  %v2317 = vadd.f32 %v2156, %v2316
  %v2318 = vpop.f32.mrb[0].mxu0
  %v2319 = vadd.f32 %v2158, %v2318
  %2320 = vmatprep.mubr.bf16.mxu0 0
  %2321 = vmatmul.mubr.bf16.gmra.mrb[0].mxu0 %v2236
  %v2322 = vpop.f32.mrb[0].mxu0
  %v2323 = vadd.f32 %v2162, %v2322
  %v2324 = vpop.f32.mrb[0].mxu0
  %v2325 = vadd.f32 %v2164, %v2324
  %v2326 = vpop.f32.mrb[0].mxu0
  %v2327 = vadd.f32 %v2166, %v2326
  %v2328 = vpop.f32.mrb[0].mxu0
  %v2329 = vadd.f32 %v2168, %v2328
  %2330 = vmatprep.mubr.bf16.mxu0 0
  %2331 = vmatmul.mubr.bf16.gmra.mrb[0].mxu0 %v2237
  %v2332 = vpop.f32.mrb[0].mxu0
  %v2333 = vadd.f32 %v2172, %v2332
  %v2334 = vpop.f32.mrb[0].mxu0
  %v2335 = vadd.f32 %v2174, %v2334
  %v2336 = vpop.f32.mrb[0].mxu0
  %v2337 = vadd.f32 %v2176, %v2336
  %v2338 = vpop.f32.mrb[0].mxu0
  %v2339 = vadd.f32 %v2178, %v2338
  %2340 = vmatprep.mubr.bf16.mxu0 0
  %2341 = vmatmul.mubr.bf16.gmra.mrb[0].mxu0 %v2238
  %v2342 = vpop.f32.mrb[0].mxu0
  %v2343 = vadd.f32 %v2182, %v2342
  %v2344 = vpop.f32.mrb[0].mxu0
  %v2345 = vadd.f32 %v2184, %v2344
  %v2346 = vpop.f32.mrb[0].mxu0
  %v2347 = vadd.f32 %v2186, %v2346
  %v2348 = vpop.f32.mrb[0].mxu0
  %v2349 = vadd.f32 %v2188, %v2348
  %2350 = vmatprep.mubr.bf16.mxu0 0
  %2351 = vmatmul.mubr.bf16.gmra.mrb[0].mxu0 %v2239
  %v2352 = vpop.f32.mrb[0].mxu0
  %v2353 = vadd.f32 %v2192, %v2352
  %v2354 = vpop.f32.mrb[0].mxu0
  %v2355 = vadd.f32 %v2194, %v2354
  %v2356 = vpop.f32.mrb[0].mxu0
  %v2357 = vadd.f32 %v2196, %v2356
  %v2358 = vpop.f32.mrb[0].mxu0
  %v2359 = vadd.f32 %v2198, %v2358
  %2360 = vdwg.mxu0
  %s2361 = scalar_lea.vmem %s4, 128
  %v2362 = vld [vmem:[%s2361] sm:$0xf]
  %v2363 = vld [vmem:[%s2361 + $0x4] sm:$0xf]
  %v2364 = vld [vmem:[%s2361 + $0x8] sm:$0xf]
  %v2365 = vld [vmem:[%s2361 + $0xc] sm:$0xf]
  %v2366 = vld [vmem:[%s2361 + $0x10] sm:$0xf]
  %v2367 = vld [vmem:[%s2361 + $0x14] sm:$0xf]
  %v2368 = vld [vmem:[%s2361 + $0x18] sm:$0xf]
  %v2369 = vld [vmem:[%s2361 + $0x1c] sm:$0xf]
  %v2370 = vld [vmem:[%s2361 + $0x20] sm:$0xf]
  %v2371 = vld [vmem:[%s2361 + $0x24] sm:$0xf]
  %v2372 = vld [vmem:[%s2361 + $0x28] sm:$0xf]
  %v2373 = vld [vmem:[%s2361 + $0x2c] sm:$0xf]
  %v2374 = vld [vmem:[%s2361 + $0x30] sm:$0xf]
  %v2375 = vld [vmem:[%s2361 + $0x34] sm:$0xf]
  %v2376 = vld [vmem:[%s2361 + $0x38] sm:$0xf]
  %v2377 = vld [vmem:[%s2361 + $0x3c] sm:$0xf]
  %v2394 = vunpack.c.l.b16 %v2362
  %v2395 = vunpack.c.l.b16 %v2363
  %v2396 = vunpack.c.l.b16 %v2364
  %v2397 = vunpack.c.l.b16 %v2365
  %v2398 = vunpack.c.l.b16 %v2366
  %v2399 = vunpack.c.l.b16 %v2367
  %v2400 = vunpack.c.l.b16 %v2368
  %v2401 = vunpack.c.l.b16 %v2369
  %v2402 = vunpack.c.l.b16 %v2370
  %v2403 = vunpack.c.l.b16 %v2371
  %v2404 = vunpack.c.l.b16 %v2372
  %v2405 = vunpack.c.l.b16 %v2373
  %v2406 = vunpack.c.l.b16 %v2374
  %v2407 = vunpack.c.l.b16 %v2375
  %v2408 = vunpack.c.l.b16 %v2376
  %v2409 = vunpack.c.l.b16 %v2377
  %v2410 = vpack.c.b16 %v2395, %v2394
  %v2411 = vpack.c.b16 %v2397, %v2396
  %v2412 = vpack.c.b16 %v2399, %v2398
  %v2413 = vpack.c.b16 %v2401, %v2400
  %v2414 = vpack.c.b16 %v2403, %v2402
  %v2415 = vpack.c.b16 %v2405, %v2404
  %v2416 = vpack.c.b16 %v2407, %v2406
  %v2417 = vpack.c.b16 %v2409, %v2408
  %2426 = vrot.lane.b32.xlu0 %v1917, 126
  %v2427 = vpop.permute.xlu0 %2426
  %2428 = vrot.lane.b32.xlu0 %v1918, 126
  %v2429 = vpop.permute.xlu0 %2428
  %2430 = vrot.lane.b32.xlu0 %v1919, 126
  %v2431 = vpop.permute.xlu0 %2430
  %2432 = vrot.lane.b32.xlu0 %v1920, 126
  %v2433 = vpop.permute.xlu0 %2432
  %2434 = vrot.lane.b32.xlu0 %v1921, 126
  %v2435 = vpop.permute.xlu0 %2434
  %2436 = vrot.lane.b32.xlu0 %v1922, 126
  %v2437 = vpop.permute.xlu0 %2436
  %2438 = vrot.lane.b32.xlu0 %v1923, 126
  %v2439 = vpop.permute.xlu0 %2438
  %2440 = vrot.lane.b32.xlu0 %v1924, 126
  %v2441 = vpop.permute.xlu0 %2440
  %2442 = vrot.lane.b32.xlu0 %v1925, 126
  %v2443 = vpop.permute.xlu0 %2442
  %2444 = vrot.lane.b32.xlu0 %v1926, 126
  %v2445 = vpop.permute.xlu0 %2444
  %2446 = vrot.lane.b32.xlu0 %v1927, 126
  %v2447 = vpop.permute.xlu0 %2446
  %2448 = vrot.lane.b32.xlu0 %v1928, 126
  %v2449 = vpop.permute.xlu0 %2448
  %2450 = vrot.lane.b32.xlu0 %v1929, 126
  %v2451 = vpop.permute.xlu0 %2450
  %2452 = vrot.lane.b32.xlu0 %v1930, 126
  %v2453 = vpop.permute.xlu0 %2452
  %2454 = vrot.lane.b32.xlu0 %v1931, 126
  %v2455 = vpop.permute.xlu0 %2454
  %2456 = vrot.lane.b32.xlu0 %v1932, 126
  %v2457 = vpop.permute.xlu0 %2456
  %vm2458 = vcmask 1031168
  %v2459 = vsel %vm2458, %v2427, %v2429
  %v2460 = vsel %vm2458, %v2431, %v2433
  %v2461 = vsel %vm2458, %v2435, %v2437
  %v2462 = vsel %vm2458, %v2439, %v2441
  %v2463 = vsel %vm2458, %v2443, %v2445
  %v2464 = vsel %vm2458, %v2447, %v2449
  %v2465 = vsel %vm2458, %v2451, %v2453
  %v2466 = vsel %vm2458, %v2455, %v2457
  %2483 = vmatprep.subr.bf16.mxu0 %v2429
  %2484 = vmatpush1.bf16.msra.mxu0 %v2459
  %2485 = vmatprep.subr.bf16.mxu0 %v2433
  %2486 = vmatpush1.bf16.msra.mxu0 %v2460
  %2487 = vmatprep.subr.bf16.mxu0 %v2437
  %2488 = vmatpush1.bf16.msra.mxu0 %v2461
  %2489 = vmatprep.subr.bf16.mxu0 %v2441
  %2490 = vmatpush1.bf16.msra.mxu0 %v2462
  %2491 = vmatprep.subr.bf16.mxu0 %v2445
  %2492 = vmatpush1.bf16.msra.mxu0 %v2463
  %2493 = vmatprep.subr.bf16.mxu0 %v2449
  %2494 = vmatpush1.bf16.msra.mxu0 %v2464
  %2495 = vmatprep.subr.bf16.mxu0 %v2453
  %2496 = vmatpush1.bf16.msra.mxu0 %v2465
  %2497 = vmatprep.subr.bf16.mxu0 %v2457
  %2498 = vmatpush1.bf16.msra.mxu0 %v2466
  %2499 = vmatprep.subr.bf16.mxu0 0
  %2500 = vmatpush1.bf16.msra.mxu0 0
  %2501 = vmatprep.subr.bf16.mxu0 0
  %2502 = vmatpush1.bf16.msra.mxu0 0
  %2503 = vmatprep.subr.bf16.mxu0 0
  %2504 = vmatpush1.bf16.msra.mxu0 0
  %2505 = vmatprep.subr.bf16.mxu0 0
  %2506 = vmatpush1.bf16.msra.mxu0 0
  %2507 = vmatprep.subr.bf16.mxu0 0
  %2508 = vmatpush1.bf16.msra.mxu0 0
  %2509 = vmatprep.subr.bf16.mxu0 0
  %2510 = vmatpush1.bf16.msra.mxu0 0
  %2511 = vmatprep.subr.bf16.mxu0 0
  %2512 = vmatpush1.bf16.msra.mxu0 0
  %2513 = vmatprep.subr.bf16.mxu0 0
  %2514 = vmatpush1.bf16.msra.mxu0 0
  %2515 = vmatprep.mubr.bf16.mxu0 0
  %2516 = vmatmul.mubr.bf16.gmra.mrb[0].mxu0 %v2410
  %v2517 = vpop.f32.mrb[0].mxu0
  %v2518 = vadd.f32 0.0, %v2517
  %v2519 = vpop.f32.mrb[0].mxu0
  %v2520 = vadd.f32 0.0, %v2519
  %v2521 = vpop.f32.mrb[0].mxu0
  %v2522 = vadd.f32 0.0, %v2521
  %v2523 = vpop.f32.mrb[0].mxu0
  %v2524 = vadd.f32 0.0, %v2523
  %2525 = vmatprep.mubr.bf16.mxu0 0
  %2526 = vmatmul.mubr.bf16.gmra.mrb[0].mxu0 %v2411
  %v2527 = vpop.f32.mrb[0].mxu0
  %v2528 = vadd.f32 0.0, %v2527
  %v2529 = vpop.f32.mrb[0].mxu0
  %v2530 = vadd.f32 0.0, %v2529
  %v2531 = vpop.f32.mrb[0].mxu0
  %v2532 = vadd.f32 0.0, %v2531
  %v2533 = vpop.f32.mrb[0].mxu0
  %v2534 = vadd.f32 0.0, %v2533
  %2535 = vmatprep.mubr.bf16.mxu0 0
  %2536 = vmatmul.mubr.bf16.gmra.mrb[0].mxu0 %v2412
  %v2537 = vpop.f32.mrb[0].mxu0
  %v2538 = vadd.f32 0.0, %v2537
  %v2539 = vpop.f32.mrb[0].mxu0
  %v2540 = vadd.f32 0.0, %v2539
  %v2541 = vpop.f32.mrb[0].mxu0
  %v2542 = vadd.f32 0.0, %v2541
  %v2543 = vpop.f32.mrb[0].mxu0
  %v2544 = vadd.f32 0.0, %v2543
  %2545 = vmatprep.mubr.bf16.mxu0 0
  %2546 = vmatmul.mubr.bf16.gmra.mrb[0].mxu0 %v2413
  %v2547 = vpop.f32.mrb[0].mxu0
  %v2548 = vadd.f32 0.0, %v2547
  %v2549 = vpop.f32.mrb[0].mxu0
  %v2550 = vadd.f32 0.0, %v2549
  %v2551 = vpop.f32.mrb[0].mxu0
  %v2552 = vadd.f32 0.0, %v2551
  %v2553 = vpop.f32.mrb[0].mxu0
  %v2554 = vadd.f32 0.0, %v2553
  %2555 = vmatprep.mubr.bf16.mxu0 0
  %2556 = vmatmul.mubr.bf16.gmra.mrb[0].mxu0 %v2414
  %v2557 = vpop.f32.mrb[0].mxu0
  %v2558 = vadd.f32 0.0, %v2557
  %v2559 = vpop.f32.mrb[0].mxu0
  %v2560 = vadd.f32 0.0, %v2559
  %v2561 = vpop.f32.mrb[0].mxu0
  %v2562 = vadd.f32 0.0, %v2561
  %v2563 = vpop.f32.mrb[0].mxu0
  %v2564 = vadd.f32 0.0, %v2563
  %2565 = vmatprep.mubr.bf16.mxu0 0
  %2566 = vmatmul.mubr.bf16.gmra.mrb[0].mxu0 %v2415
  %v2567 = vpop.f32.mrb[0].mxu0
  %v2568 = vadd.f32 0.0, %v2567
  %v2569 = vpop.f32.mrb[0].mxu0
  %v2570 = vadd.f32 0.0, %v2569
  %v2571 = vpop.f32.mrb[0].mxu0
  %v2572 = vadd.f32 0.0, %v2571
  %v2573 = vpop.f32.mrb[0].mxu0
  %v2574 = vadd.f32 0.0, %v2573
  %2575 = vmatprep.mubr.bf16.mxu0 0
  %2576 = vmatmul.mubr.bf16.gmra.mrb[0].mxu0 %v2416
  %v2577 = vpop.f32.mrb[0].mxu0
  %v2578 = vadd.f32 0.0, %v2577
  %v2579 = vpop.f32.mrb[0].mxu0
  %v2580 = vadd.f32 0.0, %v2579
  %v2581 = vpop.f32.mrb[0].mxu0
  %v2582 = vadd.f32 0.0, %v2581
  %v2583 = vpop.f32.mrb[0].mxu0
  %v2584 = vadd.f32 0.0, %v2583
  %2585 = vmatprep.mubr.bf16.mxu0 0
  %2586 = vmatmul.mubr.bf16.gmra.mrb[0].mxu0 %v2417
  %v2587 = vpop.f32.mrb[0].mxu0
  %v2588 = vadd.f32 0.0, %v2587
  %v2589 = vpop.f32.mrb[0].mxu0
  %v2590 = vadd.f32 0.0, %v2589
  %v2591 = vpop.f32.mrb[0].mxu0
  %v2592 = vadd.f32 0.0, %v2591
  %v2593 = vpop.f32.mrb[0].mxu0
  %v2594 = vadd.f32 0.0, %v2593
  %2595 = vdwg.mxu0
  %v2596 = vadd.f32 %v2283, %v2518
  %v2597 = vadd.f32 %v2285, %v2520
  %v2598 = vadd.f32 %v2287, %v2522
  %v2599 = vadd.f32 %v2289, %v2524
  %v2600 = vadd.f32 %v2293, %v2528
  %v2601 = vadd.f32 %v2295, %v2530
  %v2602 = vadd.f32 %v2297, %v2532
  %v2603 = vadd.f32 %v2299, %v2534
  %v2604 = vadd.f32 %v2303, %v2538
  %v2605 = vadd.f32 %v2305, %v2540
  %v2606 = vadd.f32 %v2307, %v2542
  %v2607 = vadd.f32 %v2309, %v2544
  %v2608 = vadd.f32 %v2313, %v2548
  %v2609 = vadd.f32 %v2315, %v2550
  %v2610 = vadd.f32 %v2317, %v2552
  %v2611 = vadd.f32 %v2319, %v2554
  %v2612 = vadd.f32 %v2323, %v2558
  %v2613 = vadd.f32 %v2325, %v2560
  %v2614 = vadd.f32 %v2327, %v2562
  %v2615 = vadd.f32 %v2329, %v2564
  %v2616 = vadd.f32 %v2333, %v2568
  %v2617 = vadd.f32 %v2335, %v2570
  %v2618 = vadd.f32 %v2337, %v2572
  %v2619 = vadd.f32 %v2339, %v2574
  %v2620 = vadd.f32 %v2343, %v2578
  %v2621 = vadd.f32 %v2345, %v2580
  %v2622 = vadd.f32 %v2347, %v2582
  %v2623 = vadd.f32 %v2349, %v2584
  %v2624 = vadd.f32 %v2353, %v2588
  %v2625 = vadd.f32 %v2355, %v2590
  %v2626 = vadd.f32 %v2357, %v2592
  %v2627 = vadd.f32 %v2359, %v2594
  %s2628 = scalar_lea.vmem %s4, 192
  %v2629 = vld [vmem:[%s2628] sm:$0xf]
  %v2630 = vld [vmem:[%s2628 + $0x4] sm:$0xf]
  %v2631 = vld [vmem:[%s2628 + $0x8] sm:$0xf]
  %v2632 = vld [vmem:[%s2628 + $0xc] sm:$0xf]
  %v2633 = vld [vmem:[%s2628 + $0x10] sm:$0xf]
  %v2634 = vld [vmem:[%s2628 + $0x14] sm:$0xf]
  %v2635 = vld [vmem:[%s2628 + $0x18] sm:$0xf]
  %v2636 = vld [vmem:[%s2628 + $0x1c] sm:$0xf]
  %v2637 = vld [vmem:[%s2628 + $0x20] sm:$0xf]
  %v2638 = vld [vmem:[%s2628 + $0x24] sm:$0xf]
  %v2639 = vld [vmem:[%s2628 + $0x28] sm:$0xf]
  %v2640 = vld [vmem:[%s2628 + $0x2c] sm:$0xf]
  %v2641 = vld [vmem:[%s2628 + $0x30] sm:$0xf]
  %v2642 = vld [vmem:[%s2628 + $0x34] sm:$0xf]
  %v2643 = vld [vmem:[%s2628 + $0x38] sm:$0xf]
  %v2644 = vld [vmem:[%s2628 + $0x3c] sm:$0xf]
  %v2661 = vunpack.c.l.b16 %v2629
  %v2662 = vunpack.c.l.b16 %v2630
  %v2663 = vunpack.c.l.b16 %v2631
  %v2664 = vunpack.c.l.b16 %v2632
  %v2665 = vunpack.c.l.b16 %v2633
  %v2666 = vunpack.c.l.b16 %v2634
  %v2667 = vunpack.c.l.b16 %v2635
  %v2668 = vunpack.c.l.b16 %v2636
  %v2669 = vunpack.c.l.b16 %v2637
  %v2670 = vunpack.c.l.b16 %v2638
  %v2671 = vunpack.c.l.b16 %v2639
  %v2672 = vunpack.c.l.b16 %v2640
  %v2673 = vunpack.c.l.b16 %v2641
  %v2674 = vunpack.c.l.b16 %v2642
  %v2675 = vunpack.c.l.b16 %v2643
  %v2676 = vunpack.c.l.b16 %v2644
  %v2677 = vpack.c.b16 %v2662, %v2661
  %v2678 = vpack.c.b16 %v2664, %v2663
  %v2679 = vpack.c.b16 %v2666, %v2665
  %v2680 = vpack.c.b16 %v2668, %v2667
  %v2681 = vpack.c.b16 %v2670, %v2669
  %v2682 = vpack.c.b16 %v2672, %v2671
  %v2683 = vpack.c.b16 %v2674, %v2673
  %v2684 = vpack.c.b16 %v2676, %v2675
  %2693 = vrot.lane.b32.xlu0 %v1917, 125
  %v2694 = vpop.permute.xlu0 %2693
  %2695 = vrot.lane.b32.xlu0 %v1918, 125
  %v2696 = vpop.permute.xlu0 %2695
  %2697 = vrot.lane.b32.xlu0 %v1919, 125
  %v2698 = vpop.permute.xlu0 %2697
  %2699 = vrot.lane.b32.xlu0 %v1920, 125
  %v2700 = vpop.permute.xlu0 %2699
  %2701 = vrot.lane.b32.xlu0 %v1921, 125
  %v2702 = vpop.permute.xlu0 %2701
  %2703 = vrot.lane.b32.xlu0 %v1922, 125
  %v2704 = vpop.permute.xlu0 %2703
  %2705 = vrot.lane.b32.xlu0 %v1923, 125
  %v2706 = vpop.permute.xlu0 %2705
  %2707 = vrot.lane.b32.xlu0 %v1924, 125
  %v2708 = vpop.permute.xlu0 %2707
  %2709 = vrot.lane.b32.xlu0 %v1925, 125
  %v2710 = vpop.permute.xlu0 %2709
  %2711 = vrot.lane.b32.xlu0 %v1926, 125
  %v2712 = vpop.permute.xlu0 %2711
  %2713 = vrot.lane.b32.xlu0 %v1927, 125
  %v2714 = vpop.permute.xlu0 %2713
  %2715 = vrot.lane.b32.xlu0 %v1928, 125
  %v2716 = vpop.permute.xlu0 %2715
  %2717 = vrot.lane.b32.xlu0 %v1929, 125
  %v2718 = vpop.permute.xlu0 %2717
  %2719 = vrot.lane.b32.xlu0 %v1930, 125
  %v2720 = vpop.permute.xlu0 %2719
  %2721 = vrot.lane.b32.xlu0 %v1931, 125
  %v2722 = vpop.permute.xlu0 %2721
  %2723 = vrot.lane.b32.xlu0 %v1932, 125
  %v2724 = vpop.permute.xlu0 %2723
  %vm2725 = vcmask 1022976
  %v2726 = vsel %vm2725, %v2694, %v2696
  %v2727 = vsel %vm2725, %v2698, %v2700
  %v2728 = vsel %vm2725, %v2702, %v2704
  %v2729 = vsel %vm2725, %v2706, %v2708
  %v2730 = vsel %vm2725, %v2710, %v2712
  %v2731 = vsel %vm2725, %v2714, %v2716
  %v2732 = vsel %vm2725, %v2718, %v2720
  %v2733 = vsel %vm2725, %v2722, %v2724
  %2750 = vmatprep.subr.bf16.mxu0 %v2696
  %2751 = vmatpush1.bf16.msra.mxu0 %v2726
  %2752 = vmatprep.subr.bf16.mxu0 %v2700
  %2753 = vmatpush1.bf16.msra.mxu0 %v2727
  %2754 = vmatprep.subr.bf16.mxu0 %v2704
  %2755 = vmatpush1.bf16.msra.mxu0 %v2728
  %2756 = vmatprep.subr.bf16.mxu0 %v2708
  %2757 = vmatpush1.bf16.msra.mxu0 %v2729
  %2758 = vmatprep.subr.bf16.mxu0 %v2712
  %2759 = vmatpush1.bf16.msra.mxu0 %v2730
  %2760 = vmatprep.subr.bf16.mxu0 %v2716
  %2761 = vmatpush1.bf16.msra.mxu0 %v2731
  %2762 = vmatprep.subr.bf16.mxu0 %v2720
  %2763 = vmatpush1.bf16.msra.mxu0 %v2732
  %2764 = vmatprep.subr.bf16.mxu0 %v2724
  %2765 = vmatpush1.bf16.msra.mxu0 %v2733
  %2766 = vmatprep.subr.bf16.mxu0 0
  %2767 = vmatpush1.bf16.msra.mxu0 0
  %2768 = vmatprep.subr.bf16.mxu0 0
  %2769 = vmatpush1.bf16.msra.mxu0 0
  %2770 = vmatprep.subr.bf16.mxu0 0
  %2771 = vmatpush1.bf16.msra.mxu0 0
  %2772 = vmatprep.subr.bf16.mxu0 0
  %2773 = vmatpush1.bf16.msra.mxu0 0
  %2774 = vmatprep.subr.bf16.mxu0 0
  %2775 = vmatpush1.bf16.msra.mxu0 0
  %2776 = vmatprep.subr.bf16.mxu0 0
  %2777 = vmatpush1.bf16.msra.mxu0 0
  %2778 = vmatprep.subr.bf16.mxu0 0
  %2779 = vmatpush1.bf16.msra.mxu0 0
  %2780 = vmatprep.subr.bf16.mxu0 0
  %2781 = vmatpush1.bf16.msra.mxu0 0
  %2782 = vmatprep.mubr.bf16.mxu0 0
  %2783 = vmatmul.mubr.bf16.gmra.mrb[0].mxu0 %v2677
  %v2784 = vpop.f32.mrb[0].mxu0
  %v2785 = vadd.f32 0.0, %v2784
  %v2786 = vpop.f32.mrb[0].mxu0
  %v2787 = vadd.f32 0.0, %v2786
  %v2788 = vpop.f32.mrb[0].mxu0
  %v2789 = vadd.f32 0.0, %v2788
  %v2790 = vpop.f32.mrb[0].mxu0
  %v2791 = vadd.f32 0.0, %v2790
  %2792 = vmatprep.mubr.bf16.mxu0 0
  %2793 = vmatmul.mubr.bf16.gmra.mrb[0].mxu0 %v2678
  %v2794 = vpop.f32.mrb[0].mxu0
  %v2795 = vadd.f32 0.0, %v2794
  %v2796 = vpop.f32.mrb[0].mxu0
  %v2797 = vadd.f32 0.0, %v2796
  %v2798 = vpop.f32.mrb[0].mxu0
  %v2799 = vadd.f32 0.0, %v2798
  %v2800 = vpop.f32.mrb[0].mxu0
  %v2801 = vadd.f32 0.0, %v2800
  %2802 = vmatprep.mubr.bf16.mxu0 0
  %2803 = vmatmul.mubr.bf16.gmra.mrb[0].mxu0 %v2679
  %v2804 = vpop.f32.mrb[0].mxu0
  %v2805 = vadd.f32 0.0, %v2804
  %v2806 = vpop.f32.mrb[0].mxu0
  %v2807 = vadd.f32 0.0, %v2806
  %v2808 = vpop.f32.mrb[0].mxu0
  %v2809 = vadd.f32 0.0, %v2808
  %v2810 = vpop.f32.mrb[0].mxu0
  %v2811 = vadd.f32 0.0, %v2810
  %2812 = vmatprep.mubr.bf16.mxu0 0
  %2813 = vmatmul.mubr.bf16.gmra.mrb[0].mxu0 %v2680
  %v2814 = vpop.f32.mrb[0].mxu0
  %v2815 = vadd.f32 0.0, %v2814
  %v2816 = vpop.f32.mrb[0].mxu0
  %v2817 = vadd.f32 0.0, %v2816
  %v2818 = vpop.f32.mrb[0].mxu0
  %v2819 = vadd.f32 0.0, %v2818
  %v2820 = vpop.f32.mrb[0].mxu0
  %v2821 = vadd.f32 0.0, %v2820
  %2822 = vmatprep.mubr.bf16.mxu0 0
  %2823 = vmatmul.mubr.bf16.gmra.mrb[0].mxu0 %v2681
  %v2824 = vpop.f32.mrb[0].mxu0
  %v2825 = vadd.f32 0.0, %v2824
  %v2826 = vpop.f32.mrb[0].mxu0
  %v2827 = vadd.f32 0.0, %v2826
  %v2828 = vpop.f32.mrb[0].mxu0
  %v2829 = vadd.f32 0.0, %v2828
  %v2830 = vpop.f32.mrb[0].mxu0
  %v2831 = vadd.f32 0.0, %v2830
  %2832 = vmatprep.mubr.bf16.mxu0 0
  %2833 = vmatmul.mubr.bf16.gmra.mrb[0].mxu0 %v2682
  %v2834 = vpop.f32.mrb[0].mxu0
  %v2835 = vadd.f32 0.0, %v2834
  %v2836 = vpop.f32.mrb[0].mxu0
  %v2837 = vadd.f32 0.0, %v2836
  %v2838 = vpop.f32.mrb[0].mxu0
  %v2839 = vadd.f32 0.0, %v2838
  %v2840 = vpop.f32.mrb[0].mxu0
  %v2841 = vadd.f32 0.0, %v2840
  %2842 = vmatprep.mubr.bf16.mxu0 0
  %2843 = vmatmul.mubr.bf16.gmra.mrb[0].mxu0 %v2683
  %v2844 = vpop.f32.mrb[0].mxu0
  %v2845 = vadd.f32 0.0, %v2844
  %v2846 = vpop.f32.mrb[0].mxu0
  %v2847 = vadd.f32 0.0, %v2846
  %v2848 = vpop.f32.mrb[0].mxu0
  %v2849 = vadd.f32 0.0, %v2848
  %v2850 = vpop.f32.mrb[0].mxu0
  %v2851 = vadd.f32 0.0, %v2850
  %2852 = vmatprep.mubr.bf16.mxu0 0
  %2853 = vmatmul.mubr.bf16.gmra.mrb[0].mxu0 %v2684
  %v2854 = vpop.f32.mrb[0].mxu0
  %v2855 = vadd.f32 0.0, %v2854
  %v2856 = vpop.f32.mrb[0].mxu0
  %v2857 = vadd.f32 0.0, %v2856
  %v2858 = vpop.f32.mrb[0].mxu0
  %v2859 = vadd.f32 0.0, %v2858
  %v2860 = vpop.f32.mrb[0].mxu0
  %v2861 = vadd.f32 0.0, %v2860
  %2862 = vdwg.mxu0
  %v2863 = vadd.f32 %v2596, %v2785
  %v2864 = vadd.f32 %v2597, %v2787
  %v2865 = vadd.f32 %v2598, %v2789
  %v2866 = vadd.f32 %v2599, %v2791
  %v2867 = vadd.f32 %v2600, %v2795
  %v2868 = vadd.f32 %v2601, %v2797
  %v2869 = vadd.f32 %v2602, %v2799
  %v2870 = vadd.f32 %v2603, %v2801
  %v2871 = vadd.f32 %v2604, %v2805
  %v2872 = vadd.f32 %v2605, %v2807
  %v2873 = vadd.f32 %v2606, %v2809
  %v2874 = vadd.f32 %v2607, %v2811
  %v2875 = vadd.f32 %v2608, %v2815
  %v2876 = vadd.f32 %v2609, %v2817
  %v2877 = vadd.f32 %v2610, %v2819
  %v2878 = vadd.f32 %v2611, %v2821
  %v2879 = vadd.f32 %v2612, %v2825
  %v2880 = vadd.f32 %v2613, %v2827
  %v2881 = vadd.f32 %v2614, %v2829
  %v2882 = vadd.f32 %v2615, %v2831
  %v2883 = vadd.f32 %v2616, %v2835
  %v2884 = vadd.f32 %v2617, %v2837
  %v2885 = vadd.f32 %v2618, %v2839
  %v2886 = vadd.f32 %v2619, %v2841
  %v2887 = vadd.f32 %v2620, %v2845
  %v2888 = vadd.f32 %v2621, %v2847
  %v2889 = vadd.f32 %v2622, %v2849
  %v2890 = vadd.f32 %v2623, %v2851
  %v2891 = vadd.f32 %v2624, %v2855
  %v2892 = vadd.f32 %v2625, %v2857
  %v2893 = vadd.f32 %v2626, %v2859
  %v2894 = vadd.f32 %v2627, %v2861
  %s2895 = scalar_lea.vmem %s4, 256
  %v2896 = vld [vmem:[%s2895] sm:$0xf]
  %v2897 = vld [vmem:[%s2895 + $0x4] sm:$0xf]
  %v2898 = vld [vmem:[%s2895 + $0x8] sm:$0xf]
  %v2899 = vld [vmem:[%s2895 + $0xc] sm:$0xf]
  %v2900 = vld [vmem:[%s2895 + $0x10] sm:$0xf]
  %v2901 = vld [vmem:[%s2895 + $0x14] sm:$0xf]
  %v2902 = vld [vmem:[%s2895 + $0x18] sm:$0xf]
  %v2903 = vld [vmem:[%s2895 + $0x1c] sm:$0xf]
  %v2904 = vld [vmem:[%s2895 + $0x20] sm:$0xf]
  %v2905 = vld [vmem:[%s2895 + $0x24] sm:$0xf]
  %v2906 = vld [vmem:[%s2895 + $0x28] sm:$0xf]
  %v2907 = vld [vmem:[%s2895 + $0x2c] sm:$0xf]
  %v2908 = vld [vmem:[%s2895 + $0x30] sm:$0xf]
  %v2909 = vld [vmem:[%s2895 + $0x34] sm:$0xf]
  %v2910 = vld [vmem:[%s2895 + $0x38] sm:$0xf]
  %v2911 = vld [vmem:[%s2895 + $0x3c] sm:$0xf]
  %v2928 = vunpack.c.l.b16 %v2896
  %v2929 = vunpack.c.l.b16 %v2897
  %v2930 = vunpack.c.l.b16 %v2898
  %v2931 = vunpack.c.l.b16 %v2899
  %v2932 = vunpack.c.l.b16 %v2900
  %v2933 = vunpack.c.l.b16 %v2901
  %v2934 = vunpack.c.l.b16 %v2902
  %v2935 = vunpack.c.l.b16 %v2903
  %v2936 = vunpack.c.l.b16 %v2904
  %v2937 = vunpack.c.l.b16 %v2905
  %v2938 = vunpack.c.l.b16 %v2906
  %v2939 = vunpack.c.l.b16 %v2907
  %v2940 = vunpack.c.l.b16 %v2908
  %v2941 = vunpack.c.l.b16 %v2909
  %v2942 = vunpack.c.l.b16 %v2910
  %v2943 = vunpack.c.l.b16 %v2911
  %v2944 = vpack.c.b16 %v2929, %v2928
  %v2945 = vpack.c.b16 %v2931, %v2930
  %v2946 = vpack.c.b16 %v2933, %v2932
  %v2947 = vpack.c.b16 %v2935, %v2934
  %v2948 = vpack.c.b16 %v2937, %v2936
  %v2949 = vpack.c.b16 %v2939, %v2938
  %v2950 = vpack.c.b16 %v2941, %v2940
  %v2951 = vpack.c.b16 %v2943, %v2942
  %2960 = vrot.lane.b32.xlu0 %v1917, 124
  %v2961 = vpop.permute.xlu0 %2960
  %2962 = vrot.lane.b32.xlu0 %v1918, 124
  %v2963 = vpop.permute.xlu0 %2962
  %2964 = vrot.lane.b32.xlu0 %v1919, 124
  %v2965 = vpop.permute.xlu0 %2964
  %2966 = vrot.lane.b32.xlu0 %v1920, 124
  %v2967 = vpop.permute.xlu0 %2966
  %2968 = vrot.lane.b32.xlu0 %v1921, 124
  %v2969 = vpop.permute.xlu0 %2968
  %2970 = vrot.lane.b32.xlu0 %v1922, 124
  %v2971 = vpop.permute.xlu0 %2970
  %2972 = vrot.lane.b32.xlu0 %v1923, 124
  %v2973 = vpop.permute.xlu0 %2972
  %2974 = vrot.lane.b32.xlu0 %v1924, 124
  %v2975 = vpop.permute.xlu0 %2974
  %2976 = vrot.lane.b32.xlu0 %v1925, 124
  %v2977 = vpop.permute.xlu0 %2976
  %2978 = vrot.lane.b32.xlu0 %v1926, 124
  %v2979 = vpop.permute.xlu0 %2978
  %2980 = vrot.lane.b32.xlu0 %v1927, 124
  %v2981 = vpop.permute.xlu0 %2980
  %2982 = vrot.lane.b32.xlu0 %v1928, 124
  %v2983 = vpop.permute.xlu0 %2982
  %2984 = vrot.lane.b32.xlu0 %v1929, 124
  %v2985 = vpop.permute.xlu0 %2984
  %2986 = vrot.lane.b32.xlu0 %v1930, 124
  %v2987 = vpop.permute.xlu0 %2986
  %2988 = vrot.lane.b32.xlu0 %v1931, 124
  %v2989 = vpop.permute.xlu0 %2988
  %2990 = vrot.lane.b32.xlu0 %v1932, 124
  %v2991 = vpop.permute.xlu0 %2990
  %vm2992 = vcmask 1014784
  %v2993 = vsel %vm2992, %v2961, %v2963
  %v2994 = vsel %vm2992, %v2965, %v2967
  %v2995 = vsel %vm2992, %v2969, %v2971
  %v2996 = vsel %vm2992, %v2973, %v2975
  %v2997 = vsel %vm2992, %v2977, %v2979
  %v2998 = vsel %vm2992, %v2981, %v2983
  %v2999 = vsel %vm2992, %v2985, %v2987
  %v3000 = vsel %vm2992, %v2989, %v2991
  %3017 = vmatprep.subr.bf16.mxu0 %v2963
  %3018 = vmatpush1.bf16.msra.mxu0 %v2993
  %3019 = vmatprep.subr.bf16.mxu0 %v2967
  %3020 = vmatpush1.bf16.msra.mxu0 %v2994
  %3021 = vmatprep.subr.bf16.mxu0 %v2971
  %3022 = vmatpush1.bf16.msra.mxu0 %v2995
  %3023 = vmatprep.subr.bf16.mxu0 %v2975
  %3024 = vmatpush1.bf16.msra.mxu0 %v2996
  %3025 = vmatprep.subr.bf16.mxu0 %v2979
  %3026 = vmatpush1.bf16.msra.mxu0 %v2997
  %3027 = vmatprep.subr.bf16.mxu0 %v2983
  %3028 = vmatpush1.bf16.msra.mxu0 %v2998
  %3029 = vmatprep.subr.bf16.mxu0 %v2987
  %3030 = vmatpush1.bf16.msra.mxu0 %v2999
  %3031 = vmatprep.subr.bf16.mxu0 %v2991
  %3032 = vmatpush1.bf16.msra.mxu0 %v3000
  %3033 = vmatprep.subr.bf16.mxu0 0
  %3034 = vmatpush1.bf16.msra.mxu0 0
  %3035 = vmatprep.subr.bf16.mxu0 0
  %3036 = vmatpush1.bf16.msra.mxu0 0
  %3037 = vmatprep.subr.bf16.mxu0 0
  %3038 = vmatpush1.bf16.msra.mxu0 0
  %3039 = vmatprep.subr.bf16.mxu0 0
  %3040 = vmatpush1.bf16.msra.mxu0 0
  %3041 = vmatprep.subr.bf16.mxu0 0
  %3042 = vmatpush1.bf16.msra.mxu0 0
  %3043 = vmatprep.subr.bf16.mxu0 0
  %3044 = vmatpush1.bf16.msra.mxu0 0
  %3045 = vmatprep.subr.bf16.mxu0 0
  %3046 = vmatpush1.bf16.msra.mxu0 0
  %3047 = vmatprep.subr.bf16.mxu0 0
  %3048 = vmatpush1.bf16.msra.mxu0 0
  %3049 = vmatprep.mubr.bf16.mxu0 0
  %3050 = vmatmul.mubr.bf16.gmra.mrb[0].mxu0 %v2944
  %v3051 = vpop.f32.mrb[0].mxu0
  %v3052 = vadd.f32 0.0, %v3051
  %v3053 = vpop.f32.mrb[0].mxu0
  %v3054 = vadd.f32 0.0, %v3053
  %v3055 = vpop.f32.mrb[0].mxu0
  %v3056 = vadd.f32 0.0, %v3055
  %v3057 = vpop.f32.mrb[0].mxu0
  %v3058 = vadd.f32 0.0, %v3057
  %3059 = vmatprep.mubr.bf16.mxu0 0
  %3060 = vmatmul.mubr.bf16.gmra.mrb[0].mxu0 %v2945
  %v3061 = vpop.f32.mrb[0].mxu0
  %v3062 = vadd.f32 0.0, %v3061
  %v3063 = vpop.f32.mrb[0].mxu0
  %v3064 = vadd.f32 0.0, %v3063
  %v3065 = vpop.f32.mrb[0].mxu0
  %v3066 = vadd.f32 0.0, %v3065
  %v3067 = vpop.f32.mrb[0].mxu0
  %v3068 = vadd.f32 0.0, %v3067
  %3069 = vmatprep.mubr.bf16.mxu0 0
  %3070 = vmatmul.mubr.bf16.gmra.mrb[0].mxu0 %v2946
  %v3071 = vpop.f32.mrb[0].mxu0
  %v3072 = vadd.f32 0.0, %v3071
  %v3073 = vpop.f32.mrb[0].mxu0
  %v3074 = vadd.f32 0.0, %v3073
  %v3075 = vpop.f32.mrb[0].mxu0
  %v3076 = vadd.f32 0.0, %v3075
  %v3077 = vpop.f32.mrb[0].mxu0
  %v3078 = vadd.f32 0.0, %v3077
  %3079 = vmatprep.mubr.bf16.mxu0 0
  %3080 = vmatmul.mubr.bf16.gmra.mrb[0].mxu0 %v2947
  %v3081 = vpop.f32.mrb[0].mxu0
  %v3082 = vadd.f32 0.0, %v3081
  %v3083 = vpop.f32.mrb[0].mxu0
  %v3084 = vadd.f32 0.0, %v3083
  %v3085 = vpop.f32.mrb[0].mxu0
  %v3086 = vadd.f32 0.0, %v3085
  %v3087 = vpop.f32.mrb[0].mxu0
  %v3088 = vadd.f32 0.0, %v3087
  %3089 = vmatprep.mubr.bf16.mxu0 0
  %3090 = vmatmul.mubr.bf16.gmra.mrb[0].mxu0 %v2948
  %v3091 = vpop.f32.mrb[0].mxu0
  %v3092 = vadd.f32 0.0, %v3091
  %v3093 = vpop.f32.mrb[0].mxu0
  %v3094 = vadd.f32 0.0, %v3093
  %v3095 = vpop.f32.mrb[0].mxu0
  %v3096 = vadd.f32 0.0, %v3095
  %v3097 = vpop.f32.mrb[0].mxu0
  %v3098 = vadd.f32 0.0, %v3097
  %3099 = vmatprep.mubr.bf16.mxu0 0
  %3100 = vmatmul.mubr.bf16.gmra.mrb[0].mxu0 %v2949
  %v3101 = vpop.f32.mrb[0].mxu0
  %v3102 = vadd.f32 0.0, %v3101
  %v3103 = vpop.f32.mrb[0].mxu0
  %v3104 = vadd.f32 0.0, %v3103
  %v3105 = vpop.f32.mrb[0].mxu0
  %v3106 = vadd.f32 0.0, %v3105
  %v3107 = vpop.f32.mrb[0].mxu0
  %v3108 = vadd.f32 0.0, %v3107
  %3109 = vmatprep.mubr.bf16.mxu0 0
  %3110 = vmatmul.mubr.bf16.gmra.mrb[0].mxu0 %v2950
  %v3111 = vpop.f32.mrb[0].mxu0
  %v3112 = vadd.f32 0.0, %v3111
  %v3113 = vpop.f32.mrb[0].mxu0
  %v3114 = vadd.f32 0.0, %v3113
  %v3115 = vpop.f32.mrb[0].mxu0
  %v3116 = vadd.f32 0.0, %v3115
  %v3117 = vpop.f32.mrb[0].mxu0
  %v3118 = vadd.f32 0.0, %v3117
  %3119 = vmatprep.mubr.bf16.mxu0 0
  %3120 = vmatmul.mubr.bf16.gmra.mrb[0].mxu0 %v2951
  %v3121 = vpop.f32.mrb[0].mxu0
  %v3122 = vadd.f32 0.0, %v3121
  %v3123 = vpop.f32.mrb[0].mxu0
  %v3124 = vadd.f32 0.0, %v3123
  %v3125 = vpop.f32.mrb[0].mxu0
  %v3126 = vadd.f32 0.0, %v3125
  %v3127 = vpop.f32.mrb[0].mxu0
  %v3128 = vadd.f32 0.0, %v3127
  %3129 = vdwg.mxu0
  %v3130 = vadd.f32 %v2863, %v3052
  %v3131 = vadd.f32 %v2864, %v3054
  %v3132 = vadd.f32 %v2865, %v3056
  %v3133 = vadd.f32 %v2866, %v3058
  %v3134 = vadd.f32 %v2867, %v3062
  %v3135 = vadd.f32 %v2868, %v3064
  %v3136 = vadd.f32 %v2869, %v3066
  %v3137 = vadd.f32 %v2870, %v3068
  %v3138 = vadd.f32 %v2871, %v3072
  %v3139 = vadd.f32 %v2872, %v3074
  %v3140 = vadd.f32 %v2873, %v3076
  %v3141 = vadd.f32 %v2874, %v3078
  %v3142 = vadd.f32 %v2875, %v3082
  %v3143 = vadd.f32 %v2876, %v3084
  %v3144 = vadd.f32 %v2877, %v3086
  %v3145 = vadd.f32 %v2878, %v3088
  %v3146 = vadd.f32 %v2879, %v3092
  %v3147 = vadd.f32 %v2880, %v3094
  %v3148 = vadd.f32 %v2881, %v3096
  %v3149 = vadd.f32 %v2882, %v3098
  %v3150 = vadd.f32 %v2883, %v3102
  %v3151 = vadd.f32 %v2884, %v3104
  %v3152 = vadd.f32 %v2885, %v3106
  %v3153 = vadd.f32 %v2886, %v3108
  %v3154 = vadd.f32 %v2887, %v3112
  %v3155 = vadd.f32 %v2888, %v3114
  %v3156 = vadd.f32 %v2889, %v3116
  %v3157 = vadd.f32 %v2890, %v3118
  %v3158 = vadd.f32 %v2891, %v3122
  %v3159 = vadd.f32 %v2892, %v3124
  %v3160 = vadd.f32 %v2893, %v3126
  %v3161 = vadd.f32 %v2894, %v3128
  %s3162 = scalar_lea.vmem %s4, 320
  %v3163 = vld [vmem:[%s3162] sm:$0xf]
  %v3164 = vld [vmem:[%s3162 + $0x4] sm:$0xf]
  %v3165 = vld [vmem:[%s3162 + $0x8] sm:$0xf]
  %v3166 = vld [vmem:[%s3162 + $0xc] sm:$0xf]
  %v3167 = vld [vmem:[%s3162 + $0x10] sm:$0xf]
  %v3168 = vld [vmem:[%s3162 + $0x14] sm:$0xf]
  %v3169 = vld [vmem:[%s3162 + $0x18] sm:$0xf]
  %v3170 = vld [vmem:[%s3162 + $0x1c] sm:$0xf]
  %v3171 = vld [vmem:[%s3162 + $0x20] sm:$0xf]
  %v3172 = vld [vmem:[%s3162 + $0x24] sm:$0xf]
  %v3173 = vld [vmem:[%s3162 + $0x28] sm:$0xf]
  %v3174 = vld [vmem:[%s3162 + $0x2c] sm:$0xf]
  %v3175 = vld [vmem:[%s3162 + $0x30] sm:$0xf]
  %v3176 = vld [vmem:[%s3162 + $0x34] sm:$0xf]
  %v3177 = vld [vmem:[%s3162 + $0x38] sm:$0xf]
  %v3178 = vld [vmem:[%s3162 + $0x3c] sm:$0xf]
  %v3195 = vunpack.c.l.b16 %v3163
  %v3196 = vunpack.c.l.b16 %v3164
  %v3197 = vunpack.c.l.b16 %v3165
  %v3198 = vunpack.c.l.b16 %v3166
  %v3199 = vunpack.c.l.b16 %v3167
  %v3200 = vunpack.c.l.b16 %v3168
  %v3201 = vunpack.c.l.b16 %v3169
  %v3202 = vunpack.c.l.b16 %v3170
  %v3203 = vunpack.c.l.b16 %v3171
  %v3204 = vunpack.c.l.b16 %v3172
  %v3205 = vunpack.c.l.b16 %v3173
  %v3206 = vunpack.c.l.b16 %v3174
  %v3207 = vunpack.c.l.b16 %v3175
  %v3208 = vunpack.c.l.b16 %v3176
  %v3209 = vunpack.c.l.b16 %v3177
  %v3210 = vunpack.c.l.b16 %v3178
  %v3211 = vpack.c.b16 %v3196, %v3195
  %v3212 = vpack.c.b16 %v3198, %v3197
  %v3213 = vpack.c.b16 %v3200, %v3199
  %v3214 = vpack.c.b16 %v3202, %v3201
  %v3215 = vpack.c.b16 %v3204, %v3203
  %v3216 = vpack.c.b16 %v3206, %v3205
  %v3217 = vpack.c.b16 %v3208, %v3207
  %v3218 = vpack.c.b16 %v3210, %v3209
  %3227 = vrot.lane.b32.xlu0 %v1917, 123
  %v3228 = vpop.permute.xlu0 %3227
  %3229 = vrot.lane.b32.xlu0 %v1918, 123
  %v3230 = vpop.permute.xlu0 %3229
  %3231 = vrot.lane.b32.xlu0 %v1919, 123
  %v3232 = vpop.permute.xlu0 %3231
  %3233 = vrot.lane.b32.xlu0 %v1920, 123
  %v3234 = vpop.permute.xlu0 %3233
  %3235 = vrot.lane.b32.xlu0 %v1921, 123
  %v3236 = vpop.permute.xlu0 %3235
  %3237 = vrot.lane.b32.xlu0 %v1922, 123
  %v3238 = vpop.permute.xlu0 %3237
  %3239 = vrot.lane.b32.xlu0 %v1923, 123
  %v3240 = vpop.permute.xlu0 %3239
  %3241 = vrot.lane.b32.xlu0 %v1924, 123
  %v3242 = vpop.permute.xlu0 %3241
  %3243 = vrot.lane.b32.xlu0 %v1925, 123
  %v3244 = vpop.permute.xlu0 %3243
  %3245 = vrot.lane.b32.xlu0 %v1926, 123
  %v3246 = vpop.permute.xlu0 %3245
  %3247 = vrot.lane.b32.xlu0 %v1927, 123
  %v3248 = vpop.permute.xlu0 %3247
  %3249 = vrot.lane.b32.xlu0 %v1928, 123
  %v3250 = vpop.permute.xlu0 %3249
  %3251 = vrot.lane.b32.xlu0 %v1929, 123
  %v3252 = vpop.permute.xlu0 %3251
  %3253 = vrot.lane.b32.xlu0 %v1930, 123
  %v3254 = vpop.permute.xlu0 %3253
  %3255 = vrot.lane.b32.xlu0 %v1931, 123
  %v3256 = vpop.permute.xlu0 %3255
  %3257 = vrot.lane.b32.xlu0 %v1932, 123
  %v3258 = vpop.permute.xlu0 %3257
  %vm3259 = vcmask 1006592
  %v3260 = vsel %vm3259, %v3228, %v3230
  %v3261 = vsel %vm3259, %v3232, %v3234
  %v3262 = vsel %vm3259, %v3236, %v3238
  %v3263 = vsel %vm3259, %v3240, %v3242
  %v3264 = vsel %vm3259, %v3244, %v3246
  %v3265 = vsel %vm3259, %v3248, %v3250
  %v3266 = vsel %vm3259, %v3252, %v3254
  %v3267 = vsel %vm3259, %v3256, %v3258
  %3284 = vmatprep.subr.bf16.mxu0 %v3230
  %3285 = vmatpush1.bf16.msra.mxu0 %v3260
  %3286 = vmatprep.subr.bf16.mxu0 %v3234
  %3287 = vmatpush1.bf16.msra.mxu0 %v3261
  %3288 = vmatprep.subr.bf16.mxu0 %v3238
  %3289 = vmatpush1.bf16.msra.mxu0 %v3262
  %3290 = vmatprep.subr.bf16.mxu0 %v3242
  %3291 = vmatpush1.bf16.msra.mxu0 %v3263
  %3292 = vmatprep.subr.bf16.mxu0 %v3246
  %3293 = vmatpush1.bf16.msra.mxu0 %v3264
  %3294 = vmatprep.subr.bf16.mxu0 %v3250
  %3295 = vmatpush1.bf16.msra.mxu0 %v3265
  %3296 = vmatprep.subr.bf16.mxu0 %v3254
  %3297 = vmatpush1.bf16.msra.mxu0 %v3266
  %3298 = vmatprep.subr.bf16.mxu0 %v3258
  %3299 = vmatpush1.bf16.msra.mxu0 %v3267
  %3300 = vmatprep.subr.bf16.mxu0 0
  %3301 = vmatpush1.bf16.msra.mxu0 0
  %3302 = vmatprep.subr.bf16.mxu0 0
  %3303 = vmatpush1.bf16.msra.mxu0 0
  %3304 = vmatprep.subr.bf16.mxu0 0
  %3305 = vmatpush1.bf16.msra.mxu0 0
  %3306 = vmatprep.subr.bf16.mxu0 0
  %3307 = vmatpush1.bf16.msra.mxu0 0
  %3308 = vmatprep.subr.bf16.mxu0 0
  %3309 = vmatpush1.bf16.msra.mxu0 0
  %3310 = vmatprep.subr.bf16.mxu0 0
  %3311 = vmatpush1.bf16.msra.mxu0 0
  %3312 = vmatprep.subr.bf16.mxu0 0
  %3313 = vmatpush1.bf16.msra.mxu0 0
  %3314 = vmatprep.subr.bf16.mxu0 0
  %3315 = vmatpush1.bf16.msra.mxu0 0
  %3316 = vmatprep.mubr.bf16.mxu0 0
  %3317 = vmatmul.mubr.bf16.gmra.mrb[0].mxu0 %v3211
  %v3318 = vpop.f32.mrb[0].mxu0
  %v3319 = vadd.f32 0.0, %v3318
  %v3320 = vpop.f32.mrb[0].mxu0
  %v3321 = vadd.f32 0.0, %v3320
  %v3322 = vpop.f32.mrb[0].mxu0
  %v3323 = vadd.f32 0.0, %v3322
  %v3324 = vpop.f32.mrb[0].mxu0
  %v3325 = vadd.f32 0.0, %v3324
  %3326 = vmatprep.mubr.bf16.mxu0 0
  %3327 = vmatmul.mubr.bf16.gmra.mrb[0].mxu0 %v3212
  %v3328 = vpop.f32.mrb[0].mxu0
  %v3329 = vadd.f32 0.0, %v3328
  %v3330 = vpop.f32.mrb[0].mxu0
  %v3331 = vadd.f32 0.0, %v3330
  %v3332 = vpop.f32.mrb[0].mxu0
  %v3333 = vadd.f32 0.0, %v3332
  %v3334 = vpop.f32.mrb[0].mxu0
  %v3335 = vadd.f32 0.0, %v3334
  %3336 = vmatprep.mubr.bf16.mxu0 0
  %3337 = vmatmul.mubr.bf16.gmra.mrb[0].mxu0 %v3213
  %v3338 = vpop.f32.mrb[0].mxu0
  %v3339 = vadd.f32 0.0, %v3338
  %v3340 = vpop.f32.mrb[0].mxu0
  %v3341 = vadd.f32 0.0, %v3340
  %v3342 = vpop.f32.mrb[0].mxu0
  %v3343 = vadd.f32 0.0, %v3342
  %v3344 = vpop.f32.mrb[0].mxu0
  %v3345 = vadd.f32 0.0, %v3344
  %3346 = vmatprep.mubr.bf16.mxu0 0
  %3347 = vmatmul.mubr.bf16.gmra.mrb[0].mxu0 %v3214
  %v3348 = vpop.f32.mrb[0].mxu0
  %v3349 = vadd.f32 0.0, %v3348
  %v3350 = vpop.f32.mrb[0].mxu0
  %v3351 = vadd.f32 0.0, %v3350
  %v3352 = vpop.f32.mrb[0].mxu0
  %v3353 = vadd.f32 0.0, %v3352
  %v3354 = vpop.f32.mrb[0].mxu0
  %v3355 = vadd.f32 0.0, %v3354
  %3356 = vmatprep.mubr.bf16.mxu0 0
  %3357 = vmatmul.mubr.bf16.gmra.mrb[0].mxu0 %v3215
  %v3358 = vpop.f32.mrb[0].mxu0
  %v3359 = vadd.f32 0.0, %v3358
  %v3360 = vpop.f32.mrb[0].mxu0
  %v3361 = vadd.f32 0.0, %v3360
  %v3362 = vpop.f32.mrb[0].mxu0
  %v3363 = vadd.f32 0.0, %v3362
  %v3364 = vpop.f32.mrb[0].mxu0
  %v3365 = vadd.f32 0.0, %v3364
  %3366 = vmatprep.mubr.bf16.mxu0 0
  %3367 = vmatmul.mubr.bf16.gmra.mrb[0].mxu0 %v3216
  %v3368 = vpop.f32.mrb[0].mxu0
  %v3369 = vadd.f32 0.0, %v3368
  %v3370 = vpop.f32.mrb[0].mxu0
  %v3371 = vadd.f32 0.0, %v3370
  %v3372 = vpop.f32.mrb[0].mxu0
  %v3373 = vadd.f32 0.0, %v3372
  %v3374 = vpop.f32.mrb[0].mxu0
  %v3375 = vadd.f32 0.0, %v3374
  %3376 = vmatprep.mubr.bf16.mxu0 0
  %3377 = vmatmul.mubr.bf16.gmra.mrb[0].mxu0 %v3217
  %v3378 = vpop.f32.mrb[0].mxu0
  %v3379 = vadd.f32 0.0, %v3378
  %v3380 = vpop.f32.mrb[0].mxu0
  %v3381 = vadd.f32 0.0, %v3380
  %v3382 = vpop.f32.mrb[0].mxu0
  %v3383 = vadd.f32 0.0, %v3382
  %v3384 = vpop.f32.mrb[0].mxu0
  %v3385 = vadd.f32 0.0, %v3384
  %3386 = vmatprep.mubr.bf16.mxu0 0
  %3387 = vmatmul.mubr.bf16.gmra.mrb[0].mxu0 %v3218
  %v3388 = vpop.f32.mrb[0].mxu0
  %v3389 = vadd.f32 0.0, %v3388
  %v3390 = vpop.f32.mrb[0].mxu0
  %v3391 = vadd.f32 0.0, %v3390
  %v3392 = vpop.f32.mrb[0].mxu0
  %v3393 = vadd.f32 0.0, %v3392
  %v3394 = vpop.f32.mrb[0].mxu0
  %v3395 = vadd.f32 0.0, %v3394
  %3396 = vdwg.mxu0
  %v3397 = vadd.f32 %v3130, %v3319
  %v3398 = vadd.f32 %v3131, %v3321
  %v3399 = vadd.f32 %v3132, %v3323
  %v3400 = vadd.f32 %v3133, %v3325
  %v3401 = vadd.f32 %v3134, %v3329
  %v3402 = vadd.f32 %v3135, %v3331
  %v3403 = vadd.f32 %v3136, %v3333
  %v3404 = vadd.f32 %v3137, %v3335
  %v3405 = vadd.f32 %v3138, %v3339
  %v3406 = vadd.f32 %v3139, %v3341
  %v3407 = vadd.f32 %v3140, %v3343
  %v3408 = vadd.f32 %v3141, %v3345
  %v3409 = vadd.f32 %v3142, %v3349
  %v3410 = vadd.f32 %v3143, %v3351
  %v3411 = vadd.f32 %v3144, %v3353
  %v3412 = vadd.f32 %v3145, %v3355
  %v3413 = vadd.f32 %v3146, %v3359
  %v3414 = vadd.f32 %v3147, %v3361
  %v3415 = vadd.f32 %v3148, %v3363
  %v3416 = vadd.f32 %v3149, %v3365
  %v3417 = vadd.f32 %v3150, %v3369
  %v3418 = vadd.f32 %v3151, %v3371
  %v3419 = vadd.f32 %v3152, %v3373
  %v3420 = vadd.f32 %v3153, %v3375
  %v3421 = vadd.f32 %v3154, %v3379
  %v3422 = vadd.f32 %v3155, %v3381
  %v3423 = vadd.f32 %v3156, %v3383
  %v3424 = vadd.f32 %v3157, %v3385
  %v3425 = vadd.f32 %v3158, %v3389
  %v3426 = vadd.f32 %v3159, %v3391
  %v3427 = vadd.f32 %v3160, %v3393
  %v3428 = vadd.f32 %v3161, %v3395
  %s3429 = scalar_lea.vmem %s4, 384
  %v3430 = vld [vmem:[%s3429] sm:$0xf]
  %v3431 = vld [vmem:[%s3429 + $0x4] sm:$0xf]
  %v3432 = vld [vmem:[%s3429 + $0x8] sm:$0xf]
  %v3433 = vld [vmem:[%s3429 + $0xc] sm:$0xf]
  %v3434 = vld [vmem:[%s3429 + $0x10] sm:$0xf]
  %v3435 = vld [vmem:[%s3429 + $0x14] sm:$0xf]
  %v3436 = vld [vmem:[%s3429 + $0x18] sm:$0xf]
  %v3437 = vld [vmem:[%s3429 + $0x1c] sm:$0xf]
  %v3438 = vld [vmem:[%s3429 + $0x20] sm:$0xf]
  %v3439 = vld [vmem:[%s3429 + $0x24] sm:$0xf]
  %v3440 = vld [vmem:[%s3429 + $0x28] sm:$0xf]
  %v3441 = vld [vmem:[%s3429 + $0x2c] sm:$0xf]
  %v3442 = vld [vmem:[%s3429 + $0x30] sm:$0xf]
  %v3443 = vld [vmem:[%s3429 + $0x34] sm:$0xf]
  %v3444 = vld [vmem:[%s3429 + $0x38] sm:$0xf]
  %v3445 = vld [vmem:[%s3429 + $0x3c] sm:$0xf]
  %v3462 = vunpack.c.l.b16 %v3430
  %v3463 = vunpack.c.l.b16 %v3431
  %v3464 = vunpack.c.l.b16 %v3432
  %v3465 = vunpack.c.l.b16 %v3433
  %v3466 = vunpack.c.l.b16 %v3434
  %v3467 = vunpack.c.l.b16 %v3435
  %v3468 = vunpack.c.l.b16 %v3436
  %v3469 = vunpack.c.l.b16 %v3437
  %v3470 = vunpack.c.l.b16 %v3438
  %v3471 = vunpack.c.l.b16 %v3439
  %v3472 = vunpack.c.l.b16 %v3440
  %v3473 = vunpack.c.l.b16 %v3441
  %v3474 = vunpack.c.l.b16 %v3442
  %v3475 = vunpack.c.l.b16 %v3443
  %v3476 = vunpack.c.l.b16 %v3444
  %v3477 = vunpack.c.l.b16 %v3445
  %v3478 = vpack.c.b16 %v3463, %v3462
  %v3479 = vpack.c.b16 %v3465, %v3464
  %v3480 = vpack.c.b16 %v3467, %v3466
  %v3481 = vpack.c.b16 %v3469, %v3468
  %v3482 = vpack.c.b16 %v3471, %v3470
  %v3483 = vpack.c.b16 %v3473, %v3472
  %v3484 = vpack.c.b16 %v3475, %v3474
  %v3485 = vpack.c.b16 %v3477, %v3476
  %3494 = vrot.lane.b32.xlu0 %v1917, 122
  %v3495 = vpop.permute.xlu0 %3494
  %3496 = vrot.lane.b32.xlu0 %v1918, 122
  %v3497 = vpop.permute.xlu0 %3496
  %3498 = vrot.lane.b32.xlu0 %v1919, 122
  %v3499 = vpop.permute.xlu0 %3498
  %3500 = vrot.lane.b32.xlu0 %v1920, 122
  %v3501 = vpop.permute.xlu0 %3500
  %3502 = vrot.lane.b32.xlu0 %v1921, 122
  %v3503 = vpop.permute.xlu0 %3502
  %3504 = vrot.lane.b32.xlu0 %v1922, 122
  %v3505 = vpop.permute.xlu0 %3504
  %3506 = vrot.lane.b32.xlu0 %v1923, 122
  %v3507 = vpop.permute.xlu0 %3506
  %3508 = vrot.lane.b32.xlu0 %v1924, 122
  %v3509 = vpop.permute.xlu0 %3508
  %3510 = vrot.lane.b32.xlu0 %v1925, 122
  %v3511 = vpop.permute.xlu0 %3510
  %3512 = vrot.lane.b32.xlu0 %v1926, 122
  %v3513 = vpop.permute.xlu0 %3512
  %3514 = vrot.lane.b32.xlu0 %v1927, 122
  %v3515 = vpop.permute.xlu0 %3514
  %3516 = vrot.lane.b32.xlu0 %v1928, 122
  %v3517 = vpop.permute.xlu0 %3516
  %3518 = vrot.lane.b32.xlu0 %v1929, 122
  %v3519 = vpop.permute.xlu0 %3518
  %3520 = vrot.lane.b32.xlu0 %v1930, 122
  %v3521 = vpop.permute.xlu0 %3520
  %3522 = vrot.lane.b32.xlu0 %v1931, 122
  %v3523 = vpop.permute.xlu0 %3522
  %3524 = vrot.lane.b32.xlu0 %v1932, 122
  %v3525 = vpop.permute.xlu0 %3524
  %vm3526 = vcmask 998400
  %v3527 = vsel %vm3526, %v3495, %v3497
  %v3528 = vsel %vm3526, %v3499, %v3501
  %v3529 = vsel %vm3526, %v3503, %v3505
  %v3530 = vsel %vm3526, %v3507, %v3509
  %v3531 = vsel %vm3526, %v3511, %v3513
  %v3532 = vsel %vm3526, %v3515, %v3517
  %v3533 = vsel %vm3526, %v3519, %v3521
  %v3534 = vsel %vm3526, %v3523, %v3525
  %3551 = vmatprep.subr.bf16.mxu0 %v3497
  %3552 = vmatpush1.bf16.msra.mxu0 %v3527
  %3553 = vmatprep.subr.bf16.mxu0 %v3501
  %3554 = vmatpush1.bf16.msra.mxu0 %v3528
  %3555 = vmatprep.subr.bf16.mxu0 %v3505
  %3556 = vmatpush1.bf16.msra.mxu0 %v3529
  %3557 = vmatprep.subr.bf16.mxu0 %v3509
  %3558 = vmatpush1.bf16.msra.mxu0 %v3530
  %3559 = vmatprep.subr.bf16.mxu0 %v3513
  %3560 = vmatpush1.bf16.msra.mxu0 %v3531
  %3561 = vmatprep.subr.bf16.mxu0 %v3517
  %3562 = vmatpush1.bf16.msra.mxu0 %v3532
  %3563 = vmatprep.subr.bf16.mxu0 %v3521
  %3564 = vmatpush1.bf16.msra.mxu0 %v3533
  %3565 = vmatprep.subr.bf16.mxu0 %v3525
  %3566 = vmatpush1.bf16.msra.mxu0 %v3534
  %3567 = vmatprep.subr.bf16.mxu0 0
  %3568 = vmatpush1.bf16.msra.mxu0 0
  %3569 = vmatprep.subr.bf16.mxu0 0
  %3570 = vmatpush1.bf16.msra.mxu0 0
  %3571 = vmatprep.subr.bf16.mxu0 0
  %3572 = vmatpush1.bf16.msra.mxu0 0
  %3573 = vmatprep.subr.bf16.mxu0 0
  %3574 = vmatpush1.bf16.msra.mxu0 0
  %3575 = vmatprep.subr.bf16.mxu0 0
  %3576 = vmatpush1.bf16.msra.mxu0 0
  %3577 = vmatprep.subr.bf16.mxu0 0
  %3578 = vmatpush1.bf16.msra.mxu0 0
  %3579 = vmatprep.subr.bf16.mxu0 0
  %3580 = vmatpush1.bf16.msra.mxu0 0
  %3581 = vmatprep.subr.bf16.mxu0 0
  %3582 = vmatpush1.bf16.msra.mxu0 0
  %3583 = vmatprep.mubr.bf16.mxu0 0
  %3584 = vmatmul.mubr.bf16.gmra.mrb[0].mxu0 %v3478
  %v3585 = vpop.f32.mrb[0].mxu0
  %v3586 = vadd.f32 0.0, %v3585
  %v3587 = vpop.f32.mrb[0].mxu0
  %v3588 = vadd.f32 0.0, %v3587
  %v3589 = vpop.f32.mrb[0].mxu0
  %v3590 = vadd.f32 0.0, %v3589
  %v3591 = vpop.f32.mrb[0].mxu0
  %v3592 = vadd.f32 0.0, %v3591
  %3593 = vmatprep.mubr.bf16.mxu0 0
  %3594 = vmatmul.mubr.bf16.gmra.mrb[0].mxu0 %v3479
  %v3595 = vpop.f32.mrb[0].mxu0
  %v3596 = vadd.f32 0.0, %v3595
  %v3597 = vpop.f32.mrb[0].mxu0
  %v3598 = vadd.f32 0.0, %v3597
  %v3599 = vpop.f32.mrb[0].mxu0
  %v3600 = vadd.f32 0.0, %v3599
  %v3601 = vpop.f32.mrb[0].mxu0
  %v3602 = vadd.f32 0.0, %v3601
  %3603 = vmatprep.mubr.bf16.mxu0 0
  %3604 = vmatmul.mubr.bf16.gmra.mrb[0].mxu0 %v3480
  %v3605 = vpop.f32.mrb[0].mxu0
  %v3606 = vadd.f32 0.0, %v3605
  %v3607 = vpop.f32.mrb[0].mxu0
  %v3608 = vadd.f32 0.0, %v3607
  %v3609 = vpop.f32.mrb[0].mxu0
  %v3610 = vadd.f32 0.0, %v3609
  %v3611 = vpop.f32.mrb[0].mxu0
  %v3612 = vadd.f32 0.0, %v3611
  %3613 = vmatprep.mubr.bf16.mxu0 0
  %3614 = vmatmul.mubr.bf16.gmra.mrb[0].mxu0 %v3481
  %v3615 = vpop.f32.mrb[0].mxu0
  %v3616 = vadd.f32 0.0, %v3615
  %v3617 = vpop.f32.mrb[0].mxu0
  %v3618 = vadd.f32 0.0, %v3617
  %v3619 = vpop.f32.mrb[0].mxu0
  %v3620 = vadd.f32 0.0, %v3619
  %v3621 = vpop.f32.mrb[0].mxu0
  %v3622 = vadd.f32 0.0, %v3621
  %3623 = vmatprep.mubr.bf16.mxu0 0
  %3624 = vmatmul.mubr.bf16.gmra.mrb[0].mxu0 %v3482
  %v3625 = vpop.f32.mrb[0].mxu0
  %v3626 = vadd.f32 0.0, %v3625
  %v3627 = vpop.f32.mrb[0].mxu0
  %v3628 = vadd.f32 0.0, %v3627
  %v3629 = vpop.f32.mrb[0].mxu0
  %v3630 = vadd.f32 0.0, %v3629
  %v3631 = vpop.f32.mrb[0].mxu0
  %v3632 = vadd.f32 0.0, %v3631
  %3633 = vmatprep.mubr.bf16.mxu0 0
  %3634 = vmatmul.mubr.bf16.gmra.mrb[0].mxu0 %v3483
  %v3635 = vpop.f32.mrb[0].mxu0
  %v3636 = vadd.f32 0.0, %v3635
  %v3637 = vpop.f32.mrb[0].mxu0
  %v3638 = vadd.f32 0.0, %v3637
  %v3639 = vpop.f32.mrb[0].mxu0
  %v3640 = vadd.f32 0.0, %v3639
  %v3641 = vpop.f32.mrb[0].mxu0
  %v3642 = vadd.f32 0.0, %v3641
  %3643 = vmatprep.mubr.bf16.mxu0 0
  %3644 = vmatmul.mubr.bf16.gmra.mrb[0].mxu0 %v3484
  %v3645 = vpop.f32.mrb[0].mxu0
  %v3646 = vadd.f32 0.0, %v3645
  %v3647 = vpop.f32.mrb[0].mxu0
  %v3648 = vadd.f32 0.0, %v3647
  %v3649 = vpop.f32.mrb[0].mxu0
  %v3650 = vadd.f32 0.0, %v3649
  %v3651 = vpop.f32.mrb[0].mxu0
  %v3652 = vadd.f32 0.0, %v3651
  %3653 = vmatprep.mubr.bf16.mxu0 0
  %3654 = vmatmul.mubr.bf16.gmra.mrb[0].mxu0 %v3485
  %v3655 = vpop.f32.mrb[0].mxu0
  %v3656 = vadd.f32 0.0, %v3655
  %v3657 = vpop.f32.mrb[0].mxu0
  %v3658 = vadd.f32 0.0, %v3657
  %v3659 = vpop.f32.mrb[0].mxu0
  %v3660 = vadd.f32 0.0, %v3659
  %v3661 = vpop.f32.mrb[0].mxu0
  %v3662 = vadd.f32 0.0, %v3661
  %3663 = vdwg.mxu0
  %v3664 = vadd.f32 %v3397, %v3586
  %v3665 = vadd.f32 %v3398, %v3588
  %v3666 = vadd.f32 %v3399, %v3590
  %v3667 = vadd.f32 %v3400, %v3592
  %v3668 = vadd.f32 %v3401, %v3596
  %v3669 = vadd.f32 %v3402, %v3598
  %v3670 = vadd.f32 %v3403, %v3600
  %v3671 = vadd.f32 %v3404, %v3602
  %v3672 = vadd.f32 %v3405, %v3606
  %v3673 = vadd.f32 %v3406, %v3608
  %v3674 = vadd.f32 %v3407, %v3610
  %v3675 = vadd.f32 %v3408, %v3612
  %v3676 = vadd.f32 %v3409, %v3616
  %v3677 = vadd.f32 %v3410, %v3618
  %v3678 = vadd.f32 %v3411, %v3620
  %v3679 = vadd.f32 %v3412, %v3622
  %v3680 = vadd.f32 %v3413, %v3626
  %v3681 = vadd.f32 %v3414, %v3628
  %v3682 = vadd.f32 %v3415, %v3630
  %v3683 = vadd.f32 %v3416, %v3632
  %v3684 = vadd.f32 %v3417, %v3636
  %v3685 = vadd.f32 %v3418, %v3638
  %v3686 = vadd.f32 %v3419, %v3640
  %v3687 = vadd.f32 %v3420, %v3642
  %v3688 = vadd.f32 %v3421, %v3646
  %v3689 = vadd.f32 %v3422, %v3648
  %v3690 = vadd.f32 %v3423, %v3650
  %v3691 = vadd.f32 %v3424, %v3652
  %v3692 = vadd.f32 %v3425, %v3656
  %v3693 = vadd.f32 %v3426, %v3658
  %v3694 = vadd.f32 %v3427, %v3660
  %v3695 = vadd.f32 %v3428, %v3662
  %s3696 = scalar_lea.vmem %s4, 448
  %v3697 = vld [vmem:[%s3696] sm:$0xf]
  %v3698 = vld [vmem:[%s3696 + $0x4] sm:$0xf]
  %v3699 = vld [vmem:[%s3696 + $0x8] sm:$0xf]
  %v3700 = vld [vmem:[%s3696 + $0xc] sm:$0xf]
  %v3701 = vld [vmem:[%s3696 + $0x10] sm:$0xf]
  %v3702 = vld [vmem:[%s3696 + $0x14] sm:$0xf]
  %v3703 = vld [vmem:[%s3696 + $0x18] sm:$0xf]
  %v3704 = vld [vmem:[%s3696 + $0x1c] sm:$0xf]
  %v3705 = vld [vmem:[%s3696 + $0x20] sm:$0xf]
  %v3706 = vld [vmem:[%s3696 + $0x24] sm:$0xf]
  %v3707 = vld [vmem:[%s3696 + $0x28] sm:$0xf]
  %v3708 = vld [vmem:[%s3696 + $0x2c] sm:$0xf]
  %v3709 = vld [vmem:[%s3696 + $0x30] sm:$0xf]
  %v3710 = vld [vmem:[%s3696 + $0x34] sm:$0xf]
  %v3711 = vld [vmem:[%s3696 + $0x38] sm:$0xf]
  %v3712 = vld [vmem:[%s3696 + $0x3c] sm:$0xf]
  %v3729 = vunpack.c.l.b16 %v3697
  %v3730 = vunpack.c.l.b16 %v3698
  %v3731 = vunpack.c.l.b16 %v3699
  %v3732 = vunpack.c.l.b16 %v3700
  %v3733 = vunpack.c.l.b16 %v3701
  %v3734 = vunpack.c.l.b16 %v3702
  %v3735 = vunpack.c.l.b16 %v3703
  %v3736 = vunpack.c.l.b16 %v3704
  %v3737 = vunpack.c.l.b16 %v3705
  %v3738 = vunpack.c.l.b16 %v3706
  %v3739 = vunpack.c.l.b16 %v3707
  %v3740 = vunpack.c.l.b16 %v3708
  %v3741 = vunpack.c.l.b16 %v3709
  %v3742 = vunpack.c.l.b16 %v3710
  %v3743 = vunpack.c.l.b16 %v3711
  %v3744 = vunpack.c.l.b16 %v3712
  %v3745 = vpack.c.b16 %v3730, %v3729
  %v3746 = vpack.c.b16 %v3732, %v3731
  %v3747 = vpack.c.b16 %v3734, %v3733
  %v3748 = vpack.c.b16 %v3736, %v3735
  %v3749 = vpack.c.b16 %v3738, %v3737
  %v3750 = vpack.c.b16 %v3740, %v3739
  %v3751 = vpack.c.b16 %v3742, %v3741
  %v3752 = vpack.c.b16 %v3744, %v3743
  %3761 = vrot.lane.b32.xlu0 %v1917, 121
  %v3762 = vpop.permute.xlu0 %3761
  %3763 = vrot.lane.b32.xlu0 %v1918, 121
  %v3764 = vpop.permute.xlu0 %3763
  %3765 = vrot.lane.b32.xlu0 %v1919, 121
  %v3766 = vpop.permute.xlu0 %3765
  %3767 = vrot.lane.b32.xlu0 %v1920, 121
  %v3768 = vpop.permute.xlu0 %3767
  %3769 = vrot.lane.b32.xlu0 %v1921, 121
  %v3770 = vpop.permute.xlu0 %3769
  %3771 = vrot.lane.b32.xlu0 %v1922, 121
  %v3772 = vpop.permute.xlu0 %3771
  %3773 = vrot.lane.b32.xlu0 %v1923, 121
  %v3774 = vpop.permute.xlu0 %3773
  %3775 = vrot.lane.b32.xlu0 %v1924, 121
  %v3776 = vpop.permute.xlu0 %3775
  %3777 = vrot.lane.b32.xlu0 %v1925, 121
  %v3778 = vpop.permute.xlu0 %3777
  %3779 = vrot.lane.b32.xlu0 %v1926, 121
  %v3780 = vpop.permute.xlu0 %3779
  %3781 = vrot.lane.b32.xlu0 %v1927, 121
  %v3782 = vpop.permute.xlu0 %3781
  %3783 = vrot.lane.b32.xlu0 %v1928, 121
  %v3784 = vpop.permute.xlu0 %3783
  %3785 = vrot.lane.b32.xlu0 %v1929, 121
  %v3786 = vpop.permute.xlu0 %3785
  %3787 = vrot.lane.b32.xlu0 %v1930, 121
  %v3788 = vpop.permute.xlu0 %3787
  %3789 = vrot.lane.b32.xlu0 %v1931, 121
  %v3790 = vpop.permute.xlu0 %3789
  %3791 = vrot.lane.b32.xlu0 %v1932, 121
  %v3792 = vpop.permute.xlu0 %3791
  %vm3793 = vcmask 990208
  %v3794 = vsel %vm3793, %v3762, %v3764
  %v3795 = vsel %vm3793, %v3766, %v3768
  %v3796 = vsel %vm3793, %v3770, %v3772
  %v3797 = vsel %vm3793, %v3774, %v3776
  %v3798 = vsel %vm3793, %v3778, %v3780
  %v3799 = vsel %vm3793, %v3782, %v3784
  %v3800 = vsel %vm3793, %v3786, %v3788
  %v3801 = vsel %vm3793, %v3790, %v3792
  %3818 = vmatprep.subr.bf16.mxu0 %v3764
  %3819 = vmatpush1.bf16.msra.mxu0 %v3794
  %3820 = vmatprep.subr.bf16.mxu0 %v3768
  %3821 = vmatpush1.bf16.msra.mxu0 %v3795
  %3822 = vmatprep.subr.bf16.mxu0 %v3772
  %3823 = vmatpush1.bf16.msra.mxu0 %v3796
  %3824 = vmatprep.subr.bf16.mxu0 %v3776
  %3825 = vmatpush1.bf16.msra.mxu0 %v3797
  %3826 = vmatprep.subr.bf16.mxu0 %v3780
  %3827 = vmatpush1.bf16.msra.mxu0 %v3798
  %3828 = vmatprep.subr.bf16.mxu0 %v3784
  %3829 = vmatpush1.bf16.msra.mxu0 %v3799
  %3830 = vmatprep.subr.bf16.mxu0 %v3788
  %3831 = vmatpush1.bf16.msra.mxu0 %v3800
  %3832 = vmatprep.subr.bf16.mxu0 %v3792
  %3833 = vmatpush1.bf16.msra.mxu0 %v3801
  %3834 = vmatprep.subr.bf16.mxu0 0
  %3835 = vmatpush1.bf16.msra.mxu0 0
  %3836 = vmatprep.subr.bf16.mxu0 0
  %3837 = vmatpush1.bf16.msra.mxu0 0
  %3838 = vmatprep.subr.bf16.mxu0 0
  %3839 = vmatpush1.bf16.msra.mxu0 0
  %3840 = vmatprep.subr.bf16.mxu0 0
  %3841 = vmatpush1.bf16.msra.mxu0 0
  %3842 = vmatprep.subr.bf16.mxu0 0
  %3843 = vmatpush1.bf16.msra.mxu0 0
  %3844 = vmatprep.subr.bf16.mxu0 0
  %3845 = vmatpush1.bf16.msra.mxu0 0
  %3846 = vmatprep.subr.bf16.mxu0 0
  %3847 = vmatpush1.bf16.msra.mxu0 0
  %3848 = vmatprep.subr.bf16.mxu0 0
  %3849 = vmatpush1.bf16.msra.mxu0 0
  %3850 = vmatprep.mubr.bf16.mxu0 0
  %3851 = vmatmul.mubr.bf16.gmra.mrb[0].mxu0 %v3745
  %v3852 = vpop.f32.mrb[0].mxu0
  %v3853 = vadd.f32 0.0, %v3852
  %v3854 = vpop.f32.mrb[0].mxu0
  %v3855 = vadd.f32 0.0, %v3854
  %v3856 = vpop.f32.mrb[0].mxu0
  %v3857 = vadd.f32 0.0, %v3856
  %v3858 = vpop.f32.mrb[0].mxu0
  %v3859 = vadd.f32 0.0, %v3858
  %3860 = vmatprep.mubr.bf16.mxu0 0
  %3861 = vmatmul.mubr.bf16.gmra.mrb[0].mxu0 %v3746
  %v3862 = vpop.f32.mrb[0].mxu0
  %v3863 = vadd.f32 0.0, %v3862
  %v3864 = vpop.f32.mrb[0].mxu0
  %v3865 = vadd.f32 0.0, %v3864
  %v3866 = vpop.f32.mrb[0].mxu0
  %v3867 = vadd.f32 0.0, %v3866
  %v3868 = vpop.f32.mrb[0].mxu0
  %v3869 = vadd.f32 0.0, %v3868
  %3870 = vmatprep.mubr.bf16.mxu0 0
  %3871 = vmatmul.mubr.bf16.gmra.mrb[0].mxu0 %v3747
  %v3872 = vpop.f32.mrb[0].mxu0
  %v3873 = vadd.f32 0.0, %v3872
  %v3874 = vpop.f32.mrb[0].mxu0
  %v3875 = vadd.f32 0.0, %v3874
  %v3876 = vpop.f32.mrb[0].mxu0
  %v3877 = vadd.f32 0.0, %v3876
  %v3878 = vpop.f32.mrb[0].mxu0
  %v3879 = vadd.f32 0.0, %v3878
  %3880 = vmatprep.mubr.bf16.mxu0 0
  %3881 = vmatmul.mubr.bf16.gmra.mrb[0].mxu0 %v3748
  %v3882 = vpop.f32.mrb[0].mxu0
  %v3883 = vadd.f32 0.0, %v3882
  %v3884 = vpop.f32.mrb[0].mxu0
  %v3885 = vadd.f32 0.0, %v3884
  %v3886 = vpop.f32.mrb[0].mxu0
  %v3887 = vadd.f32 0.0, %v3886
  %v3888 = vpop.f32.mrb[0].mxu0
  %v3889 = vadd.f32 0.0, %v3888
  %3890 = vmatprep.mubr.bf16.mxu0 0
  %3891 = vmatmul.mubr.bf16.gmra.mrb[0].mxu0 %v3749
  %v3892 = vpop.f32.mrb[0].mxu0
  %v3893 = vadd.f32 0.0, %v3892
  %v3894 = vpop.f32.mrb[0].mxu0
  %v3895 = vadd.f32 0.0, %v3894
  %v3896 = vpop.f32.mrb[0].mxu0
  %v3897 = vadd.f32 0.0, %v3896
  %v3898 = vpop.f32.mrb[0].mxu0
  %v3899 = vadd.f32 0.0, %v3898
  %3900 = vmatprep.mubr.bf16.mxu0 0
  %3901 = vmatmul.mubr.bf16.gmra.mrb[0].mxu0 %v3750
  %v3902 = vpop.f32.mrb[0].mxu0
  %v3903 = vadd.f32 0.0, %v3902
  %v3904 = vpop.f32.mrb[0].mxu0
  %v3905 = vadd.f32 0.0, %v3904
  %v3906 = vpop.f32.mrb[0].mxu0
  %v3907 = vadd.f32 0.0, %v3906
  %v3908 = vpop.f32.mrb[0].mxu0
  %v3909 = vadd.f32 0.0, %v3908
  %3910 = vmatprep.mubr.bf16.mxu0 0
  %3911 = vmatmul.mubr.bf16.gmra.mrb[0].mxu0 %v3751
  %v3912 = vpop.f32.mrb[0].mxu0
  %v3913 = vadd.f32 0.0, %v3912
  %v3914 = vpop.f32.mrb[0].mxu0
  %v3915 = vadd.f32 0.0, %v3914
  %v3916 = vpop.f32.mrb[0].mxu0
  %v3917 = vadd.f32 0.0, %v3916
  %v3918 = vpop.f32.mrb[0].mxu0
  %v3919 = vadd.f32 0.0, %v3918
  %3920 = vmatprep.mubr.bf16.mxu0 0
  %3921 = vmatmul.mubr.bf16.gmra.mrb[0].mxu0 %v3752
  %v3922 = vpop.f32.mrb[0].mxu0
  %v3923 = vadd.f32 0.0, %v3922
  %v3924 = vpop.f32.mrb[0].mxu0
  %v3925 = vadd.f32 0.0, %v3924
  %v3926 = vpop.f32.mrb[0].mxu0
  %v3927 = vadd.f32 0.0, %v3926
  %v3928 = vpop.f32.mrb[0].mxu0
  %v3929 = vadd.f32 0.0, %v3928
  %3930 = vdwg.mxu0
  %v3931 = vadd.f32 %v3664, %v3853
  %v3932 = vadd.f32 %v3665, %v3855
  %v3933 = vadd.f32 %v3666, %v3857
  %v3934 = vadd.f32 %v3667, %v3859
  %v3935 = vadd.f32 %v3668, %v3863
  %v3936 = vadd.f32 %v3669, %v3865
  %v3937 = vadd.f32 %v3670, %v3867
  %v3938 = vadd.f32 %v3671, %v3869
  %v3939 = vadd.f32 %v3672, %v3873
  %v3940 = vadd.f32 %v3673, %v3875
  %v3941 = vadd.f32 %v3674, %v3877
  %v3942 = vadd.f32 %v3675, %v3879
  %v3943 = vadd.f32 %v3676, %v3883
  %v3944 = vadd.f32 %v3677, %v3885
  %v3945 = vadd.f32 %v3678, %v3887
  %v3946 = vadd.f32 %v3679, %v3889
  %v3947 = vadd.f32 %v3680, %v3893
  %v3948 = vadd.f32 %v3681, %v3895
  %v3949 = vadd.f32 %v3682, %v3897
  %v3950 = vadd.f32 %v3683, %v3899
  %v3951 = vadd.f32 %v3684, %v3903
  %v3952 = vadd.f32 %v3685, %v3905
  %v3953 = vadd.f32 %v3686, %v3907
  %v3954 = vadd.f32 %v3687, %v3909
  %v3955 = vadd.f32 %v3688, %v3913
  %v3956 = vadd.f32 %v3689, %v3915
  %v3957 = vadd.f32 %v3690, %v3917
  %v3958 = vadd.f32 %v3691, %v3919
  %v3959 = vadd.f32 %v3692, %v3923
  %v3960 = vadd.f32 %v3693, %v3925
  %v3961 = vadd.f32 %v3694, %v3927
  %v3962 = vadd.f32 %v3695, %v3929
  %s3963 = scalar_lea.vmem %s4, 512
  %v3964 = vld [vmem:[%s3963] sm:$0xf]
  %v3965 = vld [vmem:[%s3963 + $0x4] sm:$0xf]
  %v3966 = vld [vmem:[%s3963 + $0x8] sm:$0xf]
  %v3967 = vld [vmem:[%s3963 + $0xc] sm:$0xf]
  %v3968 = vld [vmem:[%s3963 + $0x10] sm:$0xf]
  %v3969 = vld [vmem:[%s3963 + $0x14] sm:$0xf]
  %v3970 = vld [vmem:[%s3963 + $0x18] sm:$0xf]
  %v3971 = vld [vmem:[%s3963 + $0x1c] sm:$0xf]
  %v3972 = vld [vmem:[%s3963 + $0x20] sm:$0xf]
  %v3973 = vld [vmem:[%s3963 + $0x24] sm:$0xf]
  %v3974 = vld [vmem:[%s3963 + $0x28] sm:$0xf]
  %v3975 = vld [vmem:[%s3963 + $0x2c] sm:$0xf]
  %v3976 = vld [vmem:[%s3963 + $0x30] sm:$0xf]
  %v3977 = vld [vmem:[%s3963 + $0x34] sm:$0xf]
  %v3978 = vld [vmem:[%s3963 + $0x38] sm:$0xf]
  %v3979 = vld [vmem:[%s3963 + $0x3c] sm:$0xf]
  %v3996 = vunpack.c.l.b16 %v3964
  %v3997 = vunpack.c.l.b16 %v3965
  %v3998 = vunpack.c.l.b16 %v3966
  %v3999 = vunpack.c.l.b16 %v3967
  %v4000 = vunpack.c.l.b16 %v3968
  %v4001 = vunpack.c.l.b16 %v3969
  %v4002 = vunpack.c.l.b16 %v3970
  %v4003 = vunpack.c.l.b16 %v3971
  %v4004 = vunpack.c.l.b16 %v3972
  %v4005 = vunpack.c.l.b16 %v3973
  %v4006 = vunpack.c.l.b16 %v3974
  %v4007 = vunpack.c.l.b16 %v3975
  %v4008 = vunpack.c.l.b16 %v3976
  %v4009 = vunpack.c.l.b16 %v3977
  %v4010 = vunpack.c.l.b16 %v3978
  %v4011 = vunpack.c.l.b16 %v3979
  %v4012 = vpack.c.b16 %v3997, %v3996
  %v4013 = vpack.c.b16 %v3999, %v3998
  %v4014 = vpack.c.b16 %v4001, %v4000
  %v4015 = vpack.c.b16 %v4003, %v4002
  %v4016 = vpack.c.b16 %v4005, %v4004
  %v4017 = vpack.c.b16 %v4007, %v4006
  %v4018 = vpack.c.b16 %v4009, %v4008
  %v4019 = vpack.c.b16 %v4011, %v4010
  %4028 = vrot.lane.b32.xlu0 %v1917, 120
  %v4029 = vpop.permute.xlu0 %4028
  %4030 = vrot.lane.b32.xlu0 %v1918, 120
  %v4031 = vpop.permute.xlu0 %4030
  %4032 = vrot.lane.b32.xlu0 %v1919, 120
  %v4033 = vpop.permute.xlu0 %4032
  %4034 = vrot.lane.b32.xlu0 %v1920, 120
  %v4035 = vpop.permute.xlu0 %4034
  %4036 = vrot.lane.b32.xlu0 %v1921, 120
  %v4037 = vpop.permute.xlu0 %4036
  %4038 = vrot.lane.b32.xlu0 %v1922, 120
  %v4039 = vpop.permute.xlu0 %4038
  %4040 = vrot.lane.b32.xlu0 %v1923, 120
  %v4041 = vpop.permute.xlu0 %4040
  %4042 = vrot.lane.b32.xlu0 %v1924, 120
  %v4043 = vpop.permute.xlu0 %4042
  %4044 = vrot.lane.b32.xlu0 %v1925, 120
  %v4045 = vpop.permute.xlu0 %4044
  %4046 = vrot.lane.b32.xlu0 %v1926, 120
  %v4047 = vpop.permute.xlu0 %4046
  %4048 = vrot.lane.b32.xlu0 %v1927, 120
  %v4049 = vpop.permute.xlu0 %4048
  %4050 = vrot.lane.b32.xlu0 %v1928, 120
  %v4051 = vpop.permute.xlu0 %4050
  %4052 = vrot.lane.b32.xlu0 %v1929, 120
  %v4053 = vpop.permute.xlu0 %4052
  %4054 = vrot.lane.b32.xlu0 %v1930, 120
  %v4055 = vpop.permute.xlu0 %4054
  %4056 = vrot.lane.b32.xlu0 %v1931, 120
  %v4057 = vpop.permute.xlu0 %4056
  %4058 = vrot.lane.b32.xlu0 %v1932, 120
  %v4059 = vpop.permute.xlu0 %4058
  %vm4060 = vcmask 982016
  %v4061 = vsel %vm4060, %v4029, %v4031
  %v4062 = vsel %vm4060, %v4033, %v4035
  %v4063 = vsel %vm4060, %v4037, %v4039
  %v4064 = vsel %vm4060, %v4041, %v4043
  %v4065 = vsel %vm4060, %v4045, %v4047
  %v4066 = vsel %vm4060, %v4049, %v4051
  %v4067 = vsel %vm4060, %v4053, %v4055
  %v4068 = vsel %vm4060, %v4057, %v4059
  %4085 = vmatprep.subr.bf16.mxu0 %v4031
  %4086 = vmatpush1.bf16.msra.mxu0 %v4061
  %4087 = vmatprep.subr.bf16.mxu0 %v4035
  %4088 = vmatpush1.bf16.msra.mxu0 %v4062
  %4089 = vmatprep.subr.bf16.mxu0 %v4039
  %4090 = vmatpush1.bf16.msra.mxu0 %v4063
  %4091 = vmatprep.subr.bf16.mxu0 %v4043
  %4092 = vmatpush1.bf16.msra.mxu0 %v4064
  %4093 = vmatprep.subr.bf16.mxu0 %v4047
  %4094 = vmatpush1.bf16.msra.mxu0 %v4065
  %4095 = vmatprep.subr.bf16.mxu0 %v4051
  %4096 = vmatpush1.bf16.msra.mxu0 %v4066
  %4097 = vmatprep.subr.bf16.mxu0 %v4055
  %4098 = vmatpush1.bf16.msra.mxu0 %v4067
  %4099 = vmatprep.subr.bf16.mxu0 %v4059
  %4100 = vmatpush1.bf16.msra.mxu0 %v4068
  %4101 = vmatprep.subr.bf16.mxu0 0
  %4102 = vmatpush1.bf16.msra.mxu0 0
  %4103 = vmatprep.subr.bf16.mxu0 0
  %4104 = vmatpush1.bf16.msra.mxu0 0
  %4105 = vmatprep.subr.bf16.mxu0 0
  %4106 = vmatpush1.bf16.msra.mxu0 0
  %4107 = vmatprep.subr.bf16.mxu0 0
  %4108 = vmatpush1.bf16.msra.mxu0 0
  %4109 = vmatprep.subr.bf16.mxu0 0
  %4110 = vmatpush1.bf16.msra.mxu0 0
  %4111 = vmatprep.subr.bf16.mxu0 0
  %4112 = vmatpush1.bf16.msra.mxu0 0
  %4113 = vmatprep.subr.bf16.mxu0 0
  %4114 = vmatpush1.bf16.msra.mxu0 0
  %4115 = vmatprep.subr.bf16.mxu0 0
  %4116 = vmatpush1.bf16.msra.mxu0 0
  %4117 = vmatprep.mubr.bf16.mxu0 0
  %4118 = vmatmul.mubr.bf16.gmra.mrb[0].mxu0 %v4012
  %v4119 = vpop.f32.mrb[0].mxu0
  %v4120 = vadd.f32 0.0, %v4119
  %v4121 = vpop.f32.mrb[0].mxu0
  %v4122 = vadd.f32 0.0, %v4121
  %v4123 = vpop.f32.mrb[0].mxu0
  %v4124 = vadd.f32 0.0, %v4123
  %v4125 = vpop.f32.mrb[0].mxu0
  %v4126 = vadd.f32 0.0, %v4125
  %4127 = vmatprep.mubr.bf16.mxu0 0
  %4128 = vmatmul.mubr.bf16.gmra.mrb[0].mxu0 %v4013
  %v4129 = vpop.f32.mrb[0].mxu0
  %v4130 = vadd.f32 0.0, %v4129
  %v4131 = vpop.f32.mrb[0].mxu0
  %v4132 = vadd.f32 0.0, %v4131
  %v4133 = vpop.f32.mrb[0].mxu0
  %v4134 = vadd.f32 0.0, %v4133
  %v4135 = vpop.f32.mrb[0].mxu0
  %v4136 = vadd.f32 0.0, %v4135
  %4137 = vmatprep.mubr.bf16.mxu0 0
  %4138 = vmatmul.mubr.bf16.gmra.mrb[0].mxu0 %v4014
  %v4139 = vpop.f32.mrb[0].mxu0
  %v4140 = vadd.f32 0.0, %v4139
  %v4141 = vpop.f32.mrb[0].mxu0
  %v4142 = vadd.f32 0.0, %v4141
  %v4143 = vpop.f32.mrb[0].mxu0
  %v4144 = vadd.f32 0.0, %v4143
  %v4145 = vpop.f32.mrb[0].mxu0
  %v4146 = vadd.f32 0.0, %v4145
  %4147 = vmatprep.mubr.bf16.mxu0 0
  %4148 = vmatmul.mubr.bf16.gmra.mrb[0].mxu0 %v4015
  %v4149 = vpop.f32.mrb[0].mxu0
  %v4150 = vadd.f32 0.0, %v4149
  %v4151 = vpop.f32.mrb[0].mxu0
  %v4152 = vadd.f32 0.0, %v4151
  %v4153 = vpop.f32.mrb[0].mxu0
  %v4154 = vadd.f32 0.0, %v4153
  %v4155 = vpop.f32.mrb[0].mxu0
  %v4156 = vadd.f32 0.0, %v4155
  %4157 = vmatprep.mubr.bf16.mxu0 0
  %4158 = vmatmul.mubr.bf16.gmra.mrb[0].mxu0 %v4016
  %v4159 = vpop.f32.mrb[0].mxu0
  %v4160 = vadd.f32 0.0, %v4159
  %v4161 = vpop.f32.mrb[0].mxu0
  %v4162 = vadd.f32 0.0, %v4161
  %v4163 = vpop.f32.mrb[0].mxu0
  %v4164 = vadd.f32 0.0, %v4163
  %v4165 = vpop.f32.mrb[0].mxu0
  %v4166 = vadd.f32 0.0, %v4165
  %4167 = vmatprep.mubr.bf16.mxu0 0
  %4168 = vmatmul.mubr.bf16.gmra.mrb[0].mxu0 %v4017
  %v4169 = vpop.f32.mrb[0].mxu0
  %v4170 = vadd.f32 0.0, %v4169
  %v4171 = vpop.f32.mrb[0].mxu0
  %v4172 = vadd.f32 0.0, %v4171
  %v4173 = vpop.f32.mrb[0].mxu0
  %v4174 = vadd.f32 0.0, %v4173
  %v4175 = vpop.f32.mrb[0].mxu0
  %v4176 = vadd.f32 0.0, %v4175
  %4177 = vmatprep.mubr.bf16.mxu0 0
  %4178 = vmatmul.mubr.bf16.gmra.mrb[0].mxu0 %v4018
  %v4179 = vpop.f32.mrb[0].mxu0
  %v4180 = vadd.f32 0.0, %v4179
  %v4181 = vpop.f32.mrb[0].mxu0
  %v4182 = vadd.f32 0.0, %v4181
  %v4183 = vpop.f32.mrb[0].mxu0
  %v4184 = vadd.f32 0.0, %v4183
  %v4185 = vpop.f32.mrb[0].mxu0
  %v4186 = vadd.f32 0.0, %v4185
  %4187 = vmatprep.mubr.bf16.mxu0 0
  %4188 = vmatmul.mubr.bf16.gmra.mrb[0].mxu0 %v4019
  %v4189 = vpop.f32.mrb[0].mxu0
  %v4190 = vadd.f32 0.0, %v4189
  %v4191 = vpop.f32.mrb[0].mxu0
  %v4192 = vadd.f32 0.0, %v4191
  %v4193 = vpop.f32.mrb[0].mxu0
  %v4194 = vadd.f32 0.0, %v4193
  %v4195 = vpop.f32.mrb[0].mxu0
  %v4196 = vadd.f32 0.0, %v4195
  %4197 = vdwg.mxu0
  %v4198 = vadd.f32 %v3931, %v4120
  %v4199 = vadd.f32 %v3932, %v4122
  %v4200 = vadd.f32 %v3933, %v4124
  %v4201 = vadd.f32 %v3934, %v4126
  %v4202 = vadd.f32 %v3935, %v4130
  %v4203 = vadd.f32 %v3936, %v4132
  %v4204 = vadd.f32 %v3937, %v4134
  %v4205 = vadd.f32 %v3938, %v4136
  %v4206 = vadd.f32 %v3939, %v4140
  %v4207 = vadd.f32 %v3940, %v4142
  %v4208 = vadd.f32 %v3941, %v4144
  %v4209 = vadd.f32 %v3942, %v4146
  %v4210 = vadd.f32 %v3943, %v4150
  %v4211 = vadd.f32 %v3944, %v4152
  %v4212 = vadd.f32 %v3945, %v4154
  %v4213 = vadd.f32 %v3946, %v4156
  %v4214 = vadd.f32 %v3947, %v4160
  %v4215 = vadd.f32 %v3948, %v4162
  %v4216 = vadd.f32 %v3949, %v4164
  %v4217 = vadd.f32 %v3950, %v4166
  %v4218 = vadd.f32 %v3951, %v4170
  %v4219 = vadd.f32 %v3952, %v4172
  %v4220 = vadd.f32 %v3953, %v4174
  %v4221 = vadd.f32 %v3954, %v4176
  %v4222 = vadd.f32 %v3955, %v4180
  %v4223 = vadd.f32 %v3956, %v4182
  %v4224 = vadd.f32 %v3957, %v4184
  %v4225 = vadd.f32 %v3958, %v4186
  %v4226 = vadd.f32 %v3959, %v4190
  %v4227 = vadd.f32 %v3960, %v4192
  %v4228 = vadd.f32 %v3961, %v4194
  %v4229 = vadd.f32 %v3962, %v4196
  %s4230 = scalar_lea.vmem %s4, 576
  %v4231 = vld [vmem:[%s4230] sm:$0xf]
  %v4232 = vld [vmem:[%s4230 + $0x4] sm:$0xf]
  %v4233 = vld [vmem:[%s4230 + $0x8] sm:$0xf]
  %v4234 = vld [vmem:[%s4230 + $0xc] sm:$0xf]
  %v4235 = vld [vmem:[%s4230 + $0x10] sm:$0xf]
  %v4236 = vld [vmem:[%s4230 + $0x14] sm:$0xf]
  %v4237 = vld [vmem:[%s4230 + $0x18] sm:$0xf]
  %v4238 = vld [vmem:[%s4230 + $0x1c] sm:$0xf]
  %v4239 = vld [vmem:[%s4230 + $0x20] sm:$0xf]
  %v4240 = vld [vmem:[%s4230 + $0x24] sm:$0xf]
  %v4241 = vld [vmem:[%s4230 + $0x28] sm:$0xf]
  %v4242 = vld [vmem:[%s4230 + $0x2c] sm:$0xf]
  %v4243 = vld [vmem:[%s4230 + $0x30] sm:$0xf]
  %v4244 = vld [vmem:[%s4230 + $0x34] sm:$0xf]
  %v4245 = vld [vmem:[%s4230 + $0x38] sm:$0xf]
  %v4246 = vld [vmem:[%s4230 + $0x3c] sm:$0xf]
  %v4263 = vunpack.c.l.b16 %v4231
  %v4264 = vunpack.c.l.b16 %v4232
  %v4265 = vunpack.c.l.b16 %v4233
  %v4266 = vunpack.c.l.b16 %v4234
  %v4267 = vunpack.c.l.b16 %v4235
  %v4268 = vunpack.c.l.b16 %v4236
  %v4269 = vunpack.c.l.b16 %v4237
  %v4270 = vunpack.c.l.b16 %v4238
  %v4271 = vunpack.c.l.b16 %v4239
  %v4272 = vunpack.c.l.b16 %v4240
  %v4273 = vunpack.c.l.b16 %v4241
  %v4274 = vunpack.c.l.b16 %v4242
  %v4275 = vunpack.c.l.b16 %v4243
  %v4276 = vunpack.c.l.b16 %v4244
  %v4277 = vunpack.c.l.b16 %v4245
  %v4278 = vunpack.c.l.b16 %v4246
  %v4279 = vpack.c.b16 %v4264, %v4263
  %v4280 = vpack.c.b16 %v4266, %v4265
  %v4281 = vpack.c.b16 %v4268, %v4267
  %v4282 = vpack.c.b16 %v4270, %v4269
  %v4283 = vpack.c.b16 %v4272, %v4271
  %v4284 = vpack.c.b16 %v4274, %v4273
  %v4285 = vpack.c.b16 %v4276, %v4275
  %v4286 = vpack.c.b16 %v4278, %v4277
  %4295 = vrot.lane.b32.xlu0 %v1917, 119
  %v4296 = vpop.permute.xlu0 %4295
  %4297 = vrot.lane.b32.xlu0 %v1918, 119
  %v4298 = vpop.permute.xlu0 %4297
  %4299 = vrot.lane.b32.xlu0 %v1919, 119
  %v4300 = vpop.permute.xlu0 %4299
  %4301 = vrot.lane.b32.xlu0 %v1920, 119
  %v4302 = vpop.permute.xlu0 %4301
  %4303 = vrot.lane.b32.xlu0 %v1921, 119
  %v4304 = vpop.permute.xlu0 %4303
  %4305 = vrot.lane.b32.xlu0 %v1922, 119
  %v4306 = vpop.permute.xlu0 %4305
  %4307 = vrot.lane.b32.xlu0 %v1923, 119
  %v4308 = vpop.permute.xlu0 %4307
  %4309 = vrot.lane.b32.xlu0 %v1924, 119
  %v4310 = vpop.permute.xlu0 %4309
  %4311 = vrot.lane.b32.xlu0 %v1925, 119
  %v4312 = vpop.permute.xlu0 %4311
  %4313 = vrot.lane.b32.xlu0 %v1926, 119
  %v4314 = vpop.permute.xlu0 %4313
  %4315 = vrot.lane.b32.xlu0 %v1927, 119
  %v4316 = vpop.permute.xlu0 %4315
  %4317 = vrot.lane.b32.xlu0 %v1928, 119
  %v4318 = vpop.permute.xlu0 %4317
  %4319 = vrot.lane.b32.xlu0 %v1929, 119
  %v4320 = vpop.permute.xlu0 %4319
  %4321 = vrot.lane.b32.xlu0 %v1930, 119
  %v4322 = vpop.permute.xlu0 %4321
  %4323 = vrot.lane.b32.xlu0 %v1931, 119
  %v4324 = vpop.permute.xlu0 %4323
  %4325 = vrot.lane.b32.xlu0 %v1932, 119
  %v4326 = vpop.permute.xlu0 %4325
  %vm4327 = vcmask 973824
  %v4328 = vsel %vm4327, %v4296, %v4298
  %v4329 = vsel %vm4327, %v4300, %v4302
  %v4330 = vsel %vm4327, %v4304, %v4306
  %v4331 = vsel %vm4327, %v4308, %v4310
  %v4332 = vsel %vm4327, %v4312, %v4314
  %v4333 = vsel %vm4327, %v4316, %v4318
  %v4334 = vsel %vm4327, %v4320, %v4322
  %v4335 = vsel %vm4327, %v4324, %v4326
  %4352 = vmatprep.subr.bf16.mxu0 %v4298
  %4353 = vmatpush1.bf16.msra.mxu0 %v4328
  %4354 = vmatprep.subr.bf16.mxu0 %v4302
  %4355 = vmatpush1.bf16.msra.mxu0 %v4329
  %4356 = vmatprep.subr.bf16.mxu0 %v4306
  %4357 = vmatpush1.bf16.msra.mxu0 %v4330
  %4358 = vmatprep.subr.bf16.mxu0 %v4310
  %4359 = vmatpush1.bf16.msra.mxu0 %v4331
  %4360 = vmatprep.subr.bf16.mxu0 %v4314
  %4361 = vmatpush1.bf16.msra.mxu0 %v4332
  %4362 = vmatprep.subr.bf16.mxu0 %v4318
  %4363 = vmatpush1.bf16.msra.mxu0 %v4333
  %4364 = vmatprep.subr.bf16.mxu0 %v4322
  %4365 = vmatpush1.bf16.msra.mxu0 %v4334
  %4366 = vmatprep.subr.bf16.mxu0 %v4326
  %4367 = vmatpush1.bf16.msra.mxu0 %v4335
  %4368 = vmatprep.subr.bf16.mxu0 0
  %4369 = vmatpush1.bf16.msra.mxu0 0
  %4370 = vmatprep.subr.bf16.mxu0 0
  %4371 = vmatpush1.bf16.msra.mxu0 0
  %4372 = vmatprep.subr.bf16.mxu0 0
  %4373 = vmatpush1.bf16.msra.mxu0 0
  %4374 = vmatprep.subr.bf16.mxu0 0
  %4375 = vmatpush1.bf16.msra.mxu0 0
  %4376 = vmatprep.subr.bf16.mxu0 0
  %4377 = vmatpush1.bf16.msra.mxu0 0
  %4378 = vmatprep.subr.bf16.mxu0 0
  %4379 = vmatpush1.bf16.msra.mxu0 0
  %4380 = vmatprep.subr.bf16.mxu0 0
  %4381 = vmatpush1.bf16.msra.mxu0 0
  %4382 = vmatprep.subr.bf16.mxu0 0
  %4383 = vmatpush1.bf16.msra.mxu0 0
  %4384 = vmatprep.mubr.bf16.mxu0 0
  %4385 = vmatmul.mubr.bf16.gmra.mrb[0].mxu0 %v4279
  %v4386 = vpop.f32.mrb[0].mxu0
  %v4387 = vadd.f32 0.0, %v4386
  %v4388 = vpop.f32.mrb[0].mxu0
  %v4389 = vadd.f32 0.0, %v4388
  %v4390 = vpop.f32.mrb[0].mxu0
  %v4391 = vadd.f32 0.0, %v4390
  %v4392 = vpop.f32.mrb[0].mxu0
  %v4393 = vadd.f32 0.0, %v4392
  %4394 = vmatprep.mubr.bf16.mxu0 0
  %4395 = vmatmul.mubr.bf16.gmra.mrb[0].mxu0 %v4280
  %v4396 = vpop.f32.mrb[0].mxu0
  %v4397 = vadd.f32 0.0, %v4396
  %v4398 = vpop.f32.mrb[0].mxu0
  %v4399 = vadd.f32 0.0, %v4398
  %v4400 = vpop.f32.mrb[0].mxu0
  %v4401 = vadd.f32 0.0, %v4400
  %v4402 = vpop.f32.mrb[0].mxu0
  %v4403 = vadd.f32 0.0, %v4402
  %4404 = vmatprep.mubr.bf16.mxu0 0
  %4405 = vmatmul.mubr.bf16.gmra.mrb[0].mxu0 %v4281
  %v4406 = vpop.f32.mrb[0].mxu0
  %v4407 = vadd.f32 0.0, %v4406
  %v4408 = vpop.f32.mrb[0].mxu0
  %v4409 = vadd.f32 0.0, %v4408
  %v4410 = vpop.f32.mrb[0].mxu0
  %v4411 = vadd.f32 0.0, %v4410
  %v4412 = vpop.f32.mrb[0].mxu0
  %v4413 = vadd.f32 0.0, %v4412
  %4414 = vmatprep.mubr.bf16.mxu0 0
  %4415 = vmatmul.mubr.bf16.gmra.mrb[0].mxu0 %v4282
  %v4416 = vpop.f32.mrb[0].mxu0
  %v4417 = vadd.f32 0.0, %v4416
  %v4418 = vpop.f32.mrb[0].mxu0
  %v4419 = vadd.f32 0.0, %v4418
  %v4420 = vpop.f32.mrb[0].mxu0
  %v4421 = vadd.f32 0.0, %v4420
  %v4422 = vpop.f32.mrb[0].mxu0
  %v4423 = vadd.f32 0.0, %v4422
  %4424 = vmatprep.mubr.bf16.mxu0 0
  %4425 = vmatmul.mubr.bf16.gmra.mrb[0].mxu0 %v4283
  %v4426 = vpop.f32.mrb[0].mxu0
  %v4427 = vadd.f32 0.0, %v4426
  %v4428 = vpop.f32.mrb[0].mxu0
  %v4429 = vadd.f32 0.0, %v4428
  %v4430 = vpop.f32.mrb[0].mxu0
  %v4431 = vadd.f32 0.0, %v4430
  %v4432 = vpop.f32.mrb[0].mxu0
  %v4433 = vadd.f32 0.0, %v4432
  %4434 = vmatprep.mubr.bf16.mxu0 0
  %4435 = vmatmul.mubr.bf16.gmra.mrb[0].mxu0 %v4284
  %v4436 = vpop.f32.mrb[0].mxu0
  %v4437 = vadd.f32 0.0, %v4436
  %v4438 = vpop.f32.mrb[0].mxu0
  %v4439 = vadd.f32 0.0, %v4438
  %v4440 = vpop.f32.mrb[0].mxu0
  %v4441 = vadd.f32 0.0, %v4440
  %v4442 = vpop.f32.mrb[0].mxu0
  %v4443 = vadd.f32 0.0, %v4442
  %4444 = vmatprep.mubr.bf16.mxu0 0
  %4445 = vmatmul.mubr.bf16.gmra.mrb[0].mxu0 %v4285
  %v4446 = vpop.f32.mrb[0].mxu0
  %v4447 = vadd.f32 0.0, %v4446
  %v4448 = vpop.f32.mrb[0].mxu0
  %v4449 = vadd.f32 0.0, %v4448
  %v4450 = vpop.f32.mrb[0].mxu0
  %v4451 = vadd.f32 0.0, %v4450
  %v4452 = vpop.f32.mrb[0].mxu0
  %v4453 = vadd.f32 0.0, %v4452
  %4454 = vmatprep.mubr.bf16.mxu0 0
  %4455 = vmatmul.mubr.bf16.gmra.mrb[0].mxu0 %v4286
  %v4456 = vpop.f32.mrb[0].mxu0
  %v4457 = vadd.f32 0.0, %v4456
  %v4458 = vpop.f32.mrb[0].mxu0
  %v4459 = vadd.f32 0.0, %v4458
  %v4460 = vpop.f32.mrb[0].mxu0
  %v4461 = vadd.f32 0.0, %v4460
  %v4462 = vpop.f32.mrb[0].mxu0
  %v4463 = vadd.f32 0.0, %v4462
  %4464 = vdwg.mxu0
  %v4465 = vadd.f32 %v4198, %v4387
  %v4466 = vadd.f32 %v4199, %v4389
  %v4467 = vadd.f32 %v4200, %v4391
  %v4468 = vadd.f32 %v4201, %v4393
  %v4469 = vadd.f32 %v4202, %v4397
  %v4470 = vadd.f32 %v4203, %v4399
  %v4471 = vadd.f32 %v4204, %v4401
  %v4472 = vadd.f32 %v4205, %v4403
  %v4473 = vadd.f32 %v4206, %v4407
  %v4474 = vadd.f32 %v4207, %v4409
  %v4475 = vadd.f32 %v4208, %v4411
  %v4476 = vadd.f32 %v4209, %v4413
  %v4477 = vadd.f32 %v4210, %v4417
  %v4478 = vadd.f32 %v4211, %v4419
  %v4479 = vadd.f32 %v4212, %v4421
  %v4480 = vadd.f32 %v4213, %v4423
  %v4481 = vadd.f32 %v4214, %v4427
  %v4482 = vadd.f32 %v4215, %v4429
  %v4483 = vadd.f32 %v4216, %v4431
  %v4484 = vadd.f32 %v4217, %v4433
  %v4485 = vadd.f32 %v4218, %v4437
  %v4486 = vadd.f32 %v4219, %v4439
  %v4487 = vadd.f32 %v4220, %v4441
  %v4488 = vadd.f32 %v4221, %v4443
  %v4489 = vadd.f32 %v4222, %v4447
  %v4490 = vadd.f32 %v4223, %v4449
  %v4491 = vadd.f32 %v4224, %v4451
  %v4492 = vadd.f32 %v4225, %v4453
  %v4493 = vadd.f32 %v4226, %v4457
  %v4494 = vadd.f32 %v4227, %v4459
  %v4495 = vadd.f32 %v4228, %v4461
  %v4496 = vadd.f32 %v4229, %v4463
  %4497 = vset.pattern.permute.xlu0 3
  %4498 = vperm.xlu0 %4497, %v30
  %v4499 = vpop.permute.xlu0 %4498
  %4501 = vset.pattern.permute.xlu0 3
  %4502 = vperm.xlu0 %4501, %v31
  %v4503 = vpop.permute.xlu0 %4502
  %4505 = vset.pattern.permute.xlu0 3
  %4506 = vperm.xlu0 %4505, %v32
  %v4507 = vpop.permute.xlu0 %4506
  %4509 = vset.pattern.permute.xlu0 3
  %4510 = vperm.xlu0 %4509, %v33
  %v4511 = vpop.permute.xlu0 %4510
  %4513 = vset.pattern.permute.xlu0 3
  %4514 = vperm.xlu0 %4513, %v34
  %v4515 = vpop.permute.xlu0 %4514
  %4517 = vset.pattern.permute.xlu0 3
  %4518 = vperm.xlu0 %4517, %v35
  %v4519 = vpop.permute.xlu0 %4518
  %4521 = vset.pattern.permute.xlu0 3
  %4522 = vperm.xlu0 %4521, %v36
  %v4523 = vpop.permute.xlu0 %4522
  %4525 = vset.pattern.permute.xlu0 3
  %4526 = vperm.xlu0 %4525, %v37
  %v4527 = vpop.permute.xlu0 %4526
  %4529 = vset.pattern.permute.xlu0 3
  %4530 = vperm.xlu0 %4529, %v38
  %v4531 = vpop.permute.xlu0 %4530
  %4533 = vset.pattern.permute.xlu0 3
  %4534 = vperm.xlu0 %4533, %v39
  %v4535 = vpop.permute.xlu0 %4534
  %4537 = vset.pattern.permute.xlu0 3
  %4538 = vperm.xlu0 %4537, %v40
  %v4539 = vpop.permute.xlu0 %4538
  %4541 = vset.pattern.permute.xlu0 3
  %4542 = vperm.xlu0 %4541, %v41
  %v4543 = vpop.permute.xlu0 %4542
  %4545 = vset.pattern.permute.xlu0 3
  %4546 = vperm.xlu0 %4545, %v42
  %v4547 = vpop.permute.xlu0 %4546
  %4549 = vset.pattern.permute.xlu0 3
  %4550 = vperm.xlu0 %4549, %v43
  %v4551 = vpop.permute.xlu0 %4550
  %4553 = vset.pattern.permute.xlu0 3
  %4554 = vperm.xlu0 %4553, %v44
  %v4555 = vpop.permute.xlu0 %4554
  %4557 = vset.pattern.permute.xlu0 3
  %4558 = vperm.xlu0 %4557, %v45
  %v4559 = vpop.permute.xlu0 %4558
  %v4561 = vadd.f32 %v4465, %v4499
  %v4562 = vadd.f32 %v4466, %v4499
  %v4563 = vadd.f32 %v4467, %v4503
  %v4564 = vadd.f32 %v4468, %v4503
  %v4565 = vadd.f32 %v4469, %v4507
  %v4566 = vadd.f32 %v4470, %v4507
  %v4567 = vadd.f32 %v4471, %v4511
  %v4568 = vadd.f32 %v4472, %v4511
  %v4569 = vadd.f32 %v4473, %v4515
  %v4570 = vadd.f32 %v4474, %v4515
  %v4571 = vadd.f32 %v4475, %v4519
  %v4572 = vadd.f32 %v4476, %v4519
  %v4573 = vadd.f32 %v4477, %v4523
  %v4574 = vadd.f32 %v4478, %v4523
  %v4575 = vadd.f32 %v4479, %v4527
  %v4576 = vadd.f32 %v4480, %v4527
  %v4577 = vadd.f32 %v4481, %v4531
  %v4578 = vadd.f32 %v4482, %v4531
  %v4579 = vadd.f32 %v4483, %v4535
  %v4580 = vadd.f32 %v4484, %v4535
  %v4581 = vadd.f32 %v4485, %v4539
  %v4582 = vadd.f32 %v4486, %v4539
  %v4583 = vadd.f32 %v4487, %v4543
  %v4584 = vadd.f32 %v4488, %v4543
  %v4585 = vadd.f32 %v4489, %v4547
  %v4586 = vadd.f32 %v4490, %v4547
  %v4587 = vadd.f32 %v4491, %v4551
  %v4588 = vadd.f32 %v4492, %v4551
  %v4589 = vadd.f32 %v4493, %v4555
  %v4590 = vadd.f32 %v4494, %v4555
  %v4591 = vadd.f32 %v4495, %v4559
  %v4592 = vadd.f32 %v4496, %v4559
  %4609 = vrot.lane.b32.xlu0 %v4561, 80
  %v4610 = vpop.permute.xlu0 %4609
  %4611 = vrot.lane.b32.xlu0 %v4563, 80
  %v4612 = vpop.permute.xlu0 %4611
  %4613 = vrot.lane.b32.xlu0 %v4565, 80
  %v4614 = vpop.permute.xlu0 %4613
  %4615 = vrot.lane.b32.xlu0 %v4567, 80
  %v4616 = vpop.permute.xlu0 %4615
  %4617 = vrot.lane.b32.xlu0 %v4569, 80
  %v4618 = vpop.permute.xlu0 %4617
  %4619 = vrot.lane.b32.xlu0 %v4571, 80
  %v4620 = vpop.permute.xlu0 %4619
  %4621 = vrot.lane.b32.xlu0 %v4573, 80
  %v4622 = vpop.permute.xlu0 %4621
  %4623 = vrot.lane.b32.xlu0 %v4575, 80
  %v4624 = vpop.permute.xlu0 %4623
  %4625 = vrot.lane.b32.xlu0 %v4577, 80
  %v4626 = vpop.permute.xlu0 %4625
  %4627 = vrot.lane.b32.xlu0 %v4579, 80
  %v4628 = vpop.permute.xlu0 %4627
  %4629 = vrot.lane.b32.xlu0 %v4581, 80
  %v4630 = vpop.permute.xlu0 %4629
  %4631 = vrot.lane.b32.xlu0 %v4583, 80
  %v4632 = vpop.permute.xlu0 %4631
  %4633 = vrot.lane.b32.xlu0 %v4585, 80
  %v4634 = vpop.permute.xlu0 %4633
  %4635 = vrot.lane.b32.xlu0 %v4587, 80
  %v4636 = vpop.permute.xlu0 %4635
  %4637 = vrot.lane.b32.xlu0 %v4589, 80
  %v4638 = vpop.permute.xlu0 %4637
  %4639 = vrot.lane.b32.xlu0 %v4591, 80
  %v4640 = vpop.permute.xlu0 %4639
  %v4657 = vadd.f32 %v4561, %v4610
  %v4658 = vadd.f32 %v4563, %v4612
  %v4659 = vadd.f32 %v4565, %v4614
  %v4660 = vadd.f32 %v4567, %v4616
  %v4661 = vadd.f32 %v4569, %v4618
  %v4662 = vadd.f32 %v4571, %v4620
  %v4663 = vadd.f32 %v4573, %v4622
  %v4664 = vadd.f32 %v4575, %v4624
  %v4665 = vadd.f32 %v4577, %v4626
  %v4666 = vadd.f32 %v4579, %v4628
  %v4667 = vadd.f32 %v4581, %v4630
  %v4668 = vadd.f32 %v4583, %v4632
  %v4669 = vadd.f32 %v4585, %v4634
  %v4670 = vadd.f32 %v4587, %v4636
  %v4671 = vadd.f32 %v4589, %v4638
  %v4672 = vadd.f32 %v4591, %v4640
  %4673 = vrot.lane.b32.xlu0 %v4561, 32
  %v4674 = vpop.permute.xlu0 %4673
  %4675 = vrot.lane.b32.xlu0 %v4563, 32
  %v4676 = vpop.permute.xlu0 %4675
  %4677 = vrot.lane.b32.xlu0 %v4565, 32
  %v4678 = vpop.permute.xlu0 %4677
  %4679 = vrot.lane.b32.xlu0 %v4567, 32
  %v4680 = vpop.permute.xlu0 %4679
  %4681 = vrot.lane.b32.xlu0 %v4569, 32
  %v4682 = vpop.permute.xlu0 %4681
  %4683 = vrot.lane.b32.xlu0 %v4571, 32
  %v4684 = vpop.permute.xlu0 %4683
  %4685 = vrot.lane.b32.xlu0 %v4573, 32
  %v4686 = vpop.permute.xlu0 %4685
  %4687 = vrot.lane.b32.xlu0 %v4575, 32
  %v4688 = vpop.permute.xlu0 %4687
  %4689 = vrot.lane.b32.xlu0 %v4577, 32
  %v4690 = vpop.permute.xlu0 %4689
  %4691 = vrot.lane.b32.xlu0 %v4579, 32
  %v4692 = vpop.permute.xlu0 %4691
  %4693 = vrot.lane.b32.xlu0 %v4581, 32
  %v4694 = vpop.permute.xlu0 %4693
  %4695 = vrot.lane.b32.xlu0 %v4583, 32
  %v4696 = vpop.permute.xlu0 %4695
  %4697 = vrot.lane.b32.xlu0 %v4585, 32
  %v4698 = vpop.permute.xlu0 %4697
  %4699 = vrot.lane.b32.xlu0 %v4587, 32
  %v4700 = vpop.permute.xlu0 %4699
  %4701 = vrot.lane.b32.xlu0 %v4589, 32
  %v4702 = vpop.permute.xlu0 %4701
  %4703 = vrot.lane.b32.xlu0 %v4591, 32
  %v4704 = vpop.permute.xlu0 %4703
  %v4721 = vadd.f32 %v4657, %v4674
  %v4722 = vadd.f32 %v4658, %v4676
  %v4723 = vadd.f32 %v4659, %v4678
  %v4724 = vadd.f32 %v4660, %v4680
  %v4725 = vadd.f32 %v4661, %v4682
  %v4726 = vadd.f32 %v4662, %v4684
  %v4727 = vadd.f32 %v4663, %v4686
  %v4728 = vadd.f32 %v4664, %v4688
  %v4729 = vadd.f32 %v4665, %v4690
  %v4730 = vadd.f32 %v4666, %v4692
  %v4731 = vadd.f32 %v4667, %v4694
  %v4732 = vadd.f32 %v4668, %v4696
  %v4733 = vadd.f32 %v4669, %v4698
  %v4734 = vadd.f32 %v4670, %v4700
  %v4735 = vadd.f32 %v4671, %v4702
  %v4736 = vadd.f32 %v4672, %v4704
  %4753 = vrot.lane.b32.xlu0 %v4562, 32
  %v4754 = vpop.permute.xlu0 %4753
  %4755 = vrot.lane.b32.xlu0 %v4564, 32
  %v4756 = vpop.permute.xlu0 %4755
  %4757 = vrot.lane.b32.xlu0 %v4566, 32
  %v4758 = vpop.permute.xlu0 %4757
  %4759 = vrot.lane.b32.xlu0 %v4568, 32
  %v4760 = vpop.permute.xlu0 %4759
  %4761 = vrot.lane.b32.xlu0 %v4570, 32
  %v4762 = vpop.permute.xlu0 %4761
  %4763 = vrot.lane.b32.xlu0 %v4572, 32
  %v4764 = vpop.permute.xlu0 %4763
  %4765 = vrot.lane.b32.xlu0 %v4574, 32
  %v4766 = vpop.permute.xlu0 %4765
  %4767 = vrot.lane.b32.xlu0 %v4576, 32
  %v4768 = vpop.permute.xlu0 %4767
  %4769 = vrot.lane.b32.xlu0 %v4578, 32
  %v4770 = vpop.permute.xlu0 %4769
  %4771 = vrot.lane.b32.xlu0 %v4580, 32
  %v4772 = vpop.permute.xlu0 %4771
  %4773 = vrot.lane.b32.xlu0 %v4582, 32
  %v4774 = vpop.permute.xlu0 %4773
  %4775 = vrot.lane.b32.xlu0 %v4584, 32
  %v4776 = vpop.permute.xlu0 %4775
  %4777 = vrot.lane.b32.xlu0 %v4586, 32
  %v4778 = vpop.permute.xlu0 %4777
  %4779 = vrot.lane.b32.xlu0 %v4588, 32
  %v4780 = vpop.permute.xlu0 %4779
  %4781 = vrot.lane.b32.xlu0 %v4590, 32
  %v4782 = vpop.permute.xlu0 %4781
  %4783 = vrot.lane.b32.xlu0 %v4592, 32
  %v4784 = vpop.permute.xlu0 %4783
  %v4785 = vsel %vm685, %v4674, %v4754
  %v4786 = vsel %vm685, %v4676, %v4756
  %v4787 = vsel %vm685, %v4678, %v4758
  %v4788 = vsel %vm685, %v4680, %v4760
  %v4789 = vsel %vm685, %v4682, %v4762
  %v4790 = vsel %vm685, %v4684, %v4764
  %v4791 = vsel %vm685, %v4686, %v4766
  %v4792 = vsel %vm685, %v4688, %v4768
  %v4793 = vsel %vm685, %v4690, %v4770
  %v4794 = vsel %vm685, %v4692, %v4772
  %v4795 = vsel %vm685, %v4694, %v4774
  %v4796 = vsel %vm685, %v4696, %v4776
  %v4797 = vsel %vm685, %v4698, %v4778
  %v4798 = vsel %vm685, %v4700, %v4780
  %v4799 = vsel %vm685, %v4702, %v4782
  %v4800 = vsel %vm685, %v4704, %v4784
  %v4817 = vadd.f32 %v4657, %v4785
  %v4818 = vadd.f32 %v4658, %v4786
  %v4819 = vadd.f32 %v4659, %v4787
  %v4820 = vadd.f32 %v4660, %v4788
  %v4821 = vadd.f32 %v4661, %v4789
  %v4822 = vadd.f32 %v4662, %v4790
  %v4823 = vadd.f32 %v4663, %v4791
  %v4824 = vadd.f32 %v4664, %v4792
  %v4825 = vadd.f32 %v4665, %v4793
  %v4826 = vadd.f32 %v4666, %v4794
  %v4827 = vadd.f32 %v4667, %v4795
  %v4828 = vadd.f32 %v4668, %v4796
  %v4829 = vadd.f32 %v4669, %v4797
  %v4830 = vadd.f32 %v4670, %v4798
  %v4831 = vadd.f32 %v4671, %v4799
  %v4832 = vadd.f32 %v4672, %v4800
  %4849 = vrot.lane.b32.xlu0 %v4817, 119
  %v4850 = vpop.permute.xlu0 %4849
  %4851 = vrot.lane.b32.xlu0 %v4818, 119
  %v4852 = vpop.permute.xlu0 %4851
  %4853 = vrot.lane.b32.xlu0 %v4819, 119
  %v4854 = vpop.permute.xlu0 %4853
  %4855 = vrot.lane.b32.xlu0 %v4820, 119
  %v4856 = vpop.permute.xlu0 %4855
  %4857 = vrot.lane.b32.xlu0 %v4821, 119
  %v4858 = vpop.permute.xlu0 %4857
  %4859 = vrot.lane.b32.xlu0 %v4822, 119
  %v4860 = vpop.permute.xlu0 %4859
  %4861 = vrot.lane.b32.xlu0 %v4823, 119
  %v4862 = vpop.permute.xlu0 %4861
  %4863 = vrot.lane.b32.xlu0 %v4824, 119
  %v4864 = vpop.permute.xlu0 %4863
  %4865 = vrot.lane.b32.xlu0 %v4825, 119
  %v4866 = vpop.permute.xlu0 %4865
  %4867 = vrot.lane.b32.xlu0 %v4826, 119
  %v4868 = vpop.permute.xlu0 %4867
  %4869 = vrot.lane.b32.xlu0 %v4827, 119
  %v4870 = vpop.permute.xlu0 %4869
  %4871 = vrot.lane.b32.xlu0 %v4828, 119
  %v4872 = vpop.permute.xlu0 %4871
  %4873 = vrot.lane.b32.xlu0 %v4829, 119
  %v4874 = vpop.permute.xlu0 %4873
  %4875 = vrot.lane.b32.xlu0 %v4830, 119
  %v4876 = vpop.permute.xlu0 %4875
  %4877 = vrot.lane.b32.xlu0 %v4831, 119
  %v4878 = vpop.permute.xlu0 %4877
  %4879 = vrot.lane.b32.xlu0 %v4832, 119
  %v4880 = vpop.permute.xlu0 %4879
  %4897 = vrot.lane.b32.xlu0 %v4561, 110
  %v4898 = vpop.permute.xlu0 %4897
  %4899 = vrot.lane.b32.xlu0 %v4563, 110
  %v4900 = vpop.permute.xlu0 %4899
  %4901 = vrot.lane.b32.xlu0 %v4565, 110
  %v4902 = vpop.permute.xlu0 %4901
  %4903 = vrot.lane.b32.xlu0 %v4567, 110
  %v4904 = vpop.permute.xlu0 %4903
  %4905 = vrot.lane.b32.xlu0 %v4569, 110
  %v4906 = vpop.permute.xlu0 %4905
  %4907 = vrot.lane.b32.xlu0 %v4571, 110
  %v4908 = vpop.permute.xlu0 %4907
  %4909 = vrot.lane.b32.xlu0 %v4573, 110
  %v4910 = vpop.permute.xlu0 %4909
  %4911 = vrot.lane.b32.xlu0 %v4575, 110
  %v4912 = vpop.permute.xlu0 %4911
  %4913 = vrot.lane.b32.xlu0 %v4577, 110
  %v4914 = vpop.permute.xlu0 %4913
  %4915 = vrot.lane.b32.xlu0 %v4579, 110
  %v4916 = vpop.permute.xlu0 %4915
  %4917 = vrot.lane.b32.xlu0 %v4581, 110
  %v4918 = vpop.permute.xlu0 %4917
  %4919 = vrot.lane.b32.xlu0 %v4583, 110
  %v4920 = vpop.permute.xlu0 %4919
  %4921 = vrot.lane.b32.xlu0 %v4585, 110
  %v4922 = vpop.permute.xlu0 %4921
  %4923 = vrot.lane.b32.xlu0 %v4587, 110
  %v4924 = vpop.permute.xlu0 %4923
  %4925 = vrot.lane.b32.xlu0 %v4589, 110
  %v4926 = vpop.permute.xlu0 %4925
  %4927 = vrot.lane.b32.xlu0 %v4591, 110
  %v4928 = vpop.permute.xlu0 %4927
  %4945 = vrot.lane.b32.xlu0 %v4561, 101
  %v4946 = vpop.permute.xlu0 %4945
  %4947 = vrot.lane.b32.xlu0 %v4563, 101
  %v4948 = vpop.permute.xlu0 %4947
  %4949 = vrot.lane.b32.xlu0 %v4565, 101
  %v4950 = vpop.permute.xlu0 %4949
  %4951 = vrot.lane.b32.xlu0 %v4567, 101
  %v4952 = vpop.permute.xlu0 %4951
  %4953 = vrot.lane.b32.xlu0 %v4569, 101
  %v4954 = vpop.permute.xlu0 %4953
  %4955 = vrot.lane.b32.xlu0 %v4571, 101
  %v4956 = vpop.permute.xlu0 %4955
  %4957 = vrot.lane.b32.xlu0 %v4573, 101
  %v4958 = vpop.permute.xlu0 %4957
  %4959 = vrot.lane.b32.xlu0 %v4575, 101
  %v4960 = vpop.permute.xlu0 %4959
  %4961 = vrot.lane.b32.xlu0 %v4577, 101
  %v4962 = vpop.permute.xlu0 %4961
  %4963 = vrot.lane.b32.xlu0 %v4579, 101
  %v4964 = vpop.permute.xlu0 %4963
  %4965 = vrot.lane.b32.xlu0 %v4581, 101
  %v4966 = vpop.permute.xlu0 %4965
  %4967 = vrot.lane.b32.xlu0 %v4583, 101
  %v4968 = vpop.permute.xlu0 %4967
  %4969 = vrot.lane.b32.xlu0 %v4585, 101
  %v4970 = vpop.permute.xlu0 %4969
  %4971 = vrot.lane.b32.xlu0 %v4587, 101
  %v4972 = vpop.permute.xlu0 %4971
  %4973 = vrot.lane.b32.xlu0 %v4589, 101
  %v4974 = vpop.permute.xlu0 %4973
  %4975 = vrot.lane.b32.xlu0 %v4591, 101
  %v4976 = vpop.permute.xlu0 %4975
  %4993 = vrot.lane.b32.xlu0 %v4561, 92
  %v4994 = vpop.permute.xlu0 %4993
  %4995 = vrot.lane.b32.xlu0 %v4563, 92
  %v4996 = vpop.permute.xlu0 %4995
  %4997 = vrot.lane.b32.xlu0 %v4565, 92
  %v4998 = vpop.permute.xlu0 %4997
  %4999 = vrot.lane.b32.xlu0 %v4567, 92
  %v5000 = vpop.permute.xlu0 %4999
  %5001 = vrot.lane.b32.xlu0 %v4569, 92
  %v5002 = vpop.permute.xlu0 %5001
  %5003 = vrot.lane.b32.xlu0 %v4571, 92
  %v5004 = vpop.permute.xlu0 %5003
  %5005 = vrot.lane.b32.xlu0 %v4573, 92
  %v5006 = vpop.permute.xlu0 %5005
  %5007 = vrot.lane.b32.xlu0 %v4575, 92
  %v5008 = vpop.permute.xlu0 %5007
  %5009 = vrot.lane.b32.xlu0 %v4577, 92
  %v5010 = vpop.permute.xlu0 %5009
  %5011 = vrot.lane.b32.xlu0 %v4579, 92
  %v5012 = vpop.permute.xlu0 %5011
  %5013 = vrot.lane.b32.xlu0 %v4581, 92
  %v5014 = vpop.permute.xlu0 %5013
  %5015 = vrot.lane.b32.xlu0 %v4583, 92
  %v5016 = vpop.permute.xlu0 %5015
  %5017 = vrot.lane.b32.xlu0 %v4585, 92
  %v5018 = vpop.permute.xlu0 %5017
  %5019 = vrot.lane.b32.xlu0 %v4587, 92
  %v5020 = vpop.permute.xlu0 %5019
  %5021 = vrot.lane.b32.xlu0 %v4589, 92
  %v5022 = vpop.permute.xlu0 %5021
  %5023 = vrot.lane.b32.xlu0 %v4591, 92
  %v5024 = vpop.permute.xlu0 %5023
  %5041 = vrot.lane.b32.xlu0 %v4561, 83
  %v5042 = vpop.permute.xlu0 %5041
  %5043 = vrot.lane.b32.xlu0 %v4562, 83
  %v5044 = vpop.permute.xlu0 %5043
  %5045 = vrot.lane.b32.xlu0 %v4563, 83
  %v5046 = vpop.permute.xlu0 %5045
  %5047 = vrot.lane.b32.xlu0 %v4564, 83
  %v5048 = vpop.permute.xlu0 %5047
  %5049 = vrot.lane.b32.xlu0 %v4565, 83
  %v5050 = vpop.permute.xlu0 %5049
  %5051 = vrot.lane.b32.xlu0 %v4566, 83
  %v5052 = vpop.permute.xlu0 %5051
  %5053 = vrot.lane.b32.xlu0 %v4567, 83
  %v5054 = vpop.permute.xlu0 %5053
  %5055 = vrot.lane.b32.xlu0 %v4568, 83
  %v5056 = vpop.permute.xlu0 %5055
  %5057 = vrot.lane.b32.xlu0 %v4569, 83
  %v5058 = vpop.permute.xlu0 %5057
  %5059 = vrot.lane.b32.xlu0 %v4570, 83
  %v5060 = vpop.permute.xlu0 %5059
  %5061 = vrot.lane.b32.xlu0 %v4571, 83
  %v5062 = vpop.permute.xlu0 %5061
  %5063 = vrot.lane.b32.xlu0 %v4572, 83
  %v5064 = vpop.permute.xlu0 %5063
  %5065 = vrot.lane.b32.xlu0 %v4573, 83
  %v5066 = vpop.permute.xlu0 %5065
  %5067 = vrot.lane.b32.xlu0 %v4574, 83
  %v5068 = vpop.permute.xlu0 %5067
  %5069 = vrot.lane.b32.xlu0 %v4575, 83
  %v5070 = vpop.permute.xlu0 %5069
  %5071 = vrot.lane.b32.xlu0 %v4576, 83
  %v5072 = vpop.permute.xlu0 %5071
  %5073 = vrot.lane.b32.xlu0 %v4577, 83
  %v5074 = vpop.permute.xlu0 %5073
  %5075 = vrot.lane.b32.xlu0 %v4578, 83
  %v5076 = vpop.permute.xlu0 %5075
  %5077 = vrot.lane.b32.xlu0 %v4579, 83
  %v5078 = vpop.permute.xlu0 %5077
  %5079 = vrot.lane.b32.xlu0 %v4580, 83
  %v5080 = vpop.permute.xlu0 %5079
  %5081 = vrot.lane.b32.xlu0 %v4581, 83
  %v5082 = vpop.permute.xlu0 %5081
  %5083 = vrot.lane.b32.xlu0 %v4582, 83
  %v5084 = vpop.permute.xlu0 %5083
  %5085 = vrot.lane.b32.xlu0 %v4583, 83
  %v5086 = vpop.permute.xlu0 %5085
  %5087 = vrot.lane.b32.xlu0 %v4584, 83
  %v5088 = vpop.permute.xlu0 %5087
  %5089 = vrot.lane.b32.xlu0 %v4585, 83
  %v5090 = vpop.permute.xlu0 %5089
  %5091 = vrot.lane.b32.xlu0 %v4586, 83
  %v5092 = vpop.permute.xlu0 %5091
  %5093 = vrot.lane.b32.xlu0 %v4587, 83
  %v5094 = vpop.permute.xlu0 %5093
  %5095 = vrot.lane.b32.xlu0 %v4588, 83
  %v5096 = vpop.permute.xlu0 %5095
  %5097 = vrot.lane.b32.xlu0 %v4589, 83
  %v5098 = vpop.permute.xlu0 %5097
  %5099 = vrot.lane.b32.xlu0 %v4590, 83
  %v5100 = vpop.permute.xlu0 %5099
  %5101 = vrot.lane.b32.xlu0 %v4591, 83
  %v5102 = vpop.permute.xlu0 %5101
  %5103 = vrot.lane.b32.xlu0 %v4592, 83
  %v5104 = vpop.permute.xlu0 %5103
  %vm5105 = vcmask 678912
  %v5106 = vsel %vm5105, %v5042, %v5044
  %v5107 = vsel %vm5105, %v5046, %v5048
  %v5108 = vsel %vm5105, %v5050, %v5052
  %v5109 = vsel %vm5105, %v5054, %v5056
  %v5110 = vsel %vm5105, %v5058, %v5060
  %v5111 = vsel %vm5105, %v5062, %v5064
  %v5112 = vsel %vm5105, %v5066, %v5068
  %v5113 = vsel %vm5105, %v5070, %v5072
  %v5114 = vsel %vm5105, %v5074, %v5076
  %v5115 = vsel %vm5105, %v5078, %v5080
  %v5116 = vsel %vm5105, %v5082, %v5084
  %v5117 = vsel %vm5105, %v5086, %v5088
  %v5118 = vsel %vm5105, %v5090, %v5092
  %v5119 = vsel %vm5105, %v5094, %v5096
  %v5120 = vsel %vm5105, %v5098, %v5100
  %v5121 = vsel %vm5105, %v5102, %v5104
  %vm5138 = vcmask 121856
  %v5139 = vsel %vm5138, %v4721, %v4850
  %v5140 = vsel %vm5138, %v4722, %v4852
  %v5141 = vsel %vm5138, %v4723, %v4854
  %v5142 = vsel %vm5138, %v4724, %v4856
  %v5143 = vsel %vm5138, %v4725, %v4858
  %v5144 = vsel %vm5138, %v4726, %v4860
  %v5145 = vsel %vm5138, %v4727, %v4862
  %v5146 = vsel %vm5138, %v4728, %v4864
  %v5147 = vsel %vm5138, %v4729, %v4866
  %v5148 = vsel %vm5138, %v4730, %v4868
  %v5149 = vsel %vm5138, %v4731, %v4870
  %v5150 = vsel %vm5138, %v4732, %v4872
  %v5151 = vsel %vm5138, %v4733, %v4874
  %v5152 = vsel %vm5138, %v4734, %v4876
  %v5153 = vsel %vm5138, %v4735, %v4878
  %v5154 = vsel %vm5138, %v4736, %v4880
  %v5155 = vsel %vm415, %v5139, %v4898
  %v5156 = vsel %vm415, %v5140, %v4900
  %v5157 = vsel %vm415, %v5141, %v4902
  %v5158 = vsel %vm415, %v5142, %v4904
  %v5159 = vsel %vm415, %v5143, %v4906
  %v5160 = vsel %vm415, %v5144, %v4908
  %v5161 = vsel %vm415, %v5145, %v4910
  %v5162 = vsel %vm415, %v5146, %v4912
  %v5163 = vsel %vm415, %v5147, %v4914
  %v5164 = vsel %vm415, %v5148, %v4916
  %v5165 = vsel %vm415, %v5149, %v4918
  %v5166 = vsel %vm415, %v5150, %v4920
  %v5167 = vsel %vm415, %v5151, %v4922
  %v5168 = vsel %vm415, %v5152, %v4924
  %v5169 = vsel %vm415, %v5153, %v4926
  %v5170 = vsel %vm415, %v5154, %v4928
  %vm5171 = vcmask 367616
  %v5172 = vsel %vm5171, %v5155, %v4946
  %v5173 = vsel %vm5171, %v5156, %v4948
  %v5174 = vsel %vm5171, %v5157, %v4950
  %v5175 = vsel %vm5171, %v5158, %v4952
  %v5176 = vsel %vm5171, %v5159, %v4954
  %v5177 = vsel %vm5171, %v5160, %v4956
  %v5178 = vsel %vm5171, %v5161, %v4958
  %v5179 = vsel %vm5171, %v5162, %v4960
  %v5180 = vsel %vm5171, %v5163, %v4962
  %v5181 = vsel %vm5171, %v5164, %v4964
  %v5182 = vsel %vm5171, %v5165, %v4966
  %v5183 = vsel %vm5171, %v5166, %v4968
  %v5184 = vsel %vm5171, %v5167, %v4970
  %v5185 = vsel %vm5171, %v5168, %v4972
  %v5186 = vsel %vm5171, %v5169, %v4974
  %v5187 = vsel %vm5171, %v5170, %v4976
  %vm5188 = vcmask 490496
  %v5189 = vsel %vm5188, %v5172, %v4994
  %v5190 = vsel %vm5188, %v5173, %v4996
  %v5191 = vsel %vm5188, %v5174, %v4998
  %v5192 = vsel %vm5188, %v5175, %v5000
  %v5193 = vsel %vm5188, %v5176, %v5002
  %v5194 = vsel %vm5188, %v5177, %v5004
  %v5195 = vsel %vm5188, %v5178, %v5006
  %v5196 = vsel %vm5188, %v5179, %v5008
  %v5197 = vsel %vm5188, %v5180, %v5010
  %v5198 = vsel %vm5188, %v5181, %v5012
  %v5199 = vsel %vm5188, %v5182, %v5014
  %v5200 = vsel %vm5188, %v5183, %v5016
  %v5201 = vsel %vm5188, %v5184, %v5018
  %v5202 = vsel %vm5188, %v5185, %v5020
  %v5203 = vsel %vm5188, %v5186, %v5022
  %v5204 = vsel %vm5188, %v5187, %v5024
  %vm5205 = vcmask 613376
  %v5206 = vsel %vm5205, %v5189, %v5106
  %v5207 = vsel %vm5205, %v5190, %v5107
  %v5208 = vsel %vm5205, %v5191, %v5108
  %v5209 = vsel %vm5205, %v5192, %v5109
  %v5210 = vsel %vm5205, %v5193, %v5110
  %v5211 = vsel %vm5205, %v5194, %v5111
  %v5212 = vsel %vm5205, %v5195, %v5112
  %v5213 = vsel %vm5205, %v5196, %v5113
  %v5214 = vsel %vm5205, %v5197, %v5114
  %v5215 = vsel %vm5205, %v5198, %v5115
  %v5216 = vsel %vm5205, %v5199, %v5116
  %v5217 = vsel %vm5205, %v5200, %v5117
  %v5218 = vsel %vm5205, %v5201, %v5118
  %v5219 = vsel %vm5205, %v5202, %v5119
  %v5220 = vsel %vm5205, %v5203, %v5120
  %v5221 = vsel %vm5205, %v5204, %v5121
  %v5222 = vpack.c.bf16 %v5207, %v5206
  %v5223 = vpack.c.bf16 %v5209, %v5208
  %v5224 = vpack.c.bf16 %v5211, %v5210
  %v5225 = vpack.c.bf16 %v5213, %v5212
  %v5226 = vpack.c.bf16 %v5215, %v5214
  %v5227 = vpack.c.bf16 %v5217, %v5216
  %v5228 = vpack.c.bf16 %v5219, %v5218
  %v5229 = vpack.c.bf16 %v5221, %v5220
  %v5230 = vld [vmem:[%s5] sm:$0xf]
  %v5231 = vld [vmem:[%s5 + $0x4] sm:$0xf]
  %v5232 = vld [vmem:[%s5 + $0x8] sm:$0xf]
  %v5233 = vld [vmem:[%s5 + $0xc] sm:$0xf]
  %v5234 = vld [vmem:[%s5 + $0x10] sm:$0xf]
  %v5235 = vld [vmem:[%s5 + $0x14] sm:$0xf]
  %v5236 = vld [vmem:[%s5 + $0x18] sm:$0xf]
  %v5237 = vld [vmem:[%s5 + $0x1c] sm:$0x3]
  %v5246 = vunpack.c.l.b16 %v5230
  %v5247 = vunpack.c.l.b16 %v5231
  %v5248 = vunpack.c.l.b16 %v5232
  %v5249 = vunpack.c.l.b16 %v5233
  %v5250 = vunpack.c.l.b16 %v5234
  %v5251 = vunpack.c.l.b16 %v5235
  %v5252 = vunpack.c.l.b16 %v5236
  %v5253 = vunpack.c.l.b16 %v5237
  %v5254 = vpack.c.b16 %v5247, %v5246
  %v5255 = vpack.c.b16 %v5249, %v5248
  %v5256 = vpack.c.b16 %v5251, %v5250
  %v5257 = vpack.c.b16 %v5253, %v5252
  %5262 = vmatprep.subr.bf16.mxu0 0
  %5263 = vmatpush1.bf16.msra.mxu0 %v5222
  %5264 = vmatprep.subr.bf16.mxu0 0
  %5265 = vmatpush1.bf16.msra.mxu0 %v5223
  %5266 = vmatprep.subr.bf16.mxu0 0
  %5267 = vmatpush1.bf16.msra.mxu0 %v5224
  %5268 = vmatprep.subr.bf16.mxu0 0
  %5269 = vmatpush1.bf16.msra.mxu0 %v5225
  %5270 = vmatprep.subr.bf16.mxu0 0
  %5271 = vmatpush1.bf16.msra.mxu0 %v5226
  %5272 = vmatprep.subr.bf16.mxu0 0
  %5273 = vmatpush1.bf16.msra.mxu0 %v5227
  %5274 = vmatprep.subr.bf16.mxu0 0
  %5275 = vmatpush1.bf16.msra.mxu0 %v5228
  %5276 = vmatprep.subr.bf16.mxu0 0
  %5277 = vmatpush1.bf16.msra.mxu0 %v5229
  %5278 = vmatprep.subr.bf16.mxu0 0
  %5279 = vmatpush1.bf16.msra.mxu0 0
  %5280 = vmatprep.subr.bf16.mxu0 0
  %5281 = vmatpush1.bf16.msra.mxu0 0
  %5282 = vmatprep.subr.bf16.mxu0 0
  %5283 = vmatpush1.bf16.msra.mxu0 0
  %5284 = vmatprep.subr.bf16.mxu0 0
  %5285 = vmatpush1.bf16.msra.mxu0 0
  %5286 = vmatprep.subr.bf16.mxu0 0
  %5287 = vmatpush1.bf16.msra.mxu0 0
  %5288 = vmatprep.subr.bf16.mxu0 0
  %5289 = vmatpush1.bf16.msra.mxu0 0
  %5290 = vmatprep.subr.bf16.mxu0 0
  %5291 = vmatpush1.bf16.msra.mxu0 0
  %5292 = vmatprep.subr.bf16.mxu0 0
  %5293 = vmatpush1.bf16.msra.mxu0 0
  %5294 = vmatprep.mubr.bf16.mxu0 0
  %5295 = vmatmul.mubr.bf16.gmra.mrb[0].mxu0 %v5254
  %v5296 = vpop.f32.mrb[0].mxu0
  %v5297 = vadd.f32 0.0, %v5296
  %v5298 = vpop.f32.mrb[0].mxu0
  %v5299 = vpop.f32.mrb[0].mxu0
  %v5300 = vadd.f32 0.0, %v5299
  %v5301 = vpop.f32.mrb[0].mxu0
  %5302 = vmatprep.mubr.bf16.mxu0 0
  %5303 = vmatmul.mubr.bf16.gmra.mrb[0].mxu0 %v5255
  %v5304 = vpop.f32.mrb[0].mxu0
  %v5305 = vadd.f32 0.0, %v5304
  %v5306 = vpop.f32.mrb[0].mxu0
  %v5307 = vpop.f32.mrb[0].mxu0
  %v5308 = vadd.f32 0.0, %v5307
  %v5309 = vpop.f32.mrb[0].mxu0
  %5310 = vmatprep.mubr.bf16.mxu0 0
  %5311 = vmatmul.mubr.bf16.gmra.mrb[0].mxu0 %v5256
  %v5312 = vpop.f32.mrb[0].mxu0
  %v5313 = vadd.f32 0.0, %v5312
  %v5314 = vpop.f32.mrb[0].mxu0
  %v5315 = vpop.f32.mrb[0].mxu0
  %v5316 = vadd.f32 0.0, %v5315
  %v5317 = vpop.f32.mrb[0].mxu0
  %5318 = vmatprep.mubr.bf16.mxu0 0
  %5319 = vmatmul.mubr.bf16.gmra.mrb[0].mxu0 %v5257
  %v5320 = vpop.f32.mrb[0].mxu0
  %v5321 = vadd.f32 0.0, %v5320
  %v5322 = vpop.f32.mrb[0].mxu0
  %v5323 = vpop.f32.mrb[0].mxu0
  %v5324 = vadd.f32 0.0, %v5323
  %v5325 = vpop.f32.mrb[0].mxu0
  %5326 = vdwg.mxu0
  %v5327 = vld [vmem:[%s6] sm:$0xff]
  %v5328 = vld [vmem:[%s6 + $0x8] sm:$0xff]
  %v5329 = vld [vmem:[%s6 + $0x10] sm:$0xff]
  %v5330 = vld [vmem:[%s6 + $0x18] sm:$0xff]
  %v5331 = vld [vmem:[%s6 + $0x20] sm:$0xff]
  %v5332 = vld [vmem:[%s6 + $0x28] sm:$0xff]
  %v5333 = vld [vmem:[%s6 + $0x30] sm:$0xff]
  %v5334 = vld [vmem:[%s6 + $0x38] sm:$0xff]
  %v5335 = vld [vmem:[%s6 + $0x40] sm:$0xff]
  %v5336 = vld [vmem:[%s6 + $0x48] sm:$0xff]
  %v5337 = vld [vmem:[%s6 + $0x50] sm:$0xff]
  %v5338 = vld [vmem:[%s6 + $0x58] sm:$0xff]
  %v5339 = vld [vmem:[%s6 + $0x60] sm:$0xff]
  %v5340 = vld [vmem:[%s6 + $0x68] sm:$0xff]
  %v5341 = vld [vmem:[%s6 + $0x70] sm:$0xff]
  %v5342 = vld [vmem:[%s6 + $0x78] sm:$0xff]
  %v5343 = vld [vmem:[%s6 + $0x80] sm:$0xff]
  %v5344 = vld [vmem:[%s6 + $0x88] sm:$0xff]
  %v5345 = vld [vmem:[%s6 + $0x90] sm:$0xff]
  %v5346 = vld [vmem:[%s6 + $0x98] sm:$0xff]
  %v5347 = vld [vmem:[%s6 + $0xa0] sm:$0x3]
  %v5348 = vmul.f32 %v5297, %v5327
  %v5349 = vmul.f32 %v5300, %v5328
  %v5350 = vmul.f32 %v5305, %v5329
  %v5351 = vmul.f32 %v5308, %v5330
  %v5352 = vmul.f32 %v5313, %v5331
  %v5353 = vmul.f32 %v5316, %v5332
  %v5354 = vmul.f32 %v5321, %v5333
  %v5355 = vmul.f32 %v5324, %v5334
  %v5357 = vsel %vm5188, %v5335, 0
  %v5360 = vsel %vm219, %v5355, 0
  %5362 = vmatprep.subr.mxu0 0.0
  %5363 = vmatpush1.msra.mxu0 %v5348
  %5364 = vmatprep.subr.mxu0 0.0
  %5365 = vmatpush1.msra.mxu0 %v5349
  %5366 = vmatprep.subr.mxu0 0.0
  %5367 = vmatpush1.msra.mxu0 %v5350
  %5368 = vmatprep.subr.mxu0 0.0
  %5369 = vmatpush1.msra.mxu0 %v5351
  %5370 = vmatprep.subr.mxu0 0.0
  %5371 = vmatpush1.msra.mxu0 %v5352
  %5372 = vmatprep.subr.mxu0 0.0
  %5373 = vmatpush1.msra.mxu0 %v5353
  %5374 = vmatprep.subr.mxu0 0.0
  %5375 = vmatpush1.msra.mxu0 %v5354
  %5376 = vmatprep.subr.mxu0 0.0
  %5377 = vmatpush1.msra.mxu0 %v5360
  %5378 = vmatprep.subr.mxu0 0.0
  %5379 = vmatpush1.msra.mxu0 0.0
  %5380 = vmatprep.subr.mxu0 0.0
  %5381 = vmatpush1.msra.mxu0 0.0
  %5382 = vmatprep.subr.mxu0 0.0
  %5383 = vmatpush1.msra.mxu0 0.0
  %5384 = vmatprep.subr.mxu0 0.0
  %5385 = vmatpush1.msra.mxu0 0.0
  %5386 = vmatprep.subr.mxu0 0.0
  %5387 = vmatpush1.msra.mxu0 0.0
  %5388 = vmatprep.subr.mxu0 0.0
  %5389 = vmatpush1.msra.mxu0 0.0
  %5390 = vmatprep.subr.mxu0 0.0
  %5391 = vmatpush1.msra.mxu0 0.0
  %5392 = vmatprep.subr.mxu0 0.0
  %5393 = vmatpush1.msra.mxu0 0.0
  %5394 = vmatprep.subr.mxu0 0.0
  %5395 = vmatpush1.msra.mxu0 0.0
  %5396 = vmatprep.subr.mxu0 0.0
  %5397 = vmatpush1.msra.mxu0 0.0
  %5398 = vmatprep.subr.mxu0 0.0
  %5399 = vmatpush1.msra.mxu0 0.0
  %5400 = vmatprep.subr.mxu0 0.0
  %5401 = vmatpush1.msra.mxu0 0.0
  %5402 = vmatprep.subr.mxu0 0.0
  %5403 = vmatpush1.msra.mxu0 0.0
  %5404 = vmatprep.subr.mxu0 0.0
  %5405 = vmatpush1.msra.mxu0 0.0
  %5406 = vmatprep.subr.mxu0 0.0
  %5407 = vmatpush1.msra.mxu0 0.0
  %5408 = vmatprep.subr.mxu0 0.0
  %5409 = vmatpush1.msra.mxu0 0.0
  %5410 = vmatprep.subr.mxu0 0.0
  %5411 = vmatpush1.msra.mxu0 0.0
  %5412 = vmatprep.subr.mxu0 0.0
  %5413 = vmatpush1.msra.mxu0 0.0
  %5414 = vmatprep.subr.mxu0 0.0
  %5415 = vmatpush1.msra.mxu0 0.0
  %5416 = vmatprep.subr.mxu0 0.0
  %5417 = vmatpush1.msra.mxu0 0.0
  %5418 = vmatprep.subr.mxu0 0.0
  %5419 = vmatpush1.msra.mxu0 0.0
  %5420 = vmatprep.subr.mxu0 0.0
  %5421 = vmatpush1.msra.mxu0 0.0
  %5422 = vmatprep.subr.mxu0 0.0
  %5423 = vmatpush1.msra.mxu0 0.0
  %5424 = vmatprep.subr.mxu0 0.0
  %5425 = vmatpush1.msra.mxu0 0.0
  %5426 = vmatprep.mubr.f32.mxu0 0.0
  %5427 = vmatmul.mubr.f32.gmra.mrb[0].mxu0 %v5357
  %v5428 = vpop.f32.mrb[0].mxu0
  %v5429 = vadd.f32 0.0, %v5428
  %v5430 = vpop.f32.mrb[0].mxu0
  %5431 = vdwg.mxu0
  %5432 = vset.pattern.permute.xlu0 4
  %5433 = vperm.xlu0 %5432, %v30
  %v5434 = vpop.permute.xlu0 %5433
  %vm5436 = vcmask 736256
  %v5438 = vsel %vm5436, %v5429, 0
  %vm5440 = vcmask 1041408
  %v5442 = vsel %vm5440, %v5347, 0
  %5444 = vmatprep.subr.mxu0 0.0
  %5445 = vmatpush1.msra.mxu0 %v5336
  %5446 = vmatprep.subr.mxu0 0.0
  %5447 = vmatpush1.msra.mxu0 %v5337
  %5448 = vmatprep.subr.mxu0 0.0
  %5449 = vmatpush1.msra.mxu0 %v5338
  %5450 = vmatprep.subr.mxu0 0.0
  %5451 = vmatpush1.msra.mxu0 %v5339
  %5452 = vmatprep.subr.mxu0 0.0
  %5453 = vmatpush1.msra.mxu0 %v5340
  %5454 = vmatprep.subr.mxu0 0.0
  %5455 = vmatpush1.msra.mxu0 %v5341
  %5456 = vmatprep.subr.mxu0 0.0
  %5457 = vmatpush1.msra.mxu0 %v5342
  %5458 = vmatprep.subr.mxu0 0.0
  %5459 = vmatpush1.msra.mxu0 %v5343
  %5460 = vmatprep.subr.mxu0 0.0
  %5461 = vmatpush1.msra.mxu0 %v5344
  %5462 = vmatprep.subr.mxu0 0.0
  %5463 = vmatpush1.msra.mxu0 %v5345
  %5464 = vmatprep.subr.mxu0 0.0
  %5465 = vmatpush1.msra.mxu0 %v5346
  %5466 = vmatprep.subr.mxu0 0.0
  %5467 = vmatpush1.msra.mxu0 %v5442
  %5468 = vmatprep.subr.mxu0 0.0
  %5469 = vmatpush1.msra.mxu0 0.0
  %5470 = vmatprep.subr.mxu0 0.0
  %5471 = vmatpush1.msra.mxu0 0.0
  %5472 = vmatprep.subr.mxu0 0.0
  %5473 = vmatpush1.msra.mxu0 0.0
  %5474 = vmatprep.subr.mxu0 0.0
  %5475 = vmatpush1.msra.mxu0 0.0
  %5476 = vmatprep.subr.mxu0 0.0
  %5477 = vmatpush1.msra.mxu0 0.0
  %5478 = vmatprep.subr.mxu0 0.0
  %5479 = vmatpush1.msra.mxu0 0.0
  %5480 = vmatprep.subr.mxu0 0.0
  %5481 = vmatpush1.msra.mxu0 0.0
  %5482 = vmatprep.subr.mxu0 0.0
  %5483 = vmatpush1.msra.mxu0 0.0
  %5484 = vmatprep.subr.mxu0 0.0
  %5485 = vmatpush1.msra.mxu0 0.0
  %5486 = vmatprep.subr.mxu0 0.0
  %5487 = vmatpush1.msra.mxu0 0.0
  %5488 = vmatprep.subr.mxu0 0.0
  %5489 = vmatpush1.msra.mxu0 0.0
  %5490 = vmatprep.subr.mxu0 0.0
  %5491 = vmatpush1.msra.mxu0 0.0
  %5492 = vmatprep.subr.mxu0 0.0
  %5493 = vmatpush1.msra.mxu0 0.0
  %5494 = vmatprep.subr.mxu0 0.0
  %5495 = vmatpush1.msra.mxu0 0.0
  %5496 = vmatprep.subr.mxu0 0.0
  %5497 = vmatpush1.msra.mxu0 0.0
  %5498 = vmatprep.subr.mxu0 0.0
  %5499 = vmatpush1.msra.mxu0 0.0
  %5500 = vmatprep.subr.mxu0 0.0
  %5501 = vmatpush1.msra.mxu0 0.0
  %5502 = vmatprep.subr.mxu0 0.0
  %5503 = vmatpush1.msra.mxu0 0.0
  %5504 = vmatprep.subr.mxu0 0.0
  %5505 = vmatpush1.msra.mxu0 0.0
  %5506 = vmatprep.subr.mxu0 0.0
  %5507 = vmatpush1.msra.mxu0 0.0
  %5508 = vmatprep.mubr.f32.mxu0 0.0
  %5509 = vmatmul.mubr.f32.gmra.mrb[0].mxu0 %v5438
  %v5510 = vpop.f32.mrb[0].mxu0
  %v5511 = vadd.f32 %v5434, %v5510
  %v5512 = vpop.f32.mrb[0].mxu0
  %5513 = vdwg.mxu0
  %vm5514 = vcmask 44032
  %5515 = vst.msk [vmem:[%s8] sm:$0xf] %vm5514, %v5511
  // Predicated region
  $region34: #{forward.1} parent=0 // pred_check
    _
  $region35: #{forward.1} parent=0 // pred_check_branch
    %5517 = sbr.rel (0) target = $region37
  $region36: #{forward.1} parent=0 // pred_region
    _
  $region37: #{forward.1} parent=0 // pred_fallthru
    _
  // Predicated region
  $region38: #{forward.1} parent=0 // pred_check
    _
  $region39: #{forward.1} parent=0 // pred_check_branch
    %5519 = sbr.rel (0) target = $region41
  $region40: #{forward.1} parent=0 // pred_region
    _
  $region41: #{forward.1} parent=0 // pred_fallthru
    _

</llo_original>
